<compile_context>
chip_gen: v6e
topology: v6e:2x2x1
jax: 0.10.0
libtpu: 0.0.40
codegen_flags: <defaults>
</compile_context>

<pallas_src>
import functools
import math

import jax
import jax.numpy as jnp
import numpy as np
from jax.experimental import pallas as pl
from jax.experimental.pallas import tpu as pltpu


_TAPS = tuple((ky, kx) for ky in (-1, 0, 1) for kx in (-1, 0, 1))


def _round_up(x, m):
    return (x + m - 1) // m * m


def _pick_batch_block(n, hw, lane_budget=1024):
    """Images per grid step: amortize per-step overhead, keep grid >= 2 (v7x)."""
    if n <= 1:
        return 1
    bb = max(1, min(n // 2, max(1, lane_budget // hw)))
    while n % bb:
        bb -= 1
    return bb


def _make_border_masks(H, W, batch_block):
    """(9, batch_block*H*W) f32: 1.0 where the (ky,kx) neighbour is in-bounds."""
    hw = H * W
    q = np.arange(hw)
    y, x = q // W, q % W
    masks = np.ones((9, hw), np.float32)
    for t, (ky, kx) in enumerate(_TAPS):
        valid = np.ones(hw, bool)
        if ky == -1:
            valid &= y > 0
        elif ky == 1:
            valid &= y < H - 1
        if kx == -1:
            valid &= x > 0
        elif kx == 1:
            valid &= x < W - 1
        masks[t] = valid
    return jnp.asarray(np.tile(masks, (1, batch_block)))


def _flatten_conv(w, b, *, cin_pad, mxu_dtype):
    """HWIO (3,3,Cin,Cout) -> channel-major 2-D MXU weight (Cout, 9*cin_pad)."""
    kh, kw, cin, cout = w.shape
    w_t = jnp.transpose(w.reshape(kh * kw, cin, cout), (2, 0, 1))  # (Cout,9,Cin)
    w2 = jnp.zeros((cout, kh * kw, cin_pad), jnp.float32)
    w2 = w2.at[:, :, :cin].set(w_t)
    w2 = w2.reshape(cout, kh * kw * cin_pad).astype(mxu_dtype)
    b2 = b.reshape(cout, 1).astype(jnp.float32)
    return w2, b2


def _rslp_kernel(*refs, n_mid, B, H, W, f, nb_out, zoom2, c0_pad, f_pad):
    """Fused RSLPCell forward for one batch block (B images).

    refs = (x, rf, masks, w1, b1, [wm_i, bm_i]*n_mid, w_heads, b_heads,   # in
            out, hidden,                                                  # out
            patch)                                                        # VMEM
    """
    HW = H * W
    S = B * HW
    cout = nb_out * zoom2
    n_layers = n_mid + 2                    # block1 + mids + fused heads

    x_ref, rf_ref, m_ref = refs[0], refs[1], refs[2]
    wb = refs[3:3 + 2 * n_layers]
    out_ref = refs[3 + 2 * n_layers]
    hid_ref = refs[4 + 2 * n_layers]
    patch_ref = refs[5 + 2 * n_layers]

    def pad_rows(a, rows):
        if a.shape[0] == rows:
            return a
        pad = jnp.zeros((rows - a.shape[0], a.shape[1]), a.dtype)
        return jnp.concatenate([a, pad], axis=0)

    def conv3x3(a, cin_pad, w_ref, b_ref, relu):
        """3x3 / stride 1 / pad 1 conv as a single MXU matmul.

        a: (cin_pad, S) f32 activation, channel-major, batch along lanes.
        Builds the im2col patch (9*cin_pad, S) in VMEM (bf16) with lane rolls
        + border masks, then out = W(Cout, 9*cin_pad) @ patch, f32 accumulate.
        """
        K = 9 * cin_pad
        for t, (ky, kx) in enumerate(_TAPS):
            d = ky * W + kx                 # neighbour offset in flat (y, x)
            if d == 0:
                tap = a
            else:
                tap = pltpu.roll(a, (-d) % S, axis=1)   # tap[:,p] = a[:,p+d]
                tap = tap * m_ref[t:t + 1, :]           # zero OOB neighbours
            patch_ref[t * cin_pad:(t + 1) * cin_pad, :] = tap.astype(
                patch_ref.dtype)
            del tap
        acc = jnp.dot(w_ref[...], patch_ref[0:K, :],
                      preferred_element_type=jnp.float32)
        acc = acc + b_ref[...]              # (Cout, 1) broadcast, kept in f32
        return jnp.maximum(acc, 0.0) if relu else acc

    # ---- layer-0 activation: (c0_pad, S), zero channel padding from wrapper --
    if B == 1:
        a = x_ref[0]
    else:
        a = jnp.concatenate([x_ref[b] for b in range(B)], axis=1)

    # ---- block1 + middle blocks ---------------------------------------------
    a = conv3x3(a, c0_pad, wb[0], wb[1], relu=True)                # (f, S)
    # Mids are unrolled; for very deep cells stack their weights and iterate
    # with lax.fori_loop instead (negligible at the depths used here).
    for i in range(n_mid):
        a = conv3x3(pad_rows(a, f_pad), f_pad,
                    wb[2 + 2 * i], wb[3 + 2 * i], relu=True)

    # ---- fused heads: rows [0,f) = hidden (ReLU), rows [f,f+cout) = output ---
    v = conv3x3(pad_rows(a, f_pad), f_pad, wb[-2], wb[-1], relu=False)
    hid = jnp.maximum(v[0:f, :], 0.0)
    outv = v[f:f + cout, :]

    # ---- epilogue: lane-dense (C, HW) stores; rf channel-repeat folded in ----
    for b in range(B):
        lo, hi = b * HW, (b + 1) * HW
        hid_ref[b, :, :] = hid[:, lo:hi].astype(hid_ref.dtype)
        rf_rep = jnp.concatenate([rf_ref[b]] * zoom2, axis=0)      # (cout, HW)
        out_ref[b, :, :] = (outv[:, lo:hi] + rf_rep).astype(out_ref.dtype)


def rslp_cell_forward(x_nchw, reference_frame_nchw, params, zoom_factor,
                      mxu_dtype=jnp.bfloat16):
    """Matches RSLPCell.forward: returns (x, hidden_state), both NCHW."""
    N, C0, H, W = x_nchw.shape
    HW = H * W
    f = params["hidden"][0].shape[-1]
    nb_out = reference_frame_nchw.shape[1]
    zoom2 = zoom_factor * zoom_factor
    cout = nb_out * zoom2
    assert params["output"][0].shape[-1] == cout

    B = _pick_batch_block(N, HW)
    S = B * HW
    c0_pad = _round_up(C0, 16)   # 16-row alignment for bf16 sublane packing
    f_pad = _round_up(f, 16)

    # Lane-dense channel-major inputs: NCHW -> (N, C, H*W) is a free reshape.
    x3 = x_nchw.reshape(N, C0, HW)
    if c0_pad != C0:
        x3 = jnp.pad(x3, ((0, 0), (0, c0_pad - C0), (0, 0)))
    rf3 = reference_frame_nchw.reshape(N, nb_out, HW)
    masks = _make_border_masks(H, W, B)                       # (9, S) f32

    # Pre-flattened channel-major 2-D weights (bf16 MXU operands, f32 biases).
    w1, b1 = _flatten_conv(*params["block1"], cin_pad=c0_pad, mxu_dtype=mxu_dtype)
    weights = [w1, b1]
    for w, b in params["blocks"]:
        wm, bm = _flatten_conv(w, b, cin_pad=f_pad, mxu_dtype=mxu_dtype)
        weights += [wm, bm]
    wh, bh = _flatten_conv(*params["hidden"], cin_pad=f_pad, mxu_dtype=mxu_dtype)
    wo, bo = _flatten_conv(*params["output"], cin_pad=f_pad, mxu_dtype=mxu_dtype)
    weights += [jnp.concatenate([wh, wo], axis=0),   # fused heads (f+cout, 9*f_pad)
                jnp.concatenate([bh, bo], axis=0)]   # fused bias  (f+cout, 1)

    in_specs = [
        pl.BlockSpec((B, c0_pad, HW), lambda i: (i, 0, 0)),
        pl.BlockSpec((B, nb_out, HW), lambda i: (i, 0, 0)),
        pl.BlockSpec((9, S), lambda i: (0, 0)),
    ]
    in_specs += [pl.BlockSpec(w.shape, lambda i: (0, 0)) for w in weights]

    kernel = functools.partial(
        _rslp_kernel, n_mid=len(params["blocks"]), B=B, H=H, W=W, f=f,
        nb_out=nb_out, zoom2=zoom2, c0_pad=c0_pad, f_pad=f_pad)

    out, hid = pl.pallas_call(
        kernel,
        grid=(N // B,),
        in_specs=in_specs,
        out_specs=(
            pl.BlockSpec((B, cout, HW), lambda i: (i, 0, 0)),
            pl.BlockSpec((B, f, HW), lambda i: (i, 0, 0)),
        ),
        out_shape=(
            jax.ShapeDtypeStruct((N, cout, HW), jnp.float32),
            jax.ShapeDtypeStruct((N, f, HW), jnp.float32),
        ),
        scratch_shapes=[
            # im2col patch, reused by every layer (bf16 -> half the traffic).
            pltpu.VMEM((9 * max(c0_pad, f_pad), S), mxu_dtype),
        ],
        compiler_params=pltpu.CompilerParams(
            dimension_semantics=("parallel",)),
    )(x3, rf3, masks, *weights)

    # (N, C, H*W) -> (N, C, H, W): free trailing reshape, already NCHW.
    return out.reshape(N, cout, H, W), hid.reshape(N, f, H, W)


# ----------------------------- pure-JAX reference ----------------------------

def rslp_reference(x, reference_frame, params, zoom_factor):
    """XLA reference of RSLPCell.forward, f32 end-to-end."""
    def conv(a, w, b, relu):
        y = jax.lax.conv_general_dilated(
            a, w, (1, 1), "SAME",
            dimension_numbers=("NCHW", "HWIO", "NCHW"),
            precision=jax.lax.Precision.HIGHEST)
        y = y + b.reshape(1, -1, 1, 1)
        return jnp.maximum(y, 0.0) if relu else y

    a = conv(x, *params["block1"], relu=True)
    for w, b in params["blocks"]:
        a = conv(a, w, b, relu=True)
    hidden = conv(a, *params["hidden"], relu=True)
    out = conv(a, *params["output"], relu=False)
    out = out + jnp.tile(reference_frame, (1, zoom_factor * zoom_factor, 1, 1))
    return out, hidden


# ------------------------------- parameter init ------------------------------

def init_conv_params(key, cin, cout):
    """Deterministic xavier-uniform weights (HWIO) + PyTorch-style bias."""
    fan_in = cin * 9
    fan_out = cout * 9
    w_bound = math.sqrt(6.0 / (fan_in + fan_out))
    kw, kb = jax.random.split(key)
    w = jax.random.uniform(kw, (3, 3, cin, cout), jnp.float32, -w_bound, w_bound)
    b_bound = 1.0 / math.sqrt(fan_in)
    b = jax.random.uniform(kb, (1, cout), jnp.float32, -b_bound, b_bound)
    return w, b


def make_rslp_params(key, f, n, zoom_factor, nb_in_channels, nb_out_channels):
    input_channel_size = (
        f + nb_in_channels * 3 + nb_out_channels * zoom_factor * zoom_factor
    )
    keys = jax.random.split(key, n + 2)
    params = {}
    params["block1"] = init_conv_params(keys[0], input_channel_size, f)
    params["blocks"] = [
        init_conv_params(keys[1 + i], f, f) for i in range(n - 2)
    ]
    params["hidden"] = init_conv_params(keys[n - 1], f, f)
    params["output"] = init_conv_params(
        keys[n], f, nb_out_channels * zoom_factor * zoom_factor
    )
    return params


if __name__ == "__main__":
    # Hyperparameters (small, consistent with the module's __init__).
    f = 32
    n = 3                 # -> n - 2 = 1 middle conv block
    zoom_factor = 2
    nb_in_channels = 3
    nb_out_channels = 3
    batch, H, W = 2, 16, 16

    input_channel_size = (
        f + nb_in_channels * 3 + nb_out_channels * zoom_factor * zoom_factor
    )

    key = jax.random.PRNGKey(0)
    kp, kx, kr = jax.random.split(key, 3)

    params = make_rslp_params(
        kp, f, n, zoom_factor, nb_in_channels, nb_out_channels
    )

    # PyTorch-convention NCHW inputs.
    x = jax.random.normal(kx, (batch, input_channel_size, H, W), jnp.float32)
    reference_frame = jax.random.normal(
        kr, (batch, nb_out_channels, H, W), jnp.float32
    )

    fwd = jax.jit(
        functools.partial(rslp_cell_forward, zoom_factor=zoom_factor)
    )
    out, hidden_state = fwd(x, reference_frame, params)
    jax.block_until_ready((out, hidden_state))

    expected_out_shape = (batch, nb_out_channels * zoom_factor * zoom_factor, H, W)
    expected_hidden_shape = (batch, f, H, W)
    assert out.shape == expected_out_shape, out.shape
    assert hidden_state.shape == expected_hidden_shape, hidden_state.shape

    # Numerics check vs. the XLA reference.  Tolerance covers the bf16 MXU
    # operands (accumulation is f32); structural errors would be O(1).
    ref_out, ref_hid = rslp_reference(x, reference_frame, params, zoom_factor)
    np.testing.assert_allclose(np.asarray(out), np.asarray(ref_out),
                               rtol=5e-2, atol=5e-2)
    np.testing.assert_allclose(np.asarray(hidden_state), np.asarray(ref_hid),
                               rtol=5e-2, atol=5e-2)

    print("KERNEL_OK")
</pallas_src>

<mosaic_0001>
module attributes {stable_mosaic.version = 11 : i64} {
  func.func @_rslp_kernel(%arg0: i32, %arg1: memref<1x64x256xf32, #tpu.memory_space<vmem>>, %arg2: memref<1x3x256xf32, #tpu.memory_space<vmem>>, %arg3: memref<9x256xf32, #tpu.memory_space<vmem>>, %arg4: memref<32x576xbf16, #tpu.memory_space<vmem>>, %arg5: memref<32x1xf32, #tpu.memory_space<vmem>>, %arg6: memref<32x288xbf16, #tpu.memory_space<vmem>>, %arg7: memref<32x1xf32, #tpu.memory_space<vmem>>, %arg8: memref<44x288xbf16, #tpu.memory_space<vmem>>, %arg9: memref<44x1xf32, #tpu.memory_space<vmem>>, %arg10: memref<1x12x256xf32, #tpu.memory_space<vmem>>, %arg11: memref<1x32x256xf32, #tpu.memory_space<vmem>>, %arg12: memref<576x256xbf16, #tpu.memory_space<vmem>>) attributes {dimension_semantics = [#tpu.dimension_semantics<parallel>], iteration_bounds = array<i64: 2>, scalar_prefetch = 0 : i64, scratch_operands = 1 : i64, tpu.core_type = #tpu.core_type<tc>, window_params = [{transform_indices = @transform_0, window_bounds = array<i64: 1, 64, 256>}, {transform_indices = @transform_1, window_bounds = array<i64: 1, 3, 256>}, {pipeline_mode = #tpu.pipeline_mode<synchronous>, transform_indices = @transform_2, window_bounds = array<i64: 9, 256>}, {pipeline_mode = #tpu.pipeline_mode<synchronous>, transform_indices = @transform_3, window_bounds = array<i64: 32, 576>}, {pipeline_mode = #tpu.pipeline_mode<synchronous>, transform_indices = @transform_4, window_bounds = array<i64: 32, 1>}, {pipeline_mode = #tpu.pipeline_mode<synchronous>, transform_indices = @transform_5, window_bounds = array<i64: 32, 288>}, {pipeline_mode = #tpu.pipeline_mode<synchronous>, transform_indices = @transform_6, window_bounds = array<i64: 32, 1>}, {pipeline_mode = #tpu.pipeline_mode<synchronous>, transform_indices = @transform_7, window_bounds = array<i64: 44, 288>}, {pipeline_mode = #tpu.pipeline_mode<synchronous>, transform_indices = @transform_8, window_bounds = array<i64: 44, 1>}, {transform_indices = @transform_9, window_bounds = array<i64: 1, 12, 256>}, {transform_indices = @transform_10, window_bounds = array<i64: 1, 32, 256>}]} {
    %c0 = arith.constant 0 : index
    %c0_0 = arith.constant 0 : index
    %c0_1 = arith.constant 0 : index
    %0 = vector.load %arg1[%c0, %c0_0, %c0_1] : memref<1x64x256xf32, #tpu.memory_space<vmem>>, vector<1x64x256xf32>
    %1 = vector.shape_cast %0 : vector<1x64x256xf32> to vector<64x256xf32>
    %c17_i32 = arith.constant 17 : i32
    %2 = tpu.dynamic_rotate %1 by %c17_i32 dim 1 : vector<64x256xf32>, i32 -> vector<64x256xf32>
    %c0_2 = arith.constant 0 : index
    %c0_3 = arith.constant 0 : index
    %3 = vector.load %arg3[%c0_2, %c0_3] : memref<9x256xf32, #tpu.memory_space<vmem>>, vector<1x256xf32>
    %4 = vector.broadcast %3 : vector<1x256xf32> to vector<64x256xf32>
    %5 = arith.mulf %2, %4 : vector<64x256xf32>
    %6 = arith.truncf %5 : vector<64x256xf32> to vector<64x256xbf16>
    %c0_4 = arith.constant 0 : index
    %c0_5 = arith.constant 0 : index
    %7 = vector.load %arg12[%c0_4, %c0_5] : memref<576x256xbf16, #tpu.memory_space<vmem>>, vector<64x256xbf16>
    tpu.vector_store %arg12[%c0_4, %c0_5], %6 {strides = array<i32>} : memref<576x256xbf16, #tpu.memory_space<vmem>>, vector<64x256xbf16>,
    %c16_i32 = arith.constant 16 : i32
    %8 = tpu.dynamic_rotate %1 by %c16_i32 dim 1 : vector<64x256xf32>, i32 -> vector<64x256xf32>
    %c1 = arith.constant 1 : index
    %c0_6 = arith.constant 0 : index
    %9 = vector.load %arg3[%c1, %c0_6] : memref<9x256xf32, #tpu.memory_space<vmem>>, vector<1x256xf32>
    %10 = vector.broadcast %9 : vector<1x256xf32> to vector<64x256xf32>
    %11 = arith.mulf %8, %10 : vector<64x256xf32>
    %12 = arith.truncf %11 : vector<64x256xf32> to vector<64x256xbf16>
    %c64 = arith.constant 64 : index
    %c0_7 = arith.constant 0 : index
    %13 = vector.load %arg12[%c64, %c0_7] : memref<576x256xbf16, #tpu.memory_space<vmem>>, vector<64x256xbf16>
    tpu.vector_store %arg12[%c64, %c0_7], %12 {strides = array<i32>} : memref<576x256xbf16, #tpu.memory_space<vmem>>, vector<64x256xbf16>,
    %c15_i32 = arith.constant 15 : i32
    %14 = tpu.dynamic_rotate %1 by %c15_i32 dim 1 : vector<64x256xf32>, i32 -> vector<64x256xf32>
    %c2 = arith.constant 2 : index
    %c0_8 = arith.constant 0 : index
    %15 = vector.load %arg3[%c2, %c0_8] : memref<9x256xf32, #tpu.memory_space<vmem>>, vector<1x256xf32>
    %16 = vector.broadcast %15 : vector<1x256xf32> to vector<64x256xf32>
    %17 = arith.mulf %14, %16 : vector<64x256xf32>
    %18 = arith.truncf %17 : vector<64x256xf32> to vector<64x256xbf16>
    %c128 = arith.constant 128 : index
    %c0_9 = arith.constant 0 : index
    %19 = vector.load %arg12[%c128, %c0_9] : memref<576x256xbf16, #tpu.memory_space<vmem>>, vector<64x256xbf16>
    tpu.vector_store %arg12[%c128, %c0_9], %18 {strides = array<i32>} : memref<576x256xbf16, #tpu.memory_space<vmem>>, vector<64x256xbf16>,
    %c1_i32 = arith.constant 1 : i32
    %20 = tpu.dynamic_rotate %1 by %c1_i32 dim 1 : vector<64x256xf32>, i32 -> vector<64x256xf32>
    %c3 = arith.constant 3 : index
    %c0_10 = arith.constant 0 : index
    %21 = vector.load %arg3[%c3, %c0_10] : memref<9x256xf32, #tpu.memory_space<vmem>>, vector<1x256xf32>
    %22 = vector.broadcast %21 : vector<1x256xf32> to vector<64x256xf32>
    %23 = arith.mulf %20, %22 : vector<64x256xf32>
    %24 = arith.truncf %23 : vector<64x256xf32> to vector<64x256xbf16>
    %c192 = arith.constant 192 : index
    %c0_11 = arith.constant 0 : index
    %25 = vector.load %arg12[%c192, %c0_11] : memref<576x256xbf16, #tpu.memory_space<vmem>>, vector<64x256xbf16>
    tpu.vector_store %arg12[%c192, %c0_11], %24 {strides = array<i32>} : memref<576x256xbf16, #tpu.memory_space<vmem>>, vector<64x256xbf16>,
    %26 = arith.truncf %1 : vector<64x256xf32> to vector<64x256xbf16>
    %c256 = arith.constant 256 : index
    %c0_12 = arith.constant 0 : index
    %27 = vector.load %arg12[%c256, %c0_12] : memref<576x256xbf16, #tpu.memory_space<vmem>>, vector<64x256xbf16>
    tpu.vector_store %arg12[%c256, %c0_12], %26 {strides = array<i32>} : memref<576x256xbf16, #tpu.memory_space<vmem>>, vector<64x256xbf16>,
    %c255_i32 = arith.constant 255 : i32
    %28 = tpu.dynamic_rotate %1 by %c255_i32 dim 1 : vector<64x256xf32>, i32 -> vector<64x256xf32>
    %c5 = arith.constant 5 : index
    %c0_13 = arith.constant 0 : index
    %29 = vector.load %arg3[%c5, %c0_13] : memref<9x256xf32, #tpu.memory_space<vmem>>, vector<1x256xf32>
    %30 = vector.broadcast %29 : vector<1x256xf32> to vector<64x256xf32>
    %31 = arith.mulf %28, %30 : vector<64x256xf32>
    %32 = arith.truncf %31 : vector<64x256xf32> to vector<64x256xbf16>
    %c320 = arith.constant 320 : index
    %c0_14 = arith.constant 0 : index
    %33 = vector.load %arg12[%c320, %c0_14] : memref<576x256xbf16, #tpu.memory_space<vmem>>, vector<64x256xbf16>
    tpu.vector_store %arg12[%c320, %c0_14], %32 {strides = array<i32>} : memref<576x256xbf16, #tpu.memory_space<vmem>>, vector<64x256xbf16>,
    %c241_i32 = arith.constant 241 : i32
    %34 = tpu.dynamic_rotate %1 by %c241_i32 dim 1 : vector<64x256xf32>, i32 -> vector<64x256xf32>
    %c6 = arith.constant 6 : index
    %c0_15 = arith.constant 0 : index
    %35 = vector.load %arg3[%c6, %c0_15] : memref<9x256xf32, #tpu.memory_space<vmem>>, vector<1x256xf32>
    %36 = vector.broadcast %35 : vector<1x256xf32> to vector<64x256xf32>
    %37 = arith.mulf %34, %36 : vector<64x256xf32>
    %38 = arith.truncf %37 : vector<64x256xf32> to vector<64x256xbf16>
    %c384 = arith.constant 384 : index
    %c0_16 = arith.constant 0 : index
    %39 = vector.load %arg12[%c384, %c0_16] : memref<576x256xbf16, #tpu.memory_space<vmem>>, vector<64x256xbf16>
    tpu.vector_store %arg12[%c384, %c0_16], %38 {strides = array<i32>} : memref<576x256xbf16, #tpu.memory_space<vmem>>, vector<64x256xbf16>,
    %c240_i32 = arith.constant 240 : i32
    %40 = tpu.dynamic_rotate %1 by %c240_i32 dim 1 : vector<64x256xf32>, i32 -> vector<64x256xf32>
    %c7 = arith.constant 7 : index
    %c0_17 = arith.constant 0 : index
    %41 = vector.load %arg3[%c7, %c0_17] : memref<9x256xf32, #tpu.memory_space<vmem>>, vector<1x256xf32>
    %42 = vector.broadcast %41 : vector<1x256xf32> to vector<64x256xf32>
    %43 = arith.mulf %40, %42 : vector<64x256xf32>
    %44 = arith.truncf %43 : vector<64x256xf32> to vector<64x256xbf16>
    %c448 = arith.constant 448 : index
    %c0_18 = arith.constant 0 : index
    %45 = vector.load %arg12[%c448, %c0_18] : memref<576x256xbf16, #tpu.memory_space<vmem>>, vector<64x256xbf16>
    tpu.vector_store %arg12[%c448, %c0_18], %44 {strides = array<i32>} : memref<576x256xbf16, #tpu.memory_space<vmem>>, vector<64x256xbf16>,
    %c239_i32 = arith.constant 239 : i32
    %46 = tpu.dynamic_rotate %1 by %c239_i32 dim 1 : vector<64x256xf32>, i32 -> vector<64x256xf32>
    %c8 = arith.constant 8 : index
    %c0_19 = arith.constant 0 : index
    %47 = vector.load %arg3[%c8, %c0_19] : memref<9x256xf32, #tpu.memory_space<vmem>>, vector<1x256xf32>
    %48 = vector.broadcast %47 : vector<1x256xf32> to vector<64x256xf32>
    %49 = arith.mulf %46, %48 : vector<64x256xf32>
    %50 = arith.truncf %49 : vector<64x256xf32> to vector<64x256xbf16>
    %c512 = arith.constant 512 : index
    %c0_20 = arith.constant 0 : index
    %51 = vector.load %arg12[%c512, %c0_20] : memref<576x256xbf16, #tpu.memory_space<vmem>>, vector<64x256xbf16>
    tpu.vector_store %arg12[%c512, %c0_20], %50 {strides = array<i32>} : memref<576x256xbf16, #tpu.memory_space<vmem>>, vector<64x256xbf16>,
    %c0_21 = arith.constant 0 : index
    %c0_22 = arith.constant 0 : index
    %52 = vector.load %arg4[%c0_21, %c0_22] : memref<32x576xbf16, #tpu.memory_space<vmem>>, vector<32x576xbf16>
    %c0_23 = arith.constant 0 : index
    %c0_24 = arith.constant 0 : index
    %53 = vector.load %arg12[%c0_23, %c0_24] : memref<576x256xbf16, #tpu.memory_space<vmem>>, vector<576x256xbf16>
    %cst = arith.constant dense<0.000000e+00> : vector<32x256xf32>
    %54 = tpu.matmul %52, %53, %cst {dimension_numbers = #tpu.dot_dimension_numbers<[1], [0], [0], [1], [0, 0, 1, 1], [], []>} : vector<32x576xbf16>, vector<576x256xbf16>, vector<32x256xf32> -> vector<32x256xf32>
    %c0_25 = arith.constant 0 : index
    %c0_26 = arith.constant 0 : index
    %55 = vector.load %arg5[%c0_25, %c0_26] : memref<32x1xf32, #tpu.memory_space<vmem>>, vector<32x1xf32>
    %56 = vector.broadcast %55 : vector<32x1xf32> to vector<32x256xf32>
    %57 = arith.addf %54, %56 : vector<32x256xf32>
    %cst_27 = arith.constant 0.000000e+00 : f32
    %58 = vector.broadcast %cst_27 : f32 to vector<32x256xf32>
    %59 = arith.maximumf %57, %58 : vector<32x256xf32>
    %c17_i32_28 = arith.constant 17 : i32
    %60 = tpu.dynamic_rotate %59 by %c17_i32_28 dim 1 : vector<32x256xf32>, i32 -> vector<32x256xf32>
    %c0_29 = arith.constant 0 : index
    %c0_30 = arith.constant 0 : index
    %61 = vector.load %arg3[%c0_29, %c0_30] : memref<9x256xf32, #tpu.memory_space<vmem>>, vector<1x256xf32>
    %62 = vector.broadcast %61 : vector<1x256xf32> to vector<32x256xf32>
    %63 = arith.mulf %60, %62 : vector<32x256xf32>
    %64 = arith.truncf %63 : vector<32x256xf32> to vector<32x256xbf16>
    %c0_31 = arith.constant 0 : index
    %c0_32 = arith.constant 0 : index
    %65 = vector.load %arg12[%c0_31, %c0_32] : memref<576x256xbf16, #tpu.memory_space<vmem>>, vector<32x256xbf16>
    tpu.vector_store %arg12[%c0_31, %c0_32], %64 {strides = array<i32>} : memref<576x256xbf16, #tpu.memory_space<vmem>>, vector<32x256xbf16>,
    %c16_i32_33 = arith.constant 16 : i32
    %66 = tpu.dynamic_rotate %59 by %c16_i32_33 dim 1 : vector<32x256xf32>, i32 -> vector<32x256xf32>
    %c1_34 = arith.constant 1 : index
    %c0_35 = arith.constant 0 : index
    %67 = vector.load %arg3[%c1_34, %c0_35] : memref<9x256xf32, #tpu.memory_space<vmem>>, vector<1x256xf32>
    %68 = vector.broadcast %67 : vector<1x256xf32> to vector<32x256xf32>
    %69 = arith.mulf %66, %68 : vector<32x256xf32>
    %70 = arith.truncf %69 : vector<32x256xf32> to vector<32x256xbf16>
    %c32 = arith.constant 32 : index
    %c0_36 = arith.constant 0 : index
    %71 = vector.load %arg12[%c32, %c0_36] : memref<576x256xbf16, #tpu.memory_space<vmem>>, vector<32x256xbf16>
    tpu.vector_store %arg12[%c32, %c0_36], %70 {strides = array<i32>} : memref<576x256xbf16, #tpu.memory_space<vmem>>, vector<32x256xbf16>,
    %c15_i32_37 = arith.constant 15 : i32
    %72 = tpu.dynamic_rotate %59 by %c15_i32_37 dim 1 : vector<32x256xf32>, i32 -> vector<32x256xf32>
    %c2_38 = arith.constant 2 : index
    %c0_39 = arith.constant 0 : index
    %73 = vector.load %arg3[%c2_38, %c0_39] : memref<9x256xf32, #tpu.memory_space<vmem>>, vector<1x256xf32>
    %74 = vector.broadcast %73 : vector<1x256xf32> to vector<32x256xf32>
    %75 = arith.mulf %72, %74 : vector<32x256xf32>
    %76 = arith.truncf %75 : vector<32x256xf32> to vector<32x256xbf16>
    %c64_40 = arith.constant 64 : index
    %c0_41 = arith.constant 0 : index
    %77 = vector.load %arg12[%c64_40, %c0_41] : memref<576x256xbf16, #tpu.memory_space<vmem>>, vector<32x256xbf16>
    tpu.vector_store %arg12[%c64_40, %c0_41], %76 {strides = array<i32>} : memref<576x256xbf16, #tpu.memory_space<vmem>>, vector<32x256xbf16>,
    %c1_i32_42 = arith.constant 1 : i32
    %78 = tpu.dynamic_rotate %59 by %c1_i32_42 dim 1 : vector<32x256xf32>, i32 -> vector<32x256xf32>
    %c3_43 = arith.constant 3 : index
    %c0_44 = arith.constant 0 : index
    %79 = vector.load %arg3[%c3_43, %c0_44] : memref<9x256xf32, #tpu.memory_space<vmem>>, vector<1x256xf32>
    %80 = vector.broadcast %79 : vector<1x256xf32> to vector<32x256xf32>
    %81 = arith.mulf %78, %80 : vector<32x256xf32>
    %82 = arith.truncf %81 : vector<32x256xf32> to vector<32x256xbf16>
    %c96 = arith.constant 96 : index
    %c0_45 = arith.constant 0 : index
    %83 = vector.load %arg12[%c96, %c0_45] : memref<576x256xbf16, #tpu.memory_space<vmem>>, vector<32x256xbf16>
    tpu.vector_store %arg12[%c96, %c0_45], %82 {strides = array<i32>} : memref<576x256xbf16, #tpu.memory_space<vmem>>, vector<32x256xbf16>,
    %84 = arith.truncf %59 : vector<32x256xf32> to vector<32x256xbf16>
    %c128_46 = arith.constant 128 : index
    %c0_47 = arith.constant 0 : index
    %85 = vector.load %arg12[%c128_46, %c0_47] : memref<576x256xbf16, #tpu.memory_space<vmem>>, vector<32x256xbf16>
    tpu.vector_store %arg12[%c128_46, %c0_47], %84 {strides = array<i32>} : memref<576x256xbf16, #tpu.memory_space<vmem>>, vector<32x256xbf16>,
    %c255_i32_48 = arith.constant 255 : i32
    %86 = tpu.dynamic_rotate %59 by %c255_i32_48 dim 1 : vector<32x256xf32>, i32 -> vector<32x256xf32>
    %c5_49 = arith.constant 5 : index
    %c0_50 = arith.constant 0 : index
    %87 = vector.load %arg3[%c5_49, %c0_50] : memref<9x256xf32, #tpu.memory_space<vmem>>, vector<1x256xf32>
    %88 = vector.broadcast %87 : vector<1x256xf32> to vector<32x256xf32>
    %89 = arith.mulf %86, %88 : vector<32x256xf32>
    %90 = arith.truncf %89 : vector<32x256xf32> to vector<32x256xbf16>
    %c160 = arith.constant 160 : index
    %c0_51 = arith.constant 0 : index
    %91 = vector.load %arg12[%c160, %c0_51] : memref<576x256xbf16, #tpu.memory_space<vmem>>, vector<32x256xbf16>
    tpu.vector_store %arg12[%c160, %c0_51], %90 {strides = array<i32>} : memref<576x256xbf16, #tpu.memory_space<vmem>>, vector<32x256xbf16>,
    %c241_i32_52 = arith.constant 241 : i32
    %92 = tpu.dynamic_rotate %59 by %c241_i32_52 dim 1 : vector<32x256xf32>, i32 -> vector<32x256xf32>
    %c6_53 = arith.constant 6 : index
    %c0_54 = arith.constant 0 : index
    %93 = vector.load %arg3[%c6_53, %c0_54] : memref<9x256xf32, #tpu.memory_space<vmem>>, vector<1x256xf32>
    %94 = vector.broadcast %93 : vector<1x256xf32> to vector<32x256xf32>
    %95 = arith.mulf %92, %94 : vector<32x256xf32>
    %96 = arith.truncf %95 : vector<32x256xf32> to vector<32x256xbf16>
    %c192_55 = arith.constant 192 : index
    %c0_56 = arith.constant 0 : index
    %97 = vector.load %arg12[%c192_55, %c0_56] : memref<576x256xbf16, #tpu.memory_space<vmem>>, vector<32x256xbf16>
    tpu.vector_store %arg12[%c192_55, %c0_56], %96 {strides = array<i32>} : memref<576x256xbf16, #tpu.memory_space<vmem>>, vector<32x256xbf16>,
    %c240_i32_57 = arith.constant 240 : i32
    %98 = tpu.dynamic_rotate %59 by %c240_i32_57 dim 1 : vector<32x256xf32>, i32 -> vector<32x256xf32>
    %c7_58 = arith.constant 7 : index
    %c0_59 = arith.constant 0 : index
    %99 = vector.load %arg3[%c7_58, %c0_59] : memref<9x256xf32, #tpu.memory_space<vmem>>, vector<1x256xf32>
    %100 = vector.broadcast %99 : vector<1x256xf32> to vector<32x256xf32>
    %101 = arith.mulf %98, %100 : vector<32x256xf32>
    %102 = arith.truncf %101 : vector<32x256xf32> to vector<32x256xbf16>
    %c224 = arith.constant 224 : index
    %c0_60 = arith.constant 0 : index
    %103 = vector.load %arg12[%c224, %c0_60] : memref<576x256xbf16, #tpu.memory_space<vmem>>, vector<32x256xbf16>
    tpu.vector_store %arg12[%c224, %c0_60], %102 {strides = array<i32>} : memref<576x256xbf16, #tpu.memory_space<vmem>>, vector<32x256xbf16>,
    %c239_i32_61 = arith.constant 239 : i32
    %104 = tpu.dynamic_rotate %59 by %c239_i32_61 dim 1 : vector<32x256xf32>, i32 -> vector<32x256xf32>
    %c8_62 = arith.constant 8 : index
    %c0_63 = arith.constant 0 : index
    %105 = vector.load %arg3[%c8_62, %c0_63] : memref<9x256xf32, #tpu.memory_space<vmem>>, vector<1x256xf32>
    %106 = vector.broadcast %105 : vector<1x256xf32> to vector<32x256xf32>
    %107 = arith.mulf %104, %106 : vector<32x256xf32>
    %108 = arith.truncf %107 : vector<32x256xf32> to vector<32x256xbf16>
    %c256_64 = arith.constant 256 : index
    %c0_65 = arith.constant 0 : index
    %109 = vector.load %arg12[%c256_64, %c0_65] : memref<576x256xbf16, #tpu.memory_space<vmem>>, vector<32x256xbf16>
    tpu.vector_store %arg12[%c256_64, %c0_65], %108 {strides = array<i32>} : memref<576x256xbf16, #tpu.memory_space<vmem>>, vector<32x256xbf16>,
    %c0_66 = arith.constant 0 : index
    %c0_67 = arith.constant 0 : index
    %110 = vector.load %arg6[%c0_66, %c0_67] : memref<32x288xbf16, #tpu.memory_space<vmem>>, vector<32x288xbf16>
    %c0_68 = arith.constant 0 : index
    %c0_69 = arith.constant 0 : index
    %111 = vector.load %arg12[%c0_68, %c0_69] : memref<576x256xbf16, #tpu.memory_space<vmem>>, vector<288x256xbf16>
    %cst_70 = arith.constant dense<0.000000e+00> : vector<32x256xf32>
    %112 = tpu.matmul %110, %111, %cst_70 {dimension_numbers = #tpu.dot_dimension_numbers<[1], [0], [0], [1], [0, 0, 1, 1], [], []>} : vector<32x288xbf16>, vector<288x256xbf16>, vector<32x256xf32> -> vector<32x256xf32>
    %c0_71 = arith.constant 0 : index
    %c0_72 = arith.constant 0 : index
    %113 = vector.load %arg7[%c0_71, %c0_72] : memref<32x1xf32, #tpu.memory_space<vmem>>, vector<32x1xf32>
    %114 = vector.broadcast %113 : vector<32x1xf32> to vector<32x256xf32>
    %115 = arith.addf %112, %114 : vector<32x256xf32>
    %cst_73 = arith.constant 0.000000e+00 : f32
    %116 = vector.broadcast %cst_73 : f32 to vector<32x256xf32>
    %117 = arith.maximumf %115, %116 : vector<32x256xf32>
    %c17_i32_74 = arith.constant 17 : i32
    %118 = tpu.dynamic_rotate %117 by %c17_i32_74 dim 1 : vector<32x256xf32>, i32 -> vector<32x256xf32>
    %c0_75 = arith.constant 0 : index
    %c0_76 = arith.constant 0 : index
    %119 = vector.load %arg3[%c0_75, %c0_76] : memref<9x256xf32, #tpu.memory_space<vmem>>, vector<1x256xf32>
    %120 = vector.broadcast %119 : vector<1x256xf32> to vector<32x256xf32>
    %121 = arith.mulf %118, %120 : vector<32x256xf32>
    %122 = arith.truncf %121 : vector<32x256xf32> to vector<32x256xbf16>
    %c0_77 = arith.constant 0 : index
    %c0_78 = arith.constant 0 : index
    %123 = vector.load %arg12[%c0_77, %c0_78] : memref<576x256xbf16, #tpu.memory_space<vmem>>, vector<32x256xbf16>
    tpu.vector_store %arg12[%c0_77, %c0_78], %122 {strides = array<i32>} : memref<576x256xbf16, #tpu.memory_space<vmem>>, vector<32x256xbf16>,
    %c16_i32_79 = arith.constant 16 : i32
    %124 = tpu.dynamic_rotate %117 by %c16_i32_79 dim 1 : vector<32x256xf32>, i32 -> vector<32x256xf32>
    %c1_80 = arith.constant 1 : index
    %c0_81 = arith.constant 0 : index
    %125 = vector.load %arg3[%c1_80, %c0_81] : memref<9x256xf32, #tpu.memory_space<vmem>>, vector<1x256xf32>
    %126 = vector.broadcast %125 : vector<1x256xf32> to vector<32x256xf32>
    %127 = arith.mulf %124, %126 : vector<32x256xf32>
    %128 = arith.truncf %127 : vector<32x256xf32> to vector<32x256xbf16>
    %c32_82 = arith.constant 32 : index
    %c0_83 = arith.constant 0 : index
    %129 = vector.load %arg12[%c32_82, %c0_83] : memref<576x256xbf16, #tpu.memory_space<vmem>>, vector<32x256xbf16>
    tpu.vector_store %arg12[%c32_82, %c0_83], %128 {strides = array<i32>} : memref<576x256xbf16, #tpu.memory_space<vmem>>, vector<32x256xbf16>,
    %c15_i32_84 = arith.constant 15 : i32
    %130 = tpu.dynamic_rotate %117 by %c15_i32_84 dim 1 : vector<32x256xf32>, i32 -> vector<32x256xf32>
    %c2_85 = arith.constant 2 : index
    %c0_86 = arith.constant 0 : index
    %131 = vector.load %arg3[%c2_85, %c0_86] : memref<9x256xf32, #tpu.memory_space<vmem>>, vector<1x256xf32>
    %132 = vector.broadcast %131 : vector<1x256xf32> to vector<32x256xf32>
    %133 = arith.mulf %130, %132 : vector<32x256xf32>
    %134 = arith.truncf %133 : vector<32x256xf32> to vector<32x256xbf16>
    %c64_87 = arith.constant 64 : index
    %c0_88 = arith.constant 0 : index
    %135 = vector.load %arg12[%c64_87, %c0_88] : memref<576x256xbf16, #tpu.memory_space<vmem>>, vector<32x256xbf16>
    tpu.vector_store %arg12[%c64_87, %c0_88], %134 {strides = array<i32>} : memref<576x256xbf16, #tpu.memory_space<vmem>>, vector<32x256xbf16>,
    %c1_i32_89 = arith.constant 1 : i32
    %136 = tpu.dynamic_rotate %117 by %c1_i32_89 dim 1 : vector<32x256xf32>, i32 -> vector<32x256xf32>
    %c3_90 = arith.constant 3 : index
    %c0_91 = arith.constant 0 : index
    %137 = vector.load %arg3[%c3_90, %c0_91] : memref<9x256xf32, #tpu.memory_space<vmem>>, vector<1x256xf32>
    %138 = vector.broadcast %137 : vector<1x256xf32> to vector<32x256xf32>
    %139 = arith.mulf %136, %138 : vector<32x256xf32>
    %140 = arith.truncf %139 : vector<32x256xf32> to vector<32x256xbf16>
    %c96_92 = arith.constant 96 : index
    %c0_93 = arith.constant 0 : index
    %141 = vector.load %arg12[%c96_92, %c0_93] : memref<576x256xbf16, #tpu.memory_space<vmem>>, vector<32x256xbf16>
    tpu.vector_store %arg12[%c96_92, %c0_93], %140 {strides = array<i32>} : memref<576x256xbf16, #tpu.memory_space<vmem>>, vector<32x256xbf16>,
    %142 = arith.truncf %117 : vector<32x256xf32> to vector<32x256xbf16>
    %c128_94 = arith.constant 128 : index
    %c0_95 = arith.constant 0 : index
    %143 = vector.load %arg12[%c128_94, %c0_95] : memref<576x256xbf16, #tpu.memory_space<vmem>>, vector<32x256xbf16>
    tpu.vector_store %arg12[%c128_94, %c0_95], %142 {strides = array<i32>} : memref<576x256xbf16, #tpu.memory_space<vmem>>, vector<32x256xbf16>,
    %c255_i32_96 = arith.constant 255 : i32
    %144 = tpu.dynamic_rotate %117 by %c255_i32_96 dim 1 : vector<32x256xf32>, i32 -> vector<32x256xf32>
    %c5_97 = arith.constant 5 : index
    %c0_98 = arith.constant 0 : index
    %145 = vector.load %arg3[%c5_97, %c0_98] : memref<9x256xf32, #tpu.memory_space<vmem>>, vector<1x256xf32>
    %146 = vector.broadcast %145 : vector<1x256xf32> to vector<32x256xf32>
    %147 = arith.mulf %144, %146 : vector<32x256xf32>
    %148 = arith.truncf %147 : vector<32x256xf32> to vector<32x256xbf16>
    %c160_99 = arith.constant 160 : index
    %c0_100 = arith.constant 0 : index
    %149 = vector.load %arg12[%c160_99, %c0_100] : memref<576x256xbf16, #tpu.memory_space<vmem>>, vector<32x256xbf16>
    tpu.vector_store %arg12[%c160_99, %c0_100], %148 {strides = array<i32>} : memref<576x256xbf16, #tpu.memory_space<vmem>>, vector<32x256xbf16>,
    %c241_i32_101 = arith.constant 241 : i32
    %150 = tpu.dynamic_rotate %117 by %c241_i32_101 dim 1 : vector<32x256xf32>, i32 -> vector<32x256xf32>
    %c6_102 = arith.constant 6 : index
    %c0_103 = arith.constant 0 : index
    %151 = vector.load %arg3[%c6_102, %c0_103] : memref<9x256xf32, #tpu.memory_space<vmem>>, vector<1x256xf32>
    %152 = vector.broadcast %151 : vector<1x256xf32> to vector<32x256xf32>
    %153 = arith.mulf %150, %152 : vector<32x256xf32>
    %154 = arith.truncf %153 : vector<32x256xf32> to vector<32x256xbf16>
    %c192_104 = arith.constant 192 : index
    %c0_105 = arith.constant 0 : index
    %155 = vector.load %arg12[%c192_104, %c0_105] : memref<576x256xbf16, #tpu.memory_space<vmem>>, vector<32x256xbf16>
    tpu.vector_store %arg12[%c192_104, %c0_105], %154 {strides = array<i32>} : memref<576x256xbf16, #tpu.memory_space<vmem>>, vector<32x256xbf16>,
    %c240_i32_106 = arith.constant 240 : i32
    %156 = tpu.dynamic_rotate %117 by %c240_i32_106 dim 1 : vector<32x256xf32>, i32 -> vector<32x256xf32>
    %c7_107 = arith.constant 7 : index
    %c0_108 = arith.constant 0 : index
    %157 = vector.load %arg3[%c7_107, %c0_108] : memref<9x256xf32, #tpu.memory_space<vmem>>, vector<1x256xf32>
    %158 = vector.broadcast %157 : vector<1x256xf32> to vector<32x256xf32>
    %159 = arith.mulf %156, %158 : vector<32x256xf32>
    %160 = arith.truncf %159 : vector<32x256xf32> to vector<32x256xbf16>
    %c224_109 = arith.constant 224 : index
    %c0_110 = arith.constant 0 : index
    %161 = vector.load %arg12[%c224_109, %c0_110] : memref<576x256xbf16, #tpu.memory_space<vmem>>, vector<32x256xbf16>
    tpu.vector_store %arg12[%c224_109, %c0_110], %160 {strides = array<i32>} : memref<576x256xbf16, #tpu.memory_space<vmem>>, vector<32x256xbf16>,
    %c239_i32_111 = arith.constant 239 : i32
    %162 = tpu.dynamic_rotate %117 by %c239_i32_111 dim 1 : vector<32x256xf32>, i32 -> vector<32x256xf32>
    %c8_112 = arith.constant 8 : index
    %c0_113 = arith.constant 0 : index
    %163 = vector.load %arg3[%c8_112, %c0_113] : memref<9x256xf32, #tpu.memory_space<vmem>>, vector<1x256xf32>
    %164 = vector.broadcast %163 : vector<1x256xf32> to vector<32x256xf32>
    %165 = arith.mulf %162, %164 : vector<32x256xf32>
    %166 = arith.truncf %165 : vector<32x256xf32> to vector<32x256xbf16>
    %c256_114 = arith.constant 256 : index
    %c0_115 = arith.constant 0 : index
    %167 = vector.load %arg12[%c256_114, %c0_115] : memref<576x256xbf16, #tpu.memory_space<vmem>>, vector<32x256xbf16>
    tpu.vector_store %arg12[%c256_114, %c0_115], %166 {strides = array<i32>} : memref<576x256xbf16, #tpu.memory_space<vmem>>, vector<32x256xbf16>,
    %c0_116 = arith.constant 0 : index
    %c0_117 = arith.constant 0 : index
    %168 = vector.load %arg8[%c0_116, %c0_117] : memref<44x288xbf16, #tpu.memory_space<vmem>>, vector<44x288xbf16>
    %c0_118 = arith.constant 0 : index
    %c0_119 = arith.constant 0 : index
    %169 = vector.load %arg12[%c0_118, %c0_119] : memref<576x256xbf16, #tpu.memory_space<vmem>>, vector<288x256xbf16>
    %cst_120 = arith.constant dense<0.000000e+00> : vector<44x256xf32>
    %170 = tpu.matmul %168, %169, %cst_120 {dimension_numbers = #tpu.dot_dimension_numbers<[1], [0], [0], [1], [0, 0, 1, 1], [], []>} : vector<44x288xbf16>, vector<288x256xbf16>, vector<44x256xf32> -> vector<44x256xf32>
    %c0_121 = arith.constant 0 : index
    %c0_122 = arith.constant 0 : index
    %171 = vector.load %arg9[%c0_121, %c0_122] : memref<44x1xf32, #tpu.memory_space<vmem>>, vector<44x1xf32>
    %172 = vector.broadcast %171 : vector<44x1xf32> to vector<44x256xf32>
    %173 = arith.addf %170, %172 : vector<44x256xf32>
    %174 = vector.extract_strided_slice %173 {offsets = [0, 0], sizes = [32, 256], strides = [1, 1]} : vector<44x256xf32> to vector<32x256xf32>
    %cst_123 = arith.constant 0.000000e+00 : f32
    %175 = vector.broadcast %cst_123 : f32 to vector<32x256xf32>
    %176 = arith.maximumf %174, %175 : vector<32x256xf32>
    %177 = vector.extract_strided_slice %173 {offsets = [32, 0], sizes = [12, 256], strides = [1, 1]} : vector<44x256xf32> to vector<12x256xf32>
    %c0_124 = arith.constant 0 : index
    %c0_125 = arith.constant 0 : index
    %c0_126 = arith.constant 0 : index
    %178 = vector.load %arg11[%c0_124, %c0_125, %c0_126] : memref<1x32x256xf32, #tpu.memory_space<vmem>>, vector<1x32x256xf32>
    %179 = vector.shape_cast %178 : vector<1x32x256xf32> to vector<32x256xf32>
    %180 = vector.shape_cast %176 : vector<32x256xf32> to vector<1x32x256xf32>
    tpu.vector_store %arg11[%c0_124, %c0_125, %c0_126], %180 {strides = array<i32>} : memref<1x32x256xf32, #tpu.memory_space<vmem>>, vector<1x32x256xf32>,
    %c0_127 = arith.constant 0 : index
    %c0_128 = arith.constant 0 : index
    %c0_129 = arith.constant 0 : index
    %181 = vector.load %arg2[%c0_127, %c0_128, %c0_129] : memref<1x3x256xf32, #tpu.memory_space<vmem>>, vector<1x3x256xf32>
    %182 = vector.shape_cast %181 : vector<1x3x256xf32> to vector<3x256xf32>
    %183 = tpu.concatenate %182, %182, %182, %182 in 0 : vector<3x256xf32>, vector<3x256xf32>, vector<3x256xf32>, vector<3x256xf32> -> vector<12x256xf32>
    %184 = arith.addf %177, %183 : vector<12x256xf32>
    %c0_130 = arith.constant 0 : index
    %c0_131 = arith.constant 0 : index
    %c0_132 = arith.constant 0 : index
    %185 = vector.load %arg10[%c0_130, %c0_131, %c0_132] : memref<1x12x256xf32, #tpu.memory_space<vmem>>, vector<1x12x256xf32>
    %186 = vector.shape_cast %185 : vector<1x12x256xf32> to vector<12x256xf32>
    %187 = vector.shape_cast %184 : vector<12x256xf32> to vector<1x12x256xf32>
    tpu.vector_store %arg10[%c0_130, %c0_131, %c0_132], %187 {strides = array<i32>} : memref<1x12x256xf32, #tpu.memory_space<vmem>>, vector<1x12x256xf32>,
    return
  }
  func.func @transform_0(%arg0: i32) -> (i32, i32, i32) {
    %c0_i32 = arith.constant 0 : i32
    %c0_i32_0 = arith.constant 0 : i32
    %c0_i32_1 = arith.constant 0 : i32
    return %arg0, %c0_i32, %c0_i32_0 : i32, i32, i32
  }
  func.func @transform_1(%arg0: i32) -> (i32, i32, i32) {
    %c0_i32 = arith.constant 0 : i32
    %c0_i32_0 = arith.constant 0 : i32
    %c0_i32_1 = arith.constant 0 : i32
    return %arg0, %c0_i32, %c0_i32_0 : i32, i32, i32
  }
  func.func @transform_2(%arg0: i32) -> (i32, i32) {
    %c0_i32 = arith.constant 0 : i32
    %c0_i32_0 = arith.constant 0 : i32
    %c0_i32_1 = arith.constant 0 : i32
    return %c0_i32, %c0_i32_0 : i32, i32
  }
  func.func @transform_3(%arg0: i32) -> (i32, i32) {
    %c0_i32 = arith.constant 0 : i32
    %c0_i32_0 = arith.constant 0 : i32
    %c0_i32_1 = arith.constant 0 : i32
    return %c0_i32, %c0_i32_0 : i32, i32
  }
  func.func @transform_4(%arg0: i32) -> (i32, i32) {
    %c0_i32 = arith.constant 0 : i32
    %c0_i32_0 = arith.constant 0 : i32
    %c0_i32_1 = arith.constant 0 : i32
    return %c0_i32, %c0_i32_0 : i32, i32
  }
  func.func @transform_5(%arg0: i32) -> (i32, i32) {
    %c0_i32 = arith.constant 0 : i32
    %c0_i32_0 = arith.constant 0 : i32
    %c0_i32_1 = arith.constant 0 : i32
    return %c0_i32, %c0_i32_0 : i32, i32
  }
  func.func @transform_6(%arg0: i32) -> (i32, i32) {
    %c0_i32 = arith.constant 0 : i32
    %c0_i32_0 = arith.constant 0 : i32
    %c0_i32_1 = arith.constant 0 : i32
    return %c0_i32, %c0_i32_0 : i32, i32
  }
  func.func @transform_7(%arg0: i32) -> (i32, i32) {
    %c0_i32 = arith.constant 0 : i32
    %c0_i32_0 = arith.constant 0 : i32
    %c0_i32_1 = arith.constant 0 : i32
    return %c0_i32, %c0_i32_0 : i32, i32
  }
  func.func @transform_8(%arg0: i32) -> (i32, i32) {
    %c0_i32 = arith.constant 0 : i32
    %c0_i32_0 = arith.constant 0 : i32
    %c0_i32_1 = arith.constant 0 : i32
    return %c0_i32, %c0_i32_0 : i32, i32
  }
  func.func @transform_9(%arg0: i32) -> (i32, i32, i32) {
    %c0_i32 = arith.constant 0 : i32
    %c0_i32_0 = arith.constant 0 : i32
    %c0_i32_1 = arith.constant 0 : i32
    return %arg0, %c0_i32, %c0_i32_0 : i32, i32, i32
  }
  func.func @transform_10(%arg0: i32) -> (i32, i32, i32) {
    %c0_i32 = arith.constant 0 : i32
    %c0_i32_0 = arith.constant 0 : i32
    %c0_i32_1 = arith.constant 0 : i32
    return %arg0, %c0_i32, %c0_i32_0 : i32, i32, i32
  }
}

</mosaic_0001>

<llo_original>
// kernel: rslp_cell_forward.1
$region0: #{rslp_cell_forward.1}
  #allocation0 [shape = 'u32[]', space=smem, size = 0x4, offset = 0x4, fixed_abs, tag = 'smem constant byte address 0x4 - core index']
  #allocation1 [shape = 'u32[144,128]{1,0:T(1,128)}', space=vmem, size = 0x12000, scoped, tag = 'internal scratch']
  #allocation2 [shape = 'bf16[576,256]{1,0:T(8,128)(2,1)}', space=vmem, size = 0x48000, scoped, tag = 'scratch operand']
  %s0 = inlined_call_operand.vmem [shape: f32[2,64,256], index: 0, kind: input, shape index: {}]
  %s1 = inlined_call_operand.vmem [shape: f32[2,3,256], index: 1, kind: input, shape index: {}]
  %s2 = inlined_call_operand.vmem [shape: f32[9,256], index: 2, kind: input, shape index: {}]
  %s3 = inlined_call_operand.vmem [shape: bf16[32,576], index: 3, kind: input, shape index: {}]
  %s4 = inlined_call_operand.vmem [shape: f32[32,1], index: 4, kind: input, shape index: {}]
  %s5 = inlined_call_operand.vmem [shape: bf16[32,288], index: 5, kind: input, shape index: {}]
  %s6 = inlined_call_operand.vmem [shape: f32[32,1], index: 6, kind: input, shape index: {}]
  %s7 = inlined_call_operand.vmem [shape: bf16[44,288], index: 7, kind: input, shape index: {}]
  %s8 = inlined_call_operand.vmem [shape: f32[44,1], index: 8, kind: input, shape index: {}]
  %s9 = inlined_call_operand.vmem [shape: f32[2,12,256], index: 9, kind: output, shape index: {0}]
  %s10 = inlined_call_operand.vmem [shape: f32[2,32,256], index: 10, kind: output, shape index: {1}]
  %11 = xla_tuple %s9, %s10
  %s12 = sld [smem:[#allocation0]]
  $region77: #{rslp_cell_forward.1} parent=0
    _
  %s14 = ssub.s32 1, %s12
  %s15 = scalar_select 0, %s14, %s12
  loop: start=0, step=1, limit=4
  $region2: #{rslp_cell_forward.1} parent=0 // loop_pre_header
    _
  $region3: #{rslp_cell_forward.1} parent=0 // loop_header
    %s17 = sphi 0, %s21
    %p18 = scmp.ge.s32.totalorder %s17, 4
    %s27 = sphi 0, %s29
    %s30 = sphi 0, %s27
    %s31 = sphi 0, %s30
    %s47 = sphi 0, %s31
    %s53 = sphi 0, %s55
    %s56 = sphi 0, %s53
    %s57 = sphi 0, %s56
    %s73 = sphi 0, %s57
    %s77 = sphi 0, %s77
    %s79 = sphi 0, %s77
    %s80 = sphi 0, %s79
    %s94 = sphi 0, %s80
    %s98 = sphi 0, %s98
    %s100 = sphi 0, %s98
    %s101 = sphi 0, %s100
    %s115 = sphi 0, %s101
    %s119 = sphi 0, %s119
    %s121 = sphi 0, %s119
    %s122 = sphi 0, %s121
    %s136 = sphi 0, %s122
    %s140 = sphi 0, %s140
    %s142 = sphi 0, %s140
    %s143 = sphi 0, %s142
    %s157 = sphi 0, %s143
    %s161 = sphi 0, %s161
    %s163 = sphi 0, %s161
    %s164 = sphi 0, %s163
    %s178 = sphi 0, %s164
    %s182 = sphi 0, %s182
    %s184 = sphi 0, %s182
    %s185 = sphi 0, %s184
    %s199 = sphi 0, %s185
    %s203 = sphi 0, %s203
    %s205 = sphi 0, %s203
    %s206 = sphi 0, %s205
    %s220 = sphi 0, %s206
    %s226 = sphi 0, %s228
    %s229 = sphi 0, %s226
    %s230 = sphi 0, %s229
    %s246 = sphi 0, %s230
    %s252 = sphi 0, %s254
    %s255 = sphi 0, %s252
    %s256 = sphi 0, %s255
    %s272 = sphi 0, %s256
  $region4: #{rslp_cell_forward.1} parent=0 // loop_header_branch
    %20 = sbr.rel (%p18) target = $region8
  $region5: #{rslp_cell_forward.1} parent=0 // loop_body
    %s22 = ssub.s32 %s17, 1
    %s23 = ssub.s32 %s17, 2
    %s24 = sadd.s32 %s17, 1
    %s25 = ssub.s32 %s17, %s24
    %p26 = scmp.eq.s32.totalorder %s25, 0
    %s28 = sadd.s32 %s27, 1
    %s29 = scalar_select %p26, %s27, %s28
    %p32 = pneg %p26
    %p33 = scmp.eq.s32.totalorder %s17, 1
    %p34 = por %p32, %p33
    %p35 = scmp.ne.s32.totalorder %s27, %s30
    %p36 = scmp.eq.s32.totalorder %s17, 0
    %p37 = por %p35, %p36
    %p38 = scmp.ne.s32.totalorder %s27, %s30
    %p39 = scmp.eq.s32.totalorder %s22, 1
    %p40 = por %p38, %p39
    %p41 = scmp.ne.s32.totalorder %s30, %s31
    %p42 = scmp.eq.s32.totalorder %s22, 0
    %p43 = por %p41, %p42
    %p44 = scmp.ne.s32.totalorder %s30, %s31
    %p45 = scmp.eq.s32.totalorder %s23, 1
    %p46 = por %p44, %p45
    %p48 = scmp.ne.s32.totalorder %s31, %s47
    %p49 = scmp.eq.s32.totalorder %s23, 0
    %p50 = por %p48, %p49
    %s51 = ssub.s32 %s17, %s24
    %p52 = scmp.eq.s32.totalorder %s51, 0
    %s54 = sadd.s32 %s53, 1
    %s55 = scalar_select %p52, %s53, %s54
    %p58 = pneg %p52
    %p59 = scmp.eq.s32.totalorder %s17, 1
    %p60 = por %p58, %p59
    %p61 = scmp.ne.s32.totalorder %s53, %s56
    %p62 = scmp.eq.s32.totalorder %s17, 0
    %p63 = por %p61, %p62
    %p64 = scmp.ne.s32.totalorder %s53, %s56
    %p65 = scmp.eq.s32.totalorder %s22, 1
    %p66 = por %p64, %p65
    %p67 = scmp.ne.s32.totalorder %s56, %s57
    %p68 = scmp.eq.s32.totalorder %s22, 0
    %p69 = por %p67, %p68
    %p70 = scmp.ne.s32.totalorder %s56, %s57
    %p71 = scmp.eq.s32.totalorder %s23, 1
    %p72 = por %p70, %p71
    %p74 = scmp.ne.s32.totalorder %s57, %s73
    %p75 = scmp.eq.s32.totalorder %s23, 0
    %p76 = por %p74, %p75
    %s78 = sadd.s32 %s77, 1
    %p81 = scmp.eq.s32.totalorder %s17, 1
    %p82 = scmp.ne.s32.totalorder %s77, %s79
    %p83 = scmp.eq.s32.totalorder %s17, 0
    %p84 = por %p82, %p83
    %p85 = scmp.ne.s32.totalorder %s77, %s79
    %p86 = scmp.eq.s32.totalorder %s22, 1
    %p87 = por %p85, %p86
    %p88 = scmp.ne.s32.totalorder %s79, %s80
    %p89 = scmp.eq.s32.totalorder %s22, 0
    %p90 = por %p88, %p89
    %p91 = scmp.ne.s32.totalorder %s79, %s80
    %p92 = scmp.eq.s32.totalorder %s23, 1
    %p93 = por %p91, %p92
    %p95 = scmp.ne.s32.totalorder %s80, %s94
    %p96 = scmp.eq.s32.totalorder %s23, 0
    %p97 = por %p95, %p96
    %s99 = sadd.s32 %s98, 1
    %p102 = scmp.eq.s32.totalorder %s17, 1
    %p103 = scmp.ne.s32.totalorder %s98, %s100
    %p104 = scmp.eq.s32.totalorder %s17, 0
    %p105 = por %p103, %p104
    %p106 = scmp.ne.s32.totalorder %s98, %s100
    %p107 = scmp.eq.s32.totalorder %s22, 1
    %p108 = por %p106, %p107
    %p109 = scmp.ne.s32.totalorder %s100, %s101
    %p110 = scmp.eq.s32.totalorder %s22, 0
    %p111 = por %p109, %p110
    %p112 = scmp.ne.s32.totalorder %s100, %s101
    %p113 = scmp.eq.s32.totalorder %s23, 1
    %p114 = por %p112, %p113
    %p116 = scmp.ne.s32.totalorder %s101, %s115
    %p117 = scmp.eq.s32.totalorder %s23, 0
    %p118 = por %p116, %p117
    %s120 = sadd.s32 %s119, 1
    %p123 = scmp.eq.s32.totalorder %s17, 1
    %p124 = scmp.ne.s32.totalorder %s119, %s121
    %p125 = scmp.eq.s32.totalorder %s17, 0
    %p126 = por %p124, %p125
    %p127 = scmp.ne.s32.totalorder %s119, %s121
    %p128 = scmp.eq.s32.totalorder %s22, 1
    %p129 = por %p127, %p128
    %p130 = scmp.ne.s32.totalorder %s121, %s122
    %p131 = scmp.eq.s32.totalorder %s22, 0
    %p132 = por %p130, %p131
    %p133 = scmp.ne.s32.totalorder %s121, %s122
    %p134 = scmp.eq.s32.totalorder %s23, 1
    %p135 = por %p133, %p134
    %p137 = scmp.ne.s32.totalorder %s122, %s136
    %p138 = scmp.eq.s32.totalorder %s23, 0
    %p139 = por %p137, %p138
    %s141 = sadd.s32 %s140, 1
    %p144 = scmp.eq.s32.totalorder %s17, 1
    %p145 = scmp.ne.s32.totalorder %s140, %s142
    %p146 = scmp.eq.s32.totalorder %s17, 0
    %p147 = por %p145, %p146
    %p148 = scmp.ne.s32.totalorder %s140, %s142
    %p149 = scmp.eq.s32.totalorder %s22, 1
    %p150 = por %p148, %p149
    %p151 = scmp.ne.s32.totalorder %s142, %s143
    %p152 = scmp.eq.s32.totalorder %s22, 0
    %p153 = por %p151, %p152
    %p154 = scmp.ne.s32.totalorder %s142, %s143
    %p155 = scmp.eq.s32.totalorder %s23, 1
    %p156 = por %p154, %p155
    %p158 = scmp.ne.s32.totalorder %s143, %s157
    %p159 = scmp.eq.s32.totalorder %s23, 0
    %p160 = por %p158, %p159
    %s162 = sadd.s32 %s161, 1
    %p165 = scmp.eq.s32.totalorder %s17, 1
    %p166 = scmp.ne.s32.totalorder %s161, %s163
    %p167 = scmp.eq.s32.totalorder %s17, 0
    %p168 = por %p166, %p167
    %p169 = scmp.ne.s32.totalorder %s161, %s163
    %p170 = scmp.eq.s32.totalorder %s22, 1
    %p171 = por %p169, %p170
    %p172 = scmp.ne.s32.totalorder %s163, %s164
    %p173 = scmp.eq.s32.totalorder %s22, 0
    %p174 = por %p172, %p173
    %p175 = scmp.ne.s32.totalorder %s163, %s164
    %p176 = scmp.eq.s32.totalorder %s23, 1
    %p177 = por %p175, %p176
    %p179 = scmp.ne.s32.totalorder %s164, %s178
    %p180 = scmp.eq.s32.totalorder %s23, 0
    %p181 = por %p179, %p180
    %s183 = sadd.s32 %s182, 1
    %p186 = scmp.eq.s32.totalorder %s17, 1
    %p187 = scmp.ne.s32.totalorder %s182, %s184
    %p188 = scmp.eq.s32.totalorder %s17, 0
    %p189 = por %p187, %p188
    %p190 = scmp.ne.s32.totalorder %s182, %s184
    %p191 = scmp.eq.s32.totalorder %s22, 1
    %p192 = por %p190, %p191
    %p193 = scmp.ne.s32.totalorder %s184, %s185
    %p194 = scmp.eq.s32.totalorder %s22, 0
    %p195 = por %p193, %p194
    %p196 = scmp.ne.s32.totalorder %s184, %s185
    %p197 = scmp.eq.s32.totalorder %s23, 1
    %p198 = por %p196, %p197
    %p200 = scmp.ne.s32.totalorder %s185, %s199
    %p201 = scmp.eq.s32.totalorder %s23, 0
    %p202 = por %p200, %p201
    %s204 = sadd.s32 %s203, 1
    %p207 = scmp.eq.s32.totalorder %s17, 1
    %p208 = scmp.ne.s32.totalorder %s203, %s205
    %p209 = scmp.eq.s32.totalorder %s17, 0
    %p210 = por %p208, %p209
    %p211 = scmp.ne.s32.totalorder %s203, %s205
    %p212 = scmp.eq.s32.totalorder %s22, 1
    %p213 = por %p211, %p212
    %p214 = scmp.ne.s32.totalorder %s205, %s206
    %p215 = scmp.eq.s32.totalorder %s22, 0
    %p216 = por %p214, %p215
    %p217 = scmp.ne.s32.totalorder %s205, %s206
    %p218 = scmp.eq.s32.totalorder %s23, 1
    %p219 = por %p217, %p218
    %p221 = scmp.ne.s32.totalorder %s206, %s220
    %p222 = scmp.eq.s32.totalorder %s23, 0
    %p223 = por %p221, %p222
    %s224 = ssub.s32 %s17, %s24
    %p225 = scmp.eq.s32.totalorder %s224, 0
    %s227 = sadd.s32 %s226, 1
    %s228 = scalar_select %p225, %s226, %s227
    %p231 = pneg %p225
    %p232 = scmp.eq.s32.totalorder %s17, 1
    %p233 = por %p231, %p232
    %p234 = scmp.ne.s32.totalorder %s226, %s229
    %p235 = scmp.eq.s32.totalorder %s17, 0
    %p236 = por %p234, %p235
    %p237 = scmp.ne.s32.totalorder %s226, %s229
    %p238 = scmp.eq.s32.totalorder %s22, 1
    %p239 = por %p237, %p238
    %p240 = scmp.ne.s32.totalorder %s229, %s230
    %p241 = scmp.eq.s32.totalorder %s22, 0
    %p242 = por %p240, %p241
    %p243 = scmp.ne.s32.totalorder %s229, %s230
    %p244 = scmp.eq.s32.totalorder %s23, 1
    %p245 = por %p243, %p244
    %p247 = scmp.ne.s32.totalorder %s230, %s246
    %p248 = scmp.eq.s32.totalorder %s23, 0
    %p249 = por %p247, %p248
    %s250 = ssub.s32 %s17, %s24
    %p251 = scmp.eq.s32.totalorder %s250, 0
    %s253 = sadd.s32 %s252, 1
    %s254 = scalar_select %p251, %s252, %s253
    %p257 = pneg %p251
    %p258 = scmp.eq.s32.totalorder %s17, 1
    %p259 = por %p257, %p258
    %p260 = scmp.ne.s32.totalorder %s252, %s255
    %p261 = scmp.eq.s32.totalorder %s17, 0
    %p262 = por %p260, %p261
    %p263 = scmp.ne.s32.totalorder %s252, %s255
    %p264 = scmp.eq.s32.totalorder %s22, 1
    %p265 = por %p263, %p264
    %p266 = scmp.ne.s32.totalorder %s255, %s256
    %p267 = scmp.eq.s32.totalorder %s22, 0
    %p268 = por %p266, %p267
    %p269 = scmp.ne.s32.totalorder %s255, %s256
    %p270 = scmp.eq.s32.totalorder %s23, 1
    %p271 = por %p269, %p270
    %p273 = scmp.ne.s32.totalorder %s256, %s272
    %p274 = scmp.eq.s32.totalorder %s23, 0
    %p275 = por %p273, %p274
    %p276 = scmp.le.s32.totalorder 1, %s17
    %p277 = scmp.lt.s32.totalorder %s17, 3
    %p278 = pnand %p276, %p277
    %p279 = pneg %p278
    // Predicated region
    $region9: #{rslp_cell_forward.1} parent=5 // pred_check
      _
    $region10: #{rslp_cell_forward.1} parent=5 // pred_check_branch
      %281 = sbr.rel (%p278) target = $region12
    $region11: #{rslp_cell_forward.1} parent=5 // pred_region
      %s282 = ssub.s32 %s17, 1
      // Predicated region
      $region13: #{rslp_cell_forward.1} parent=11 // pred_check
        %p283 = pneg %p90
      $region14: #{rslp_cell_forward.1} parent=11 // pred_check_branch
        %285 = sbr.rel (%p283) target = $region16
      $region15: #{rslp_cell_forward.1} parent=11 // pred_region
        _
      $region16: #{rslp_cell_forward.1} parent=11 // pred_fallthru
        _
      // Predicated region
      $region17: #{rslp_cell_forward.1} parent=11 // pred_check
        %p286 = pneg %p111
      $region18: #{rslp_cell_forward.1} parent=11 // pred_check_branch
        %288 = sbr.rel (%p286) target = $region20
      $region19: #{rslp_cell_forward.1} parent=11 // pred_region
        _
      $region20: #{rslp_cell_forward.1} parent=11 // pred_fallthru
        _
      // Predicated region
      $region21: #{rslp_cell_forward.1} parent=11 // pred_check
        %p289 = pneg %p132
      $region22: #{rslp_cell_forward.1} parent=11 // pred_check_branch
        %291 = sbr.rel (%p289) target = $region24
      $region23: #{rslp_cell_forward.1} parent=11 // pred_region
        _
      $region24: #{rslp_cell_forward.1} parent=11 // pred_fallthru
        _
      // Predicated region
      $region25: #{rslp_cell_forward.1} parent=11 // pred_check
        %p292 = pneg %p153
      $region26: #{rslp_cell_forward.1} parent=11 // pred_check_branch
        %294 = sbr.rel (%p292) target = $region28
      $region27: #{rslp_cell_forward.1} parent=11 // pred_region
        _
      $region28: #{rslp_cell_forward.1} parent=11 // pred_fallthru
        _
      // Predicated region
      $region29: #{rslp_cell_forward.1} parent=11 // pred_check
        %p295 = pneg %p174
      $region30: #{rslp_cell_forward.1} parent=11 // pred_check_branch
        %297 = sbr.rel (%p295) target = $region32
      $region31: #{rslp_cell_forward.1} parent=11 // pred_region
        _
      $region32: #{rslp_cell_forward.1} parent=11 // pred_fallthru
        _
      // Predicated region
      $region33: #{rslp_cell_forward.1} parent=11 // pred_check
        %p298 = pneg %p195
      $region34: #{rslp_cell_forward.1} parent=11 // pred_check_branch
        %300 = sbr.rel (%p298) target = $region36
      $region35: #{rslp_cell_forward.1} parent=11 // pred_region
        _
      $region36: #{rslp_cell_forward.1} parent=11 // pred_fallthru
        _
      // Predicated region
      $region37: #{rslp_cell_forward.1} parent=11 // pred_check
        %p301 = pneg %p216
      $region38: #{rslp_cell_forward.1} parent=11 // pred_check_branch
        %303 = sbr.rel (%p301) target = $region40
      $region39: #{rslp_cell_forward.1} parent=11 // pred_region
        _
      $region40: #{rslp_cell_forward.1} parent=11 // pred_fallthru
        _
    $region12: #{rslp_cell_forward.1} parent=5 // pred_fallthru
      _
    %p304 = scmp.lt.s32.totalorder %s17, 2
    // Predicated region
    $region41: #{rslp_cell_forward.1} parent=5 // pred_check
      %p305 = pneg %p304
    $region42: #{rslp_cell_forward.1} parent=5 // pred_check_branch
      %307 = sbr.rel (%p305) target = $region44
    $region43: #{rslp_cell_forward.1} parent=5 // pred_region
      // Predicated region
      $region45: #{rslp_cell_forward.1} parent=43 // pred_check
        %p308 = pneg %p37
      $region46: #{rslp_cell_forward.1} parent=43 // pred_check_branch
        %310 = sbr.rel (%p308) target = $region48
      $region47: #{rslp_cell_forward.1} parent=43 // pred_region
        %p311 = scmp.lt.s32.totalorder %s17, 1
        %s312 = scalar_select %p311, %s17, 1
        %s313 = smul.addr %s312, 16
        %s314 = smul.addr %s313, 8
        %s315 = scalar_lea.vmem %s0, %s314
      $region48: #{rslp_cell_forward.1} parent=43 // pred_fallthru
        _
      // Predicated region
      $region49: #{rslp_cell_forward.1} parent=43 // pred_check
        %p316 = pneg %p63
      $region50: #{rslp_cell_forward.1} parent=43 // pred_check_branch
        %318 = sbr.rel (%p316) target = $region52
      $region51: #{rslp_cell_forward.1} parent=43 // pred_region
        %p319 = scmp.lt.s32.totalorder %s17, 1
        %s320 = scalar_select %p319, %s17, 1
        %s321 = smul.addr %s320, 2
        %s322 = smul.addr %s321, 4
        %s323 = scalar_lea.vmem %s1, %s322
      $region52: #{rslp_cell_forward.1} parent=43 // pred_fallthru
        _
    $region44: #{rslp_cell_forward.1} parent=5 // pred_fallthru
      _
    %p324 = scmp.le.s32.totalorder 1, %s17
    %p325 = scmp.lt.s32.totalorder %s17, 3
    %p326 = pnand %p324, %p325
    %p327 = pneg %p326
    // Predicated region
    $region53: #{rslp_cell_forward.1} parent=5 // pred_check
      _
    $region54: #{rslp_cell_forward.1} parent=5 // pred_check_branch
      %329 = sbr.rel (%p326) target = $region56
    $region55: #{rslp_cell_forward.1} parent=5 // pred_region
      %s330 = ssub.s32 %s17, 1
      %p331 = scmp.lt.s32.totalorder %s22, 1
      %s332 = scalar_select %p331, %s22, 1
      %s333 = smul.addr %s332, 16
      %s334 = smul.addr %s333, 8
      %s335 = scalar_lea.vmem %s0, %s334
      %p336 = pneg %p43
      %p337 = pneg %p40
      %p338 = scmp.lt.s32.totalorder %s22, 1
      %s339 = scalar_select %p338, %s22, 1
      %s340 = smul.addr %s339, 2
      %s341 = smul.addr %s340, 4
      %s342 = scalar_lea.vmem %s1, %s341
      %p343 = pneg %p69
      %p344 = pneg %p66
      %p345 = pneg %p90
      %p346 = pneg %p87
      %p347 = pneg %p111
      %p348 = pneg %p108
      %p349 = pneg %p132
      %p350 = pneg %p129
      %p351 = pneg %p153
      %p352 = pneg %p150
      %p353 = pneg %p174
      %p354 = pneg %p171
      %p355 = pneg %p195
      %p356 = pneg %p192
      %p357 = pneg %p216
      %p358 = pneg %p213
      %p359 = pneg %p242
      %p360 = pneg %p239
      %p361 = scmp.lt.s32.totalorder %s22, 1
      %s362 = scalar_select %p361, %s22, 1
      %s363 = smul.addr %s362, 4
      %s364 = smul.addr %s363, 8
      %s365 = scalar_lea.vmem %s9, %s364
      %p366 = pneg %p268
      %p367 = pneg %p265
      %p368 = scmp.lt.s32.totalorder %s22, 1
      %s369 = scalar_select %p368, %s22, 1
      %s370 = smul.addr %s369, 8
      %s371 = smul.addr %s370, 8
      %s372 = scalar_lea.vmem %s10, %s371
      %p373 = scmp.lt.s32.totalorder %s22, 1
      %s374 = scalar_select %p373, %s22, 1
      %s375 = smul.addr %s374, 16
      %s376 = smul.addr %s375, 8
      %s377 = scalar_lea.vmem %s0, %s376
      %p378 = scmp.lt.s32.totalorder %s22, 1
      %s379 = scalar_select %p378, %s22, 1
      %s380 = smul.addr %s379, 2
      %s381 = smul.addr %s380, 4
      %s382 = scalar_lea.vmem %s1, %s381
      %p383 = scmp.lt.s32.totalorder %s22, 1
      %s384 = scalar_select %p383, %s22, 1
      %s385 = smul.addr %s384, 4
      %s386 = smul.addr %s385, 8
      %s387 = scalar_lea.vmem %s9, %s386
      %p388 = scmp.lt.s32.totalorder %s22, 1
      %s389 = scalar_select %p388, %s22, 1
      %s390 = smul.addr %s389, 8
      %s391 = smul.addr %s390, 8
      %s392 = scalar_lea.vmem %s10, %s391
      %v394 = vld [vmem:[%s377] sm:$0xff]
      %v395 = vld [vmem:[%s377 + $0x8] sm:$0xff]
      %v396 = vld [vmem:[%s377 + $0x10] sm:$0xff]
      %v397 = vld [vmem:[%s377 + $0x18] sm:$0xff]
      %v398 = vld [vmem:[%s377 + $0x20] sm:$0xff]
      %v399 = vld [vmem:[%s377 + $0x28] sm:$0xff]
      %v400 = vld [vmem:[%s377 + $0x30] sm:$0xff]
      %v401 = vld [vmem:[%s377 + $0x38] sm:$0xff]
      %v402 = vld [vmem:[%s377 + $0x40] sm:$0xff]
      %v403 = vld [vmem:[%s377 + $0x48] sm:$0xff]
      %v404 = vld [vmem:[%s377 + $0x50] sm:$0xff]
      %v405 = vld [vmem:[%s377 + $0x58] sm:$0xff]
      %v406 = vld [vmem:[%s377 + $0x60] sm:$0xff]
      %v407 = vld [vmem:[%s377 + $0x68] sm:$0xff]
      %v408 = vld [vmem:[%s377 + $0x70] sm:$0xff]
      %v409 = vld [vmem:[%s377 + $0x78] sm:$0xff]
      %410 = vrot.lane.b32.xlu0 %v394, 17
      %v411 = vpop.permute.xlu0 %410
      %412 = vrot.lane.b32.xlu0 %v396, 17
      %v413 = vpop.permute.xlu0 %412
      %414 = vrot.lane.b32.xlu0 %v398, 17
      %v415 = vpop.permute.xlu0 %414
      %416 = vrot.lane.b32.xlu0 %v400, 17
      %v417 = vpop.permute.xlu0 %416
      %418 = vrot.lane.b32.xlu0 %v402, 17
      %v419 = vpop.permute.xlu0 %418
      %420 = vrot.lane.b32.xlu0 %v404, 17
      %v421 = vpop.permute.xlu0 %420
      %422 = vrot.lane.b32.xlu0 %v406, 17
      %v423 = vpop.permute.xlu0 %422
      %424 = vrot.lane.b32.xlu0 %v408, 17
      %v425 = vpop.permute.xlu0 %424
      %426 = vrot.lane.b32.xlu0 %v395, 17
      %v427 = vpop.permute.xlu0 %426
      %428 = vrot.lane.b32.xlu0 %v397, 17
      %v429 = vpop.permute.xlu0 %428
      %430 = vrot.lane.b32.xlu0 %v399, 17
      %v431 = vpop.permute.xlu0 %430
      %432 = vrot.lane.b32.xlu0 %v401, 17
      %v433 = vpop.permute.xlu0 %432
      %434 = vrot.lane.b32.xlu0 %v403, 17
      %v435 = vpop.permute.xlu0 %434
      %436 = vrot.lane.b32.xlu0 %v405, 17
      %v437 = vpop.permute.xlu0 %436
      %438 = vrot.lane.b32.xlu0 %v407, 17
      %v439 = vpop.permute.xlu0 %438
      %440 = vrot.lane.b32.xlu0 %v409, 17
      %v441 = vpop.permute.xlu0 %440
      %v442 = vlaneseq
      %v443 = vand.u32 %v442, 127
      %vm444 = vcmp.lt.s32.totalorder %v443, 17
      %v445 = vsel %vm444, %v411, %v427
      %v446 = vsel %vm444, %v413, %v429
      %v447 = vsel %vm444, %v415, %v431
      %v448 = vsel %vm444, %v417, %v433
      %v449 = vsel %vm444, %v419, %v435
      %v450 = vsel %vm444, %v421, %v437
      %v451 = vsel %vm444, %v423, %v439
      %v452 = vsel %vm444, %v425, %v441
      %v453 = vsel %vm444, %v427, %v411
      %v454 = vsel %vm444, %v429, %v413
      %v455 = vsel %vm444, %v431, %v415
      %v456 = vsel %vm444, %v433, %v417
      %v457 = vsel %vm444, %v435, %v419
      %v458 = vsel %vm444, %v437, %v421
      %v459 = vsel %vm444, %v439, %v423
      %v460 = vsel %vm444, %v441, %v425
      %v461 = vld [vmem:[%s2] ss:$8 sm:$0x3]
      %v463 = vlaneseq
      %v464 = vshrl.u32 %v463, 7
      %v465 = vsub.s32 0, %v464
      %v466 = vrot.slane %v461, %v465
      %v467 = vlaneseq
      %v468 = vshrl.u32 %v467, 7
      %v469 = vsub.s32 1, %v468
      %v470 = vrot.slane %v461, %v469
      %v473 = vmul.f32 %v453, %v466
      %v474 = vmul.f32 %v445, %v470
      %v475 = vmul.f32 %v454, %v466
      %v476 = vmul.f32 %v446, %v470
      %v477 = vmul.f32 %v455, %v466
      %v478 = vmul.f32 %v447, %v470
      %v479 = vmul.f32 %v456, %v466
      %v480 = vmul.f32 %v448, %v470
      %v481 = vmul.f32 %v457, %v466
      %v482 = vmul.f32 %v449, %v470
      %v483 = vmul.f32 %v458, %v466
      %v484 = vmul.f32 %v450, %v470
      %v485 = vmul.f32 %v459, %v466
      %v486 = vmul.f32 %v451, %v470
      %v487 = vmul.f32 %v460, %v466
      %v488 = vmul.f32 %v452, %v470
      %v489 = vpack.c.bf16 %v475, %v473
      %v490 = vpack.c.bf16 %v476, %v474
      %v491 = vpack.c.bf16 %v479, %v477
      %v492 = vpack.c.bf16 %v480, %v478
      %v493 = vpack.c.bf16 %v483, %v481
      %v494 = vpack.c.bf16 %v484, %v482
      %v495 = vpack.c.bf16 %v487, %v485
      %v496 = vpack.c.bf16 %v488, %v486
      %v505 = vunpack.c.l.b16 %v489
      %v506 = vunpack.c.l.b16 %v490
      %v507 = vunpack.c.h.b16 %v489
      %v508 = vunpack.c.h.b16 %v490
      %v509 = vunpack.c.l.b16 %v491
      %v510 = vunpack.c.l.b16 %v492
      %v511 = vunpack.c.h.b16 %v491
      %v512 = vunpack.c.h.b16 %v492
      %v513 = vunpack.c.l.b16 %v493
      %v514 = vunpack.c.l.b16 %v494
      %v515 = vunpack.c.h.b16 %v493
      %v516 = vunpack.c.h.b16 %v494
      %v517 = vunpack.c.l.b16 %v495
      %v518 = vunpack.c.l.b16 %v496
      %v519 = vunpack.c.h.b16 %v495
      %v520 = vunpack.c.h.b16 %v496
      %v521 = vpack.c.b16 %v506, %v505
      %v522 = vpack.c.b16 %v508, %v507
      %v523 = vpack.c.b16 %v510, %v509
      %v524 = vpack.c.b16 %v512, %v511
      %v525 = vpack.c.b16 %v514, %v513
      %v526 = vpack.c.b16 %v516, %v515
      %v527 = vpack.c.b16 %v518, %v517
      %v528 = vpack.c.b16 %v520, %v519
      %537 = vst [vmem:[#allocation2] sm:$0xff] %v521
      %538 = vst [vmem:[#allocation2 + $0x8] sm:$0xff] %v522
      %539 = vst [vmem:[#allocation2 + $0x10] sm:$0xff] %v523
      %540 = vst [vmem:[#allocation2 + $0x18] sm:$0xff] %v524
      %541 = vst [vmem:[#allocation2 + $0x20] sm:$0xff] %v525
      %542 = vst [vmem:[#allocation2 + $0x28] sm:$0xff] %v526
      %543 = vst [vmem:[#allocation2 + $0x30] sm:$0xff] %v527
      %544 = vst [vmem:[#allocation2 + $0x38] sm:$0xff] %v528
      %545 = vrot.lane.b32.xlu0 %v394, 16
      %v546 = vpop.permute.xlu0 %545
      %547 = vrot.lane.b32.xlu0 %v396, 16
      %v548 = vpop.permute.xlu0 %547
      %549 = vrot.lane.b32.xlu0 %v398, 16
      %v550 = vpop.permute.xlu0 %549
      %551 = vrot.lane.b32.xlu0 %v400, 16
      %v552 = vpop.permute.xlu0 %551
      %553 = vrot.lane.b32.xlu0 %v402, 16
      %v554 = vpop.permute.xlu0 %553
      %555 = vrot.lane.b32.xlu0 %v404, 16
      %v556 = vpop.permute.xlu0 %555
      %557 = vrot.lane.b32.xlu0 %v406, 16
      %v558 = vpop.permute.xlu0 %557
      %559 = vrot.lane.b32.xlu0 %v408, 16
      %v560 = vpop.permute.xlu0 %559
      %561 = vrot.lane.b32.xlu0 %v395, 16
      %v562 = vpop.permute.xlu0 %561
      %563 = vrot.lane.b32.xlu0 %v397, 16
      %v564 = vpop.permute.xlu0 %563
      %565 = vrot.lane.b32.xlu0 %v399, 16
      %v566 = vpop.permute.xlu0 %565
      %567 = vrot.lane.b32.xlu0 %v401, 16
      %v568 = vpop.permute.xlu0 %567
      %569 = vrot.lane.b32.xlu0 %v403, 16
      %v570 = vpop.permute.xlu0 %569
      %571 = vrot.lane.b32.xlu0 %v405, 16
      %v572 = vpop.permute.xlu0 %571
      %573 = vrot.lane.b32.xlu0 %v407, 16
      %v574 = vpop.permute.xlu0 %573
      %575 = vrot.lane.b32.xlu0 %v409, 16
      %v576 = vpop.permute.xlu0 %575
      %vm577 = vcmp.lt.s32.totalorder %v443, 16
      %v578 = vsel %vm577, %v546, %v562
      %v579 = vsel %vm577, %v548, %v564
      %v580 = vsel %vm577, %v550, %v566
      %v581 = vsel %vm577, %v552, %v568
      %v582 = vsel %vm577, %v554, %v570
      %v583 = vsel %vm577, %v556, %v572
      %v584 = vsel %vm577, %v558, %v574
      %v585 = vsel %vm577, %v560, %v576
      %v586 = vsel %vm577, %v562, %v546
      %v587 = vsel %vm577, %v564, %v548
      %v588 = vsel %vm577, %v566, %v550
      %v589 = vsel %vm577, %v568, %v552
      %v590 = vsel %vm577, %v570, %v554
      %v591 = vsel %vm577, %v572, %v556
      %v592 = vsel %vm577, %v574, %v558
      %v593 = vsel %vm577, %v576, %v560
      %s594 = scalar_lea.vmem %s2, 1
      %v595 = vld [vmem:[%s594] ss:$8 sm:$0x3]
      %v597 = vlaneseq
      %v598 = vshrl.u32 %v597, 7
      %v599 = vsub.s32 0, %v598
      %v600 = vrot.slane %v595, %v599
      %v601 = vlaneseq
      %v602 = vshrl.u32 %v601, 7
      %v603 = vsub.s32 1, %v602
      %v604 = vrot.slane %v595, %v603
      %v607 = vmul.f32 %v586, %v600
      %v608 = vmul.f32 %v578, %v604
      %v609 = vmul.f32 %v587, %v600
      %v610 = vmul.f32 %v579, %v604
      %v611 = vmul.f32 %v588, %v600
      %v612 = vmul.f32 %v580, %v604
      %v613 = vmul.f32 %v589, %v600
      %v614 = vmul.f32 %v581, %v604
      %v615 = vmul.f32 %v590, %v600
      %v616 = vmul.f32 %v582, %v604
      %v617 = vmul.f32 %v591, %v600
      %v618 = vmul.f32 %v583, %v604
      %v619 = vmul.f32 %v592, %v600
      %v620 = vmul.f32 %v584, %v604
      %v621 = vmul.f32 %v593, %v600
      %v622 = vmul.f32 %v585, %v604
      %v623 = vpack.c.bf16 %v609, %v607
      %v624 = vpack.c.bf16 %v610, %v608
      %v625 = vpack.c.bf16 %v613, %v611
      %v626 = vpack.c.bf16 %v614, %v612
      %v627 = vpack.c.bf16 %v617, %v615
      %v628 = vpack.c.bf16 %v618, %v616
      %v629 = vpack.c.bf16 %v621, %v619
      %v630 = vpack.c.bf16 %v622, %v620
      %v639 = vunpack.c.l.b16 %v623
      %v640 = vunpack.c.l.b16 %v624
      %v641 = vunpack.c.h.b16 %v623
      %v642 = vunpack.c.h.b16 %v624
      %v643 = vunpack.c.l.b16 %v625
      %v644 = vunpack.c.l.b16 %v626
      %v645 = vunpack.c.h.b16 %v625
      %v646 = vunpack.c.h.b16 %v626
      %v647 = vunpack.c.l.b16 %v627
      %v648 = vunpack.c.l.b16 %v628
      %v649 = vunpack.c.h.b16 %v627
      %v650 = vunpack.c.h.b16 %v628
      %v651 = vunpack.c.l.b16 %v629
      %v652 = vunpack.c.l.b16 %v630
      %v653 = vunpack.c.h.b16 %v629
      %v654 = vunpack.c.h.b16 %v630
      %v655 = vpack.c.b16 %v640, %v639
      %v656 = vpack.c.b16 %v642, %v641
      %v657 = vpack.c.b16 %v644, %v643
      %v658 = vpack.c.b16 %v646, %v645
      %v659 = vpack.c.b16 %v648, %v647
      %v660 = vpack.c.b16 %v650, %v649
      %v661 = vpack.c.b16 %v652, %v651
      %v662 = vpack.c.b16 %v654, %v653
      %671 = vst [vmem:[#allocation2 + $0x40] sm:$0xff] %v655
      %672 = vst [vmem:[#allocation2 + $0x48] sm:$0xff] %v656
      %673 = vst [vmem:[#allocation2 + $0x50] sm:$0xff] %v657
      %674 = vst [vmem:[#allocation2 + $0x58] sm:$0xff] %v658
      %675 = vst [vmem:[#allocation2 + $0x60] sm:$0xff] %v659
      %676 = vst [vmem:[#allocation2 + $0x68] sm:$0xff] %v660
      %677 = vst [vmem:[#allocation2 + $0x70] sm:$0xff] %v661
      %678 = vst [vmem:[#allocation2 + $0x78] sm:$0xff] %v662
      %679 = vrot.lane.b32.xlu0 %v394, 15
      %v680 = vpop.permute.xlu0 %679
      %681 = vrot.lane.b32.xlu0 %v396, 15
      %v682 = vpop.permute.xlu0 %681
      %683 = vrot.lane.b32.xlu0 %v398, 15
      %v684 = vpop.permute.xlu0 %683
      %685 = vrot.lane.b32.xlu0 %v400, 15
      %v686 = vpop.permute.xlu0 %685
      %687 = vrot.lane.b32.xlu0 %v402, 15
      %v688 = vpop.permute.xlu0 %687
      %689 = vrot.lane.b32.xlu0 %v404, 15
      %v690 = vpop.permute.xlu0 %689
      %691 = vrot.lane.b32.xlu0 %v406, 15
      %v692 = vpop.permute.xlu0 %691
      %693 = vrot.lane.b32.xlu0 %v408, 15
      %v694 = vpop.permute.xlu0 %693
      %695 = vrot.lane.b32.xlu0 %v395, 15
      %v696 = vpop.permute.xlu0 %695
      %697 = vrot.lane.b32.xlu0 %v397, 15
      %v698 = vpop.permute.xlu0 %697
      %699 = vrot.lane.b32.xlu0 %v399, 15
      %v700 = vpop.permute.xlu0 %699
      %701 = vrot.lane.b32.xlu0 %v401, 15
      %v702 = vpop.permute.xlu0 %701
      %703 = vrot.lane.b32.xlu0 %v403, 15
      %v704 = vpop.permute.xlu0 %703
      %705 = vrot.lane.b32.xlu0 %v405, 15
      %v706 = vpop.permute.xlu0 %705
      %707 = vrot.lane.b32.xlu0 %v407, 15
      %v708 = vpop.permute.xlu0 %707
      %709 = vrot.lane.b32.xlu0 %v409, 15
      %v710 = vpop.permute.xlu0 %709
      %vm711 = vcmp.lt.s32.totalorder %v443, 15
      %v712 = vsel %vm711, %v680, %v696
      %v713 = vsel %vm711, %v682, %v698
      %v714 = vsel %vm711, %v684, %v700
      %v715 = vsel %vm711, %v686, %v702
      %v716 = vsel %vm711, %v688, %v704
      %v717 = vsel %vm711, %v690, %v706
      %v718 = vsel %vm711, %v692, %v708
      %v719 = vsel %vm711, %v694, %v710
      %v720 = vsel %vm711, %v696, %v680
      %v721 = vsel %vm711, %v698, %v682
      %v722 = vsel %vm711, %v700, %v684
      %v723 = vsel %vm711, %v702, %v686
      %v724 = vsel %vm711, %v704, %v688
      %v725 = vsel %vm711, %v706, %v690
      %v726 = vsel %vm711, %v708, %v692
      %v727 = vsel %vm711, %v710, %v694
      %s728 = scalar_lea.vmem %s2, 2
      %v729 = vld [vmem:[%s728] ss:$8 sm:$0x3]
      %v731 = vlaneseq
      %v732 = vshrl.u32 %v731, 7
      %v733 = vsub.s32 0, %v732
      %v734 = vrot.slane %v729, %v733
      %v735 = vlaneseq
      %v736 = vshrl.u32 %v735, 7
      %v737 = vsub.s32 1, %v736
      %v738 = vrot.slane %v729, %v737
      %v741 = vmul.f32 %v720, %v734
      %v742 = vmul.f32 %v712, %v738
      %v743 = vmul.f32 %v721, %v734
      %v744 = vmul.f32 %v713, %v738
      %v745 = vmul.f32 %v722, %v734
      %v746 = vmul.f32 %v714, %v738
      %v747 = vmul.f32 %v723, %v734
      %v748 = vmul.f32 %v715, %v738
      %v749 = vmul.f32 %v724, %v734
      %v750 = vmul.f32 %v716, %v738
      %v751 = vmul.f32 %v725, %v734
      %v752 = vmul.f32 %v717, %v738
      %v753 = vmul.f32 %v726, %v734
      %v754 = vmul.f32 %v718, %v738
      %v755 = vmul.f32 %v727, %v734
      %v756 = vmul.f32 %v719, %v738
      %v757 = vpack.c.bf16 %v743, %v741
      %v758 = vpack.c.bf16 %v744, %v742
      %v759 = vpack.c.bf16 %v747, %v745
      %v760 = vpack.c.bf16 %v748, %v746
      %v761 = vpack.c.bf16 %v751, %v749
      %v762 = vpack.c.bf16 %v752, %v750
      %v763 = vpack.c.bf16 %v755, %v753
      %v764 = vpack.c.bf16 %v756, %v754
      %v773 = vunpack.c.l.b16 %v757
      %v774 = vunpack.c.l.b16 %v758
      %v775 = vunpack.c.h.b16 %v757
      %v776 = vunpack.c.h.b16 %v758
      %v777 = vunpack.c.l.b16 %v759
      %v778 = vunpack.c.l.b16 %v760
      %v779 = vunpack.c.h.b16 %v759
      %v780 = vunpack.c.h.b16 %v760
      %v781 = vunpack.c.l.b16 %v761
      %v782 = vunpack.c.l.b16 %v762
      %v783 = vunpack.c.h.b16 %v761
      %v784 = vunpack.c.h.b16 %v762
      %v785 = vunpack.c.l.b16 %v763
      %v786 = vunpack.c.l.b16 %v764
      %v787 = vunpack.c.h.b16 %v763
      %v788 = vunpack.c.h.b16 %v764
      %v789 = vpack.c.b16 %v774, %v773
      %v790 = vpack.c.b16 %v776, %v775
      %v791 = vpack.c.b16 %v778, %v777
      %v792 = vpack.c.b16 %v780, %v779
      %v793 = vpack.c.b16 %v782, %v781
      %v794 = vpack.c.b16 %v784, %v783
      %v795 = vpack.c.b16 %v786, %v785
      %v796 = vpack.c.b16 %v788, %v787
      %805 = vst [vmem:[#allocation2 + $0x80] sm:$0xff] %v789
      %806 = vst [vmem:[#allocation2 + $0x88] sm:$0xff] %v790
      %807 = vst [vmem:[#allocation2 + $0x90] sm:$0xff] %v791
      %808 = vst [vmem:[#allocation2 + $0x98] sm:$0xff] %v792
      %809 = vst [vmem:[#allocation2 + $0xa0] sm:$0xff] %v793
      %810 = vst [vmem:[#allocation2 + $0xa8] sm:$0xff] %v794
      %811 = vst [vmem:[#allocation2 + $0xb0] sm:$0xff] %v795
      %812 = vst [vmem:[#allocation2 + $0xb8] sm:$0xff] %v796
      %813 = vrot.lane.b32.xlu0 %v394, 1
      %v814 = vpop.permute.xlu0 %813
      %815 = vrot.lane.b32.xlu0 %v396, 1
      %v816 = vpop.permute.xlu0 %815
      %817 = vrot.lane.b32.xlu0 %v398, 1
      %v818 = vpop.permute.xlu0 %817
      %819 = vrot.lane.b32.xlu0 %v400, 1
      %v820 = vpop.permute.xlu0 %819
      %821 = vrot.lane.b32.xlu0 %v402, 1
      %v822 = vpop.permute.xlu0 %821
      %823 = vrot.lane.b32.xlu0 %v404, 1
      %v824 = vpop.permute.xlu0 %823
      %825 = vrot.lane.b32.xlu0 %v406, 1
      %v826 = vpop.permute.xlu0 %825
      %827 = vrot.lane.b32.xlu0 %v408, 1
      %v828 = vpop.permute.xlu0 %827
      %829 = vrot.lane.b32.xlu0 %v395, 1
      %v830 = vpop.permute.xlu0 %829
      %831 = vrot.lane.b32.xlu0 %v397, 1
      %v832 = vpop.permute.xlu0 %831
      %833 = vrot.lane.b32.xlu0 %v399, 1
      %v834 = vpop.permute.xlu0 %833
      %835 = vrot.lane.b32.xlu0 %v401, 1
      %v836 = vpop.permute.xlu0 %835
      %837 = vrot.lane.b32.xlu0 %v403, 1
      %v838 = vpop.permute.xlu0 %837
      %839 = vrot.lane.b32.xlu0 %v405, 1
      %v840 = vpop.permute.xlu0 %839
      %841 = vrot.lane.b32.xlu0 %v407, 1
      %v842 = vpop.permute.xlu0 %841
      %843 = vrot.lane.b32.xlu0 %v409, 1
      %v844 = vpop.permute.xlu0 %843
      %vm845 = vcmp.lt.s32.totalorder %v443, 1
      %v846 = vsel %vm845, %v814, %v830
      %v847 = vsel %vm845, %v816, %v832
      %v848 = vsel %vm845, %v818, %v834
      %v849 = vsel %vm845, %v820, %v836
      %v850 = vsel %vm845, %v822, %v838
      %v851 = vsel %vm845, %v824, %v840
      %v852 = vsel %vm845, %v826, %v842
      %v853 = vsel %vm845, %v828, %v844
      %v854 = vsel %vm845, %v830, %v814
      %v855 = vsel %vm845, %v832, %v816
      %v856 = vsel %vm845, %v834, %v818
      %v857 = vsel %vm845, %v836, %v820
      %v858 = vsel %vm845, %v838, %v822
      %v859 = vsel %vm845, %v840, %v824
      %v860 = vsel %vm845, %v842, %v826
      %v861 = vsel %vm845, %v844, %v828
      %s862 = scalar_lea.vmem %s2, 3
      %v863 = vld [vmem:[%s862] ss:$8 sm:$0x3]
      %v865 = vlaneseq
      %v866 = vshrl.u32 %v865, 7
      %v867 = vsub.s32 0, %v866
      %v868 = vrot.slane %v863, %v867
      %v869 = vlaneseq
      %v870 = vshrl.u32 %v869, 7
      %v871 = vsub.s32 1, %v870
      %v872 = vrot.slane %v863, %v871
      %v875 = vmul.f32 %v854, %v868
      %v876 = vmul.f32 %v846, %v872
      %v877 = vmul.f32 %v855, %v868
      %v878 = vmul.f32 %v847, %v872
      %v879 = vmul.f32 %v856, %v868
      %v880 = vmul.f32 %v848, %v872
      %v881 = vmul.f32 %v857, %v868
      %v882 = vmul.f32 %v849, %v872
      %v883 = vmul.f32 %v858, %v868
      %v884 = vmul.f32 %v850, %v872
      %v885 = vmul.f32 %v859, %v868
      %v886 = vmul.f32 %v851, %v872
      %v887 = vmul.f32 %v860, %v868
      %v888 = vmul.f32 %v852, %v872
      %v889 = vmul.f32 %v861, %v868
      %v890 = vmul.f32 %v853, %v872
      %v891 = vpack.c.bf16 %v877, %v875
      %v892 = vpack.c.bf16 %v878, %v876
      %v893 = vpack.c.bf16 %v881, %v879
      %v894 = vpack.c.bf16 %v882, %v880
      %v895 = vpack.c.bf16 %v885, %v883
      %v896 = vpack.c.bf16 %v886, %v884
      %v897 = vpack.c.bf16 %v889, %v887
      %v898 = vpack.c.bf16 %v890, %v888
      %v907 = vunpack.c.l.b16 %v891
      %v908 = vunpack.c.l.b16 %v892
      %v909 = vunpack.c.h.b16 %v891
      %v910 = vunpack.c.h.b16 %v892
      %v911 = vunpack.c.l.b16 %v893
      %v912 = vunpack.c.l.b16 %v894
      %v913 = vunpack.c.h.b16 %v893
      %v914 = vunpack.c.h.b16 %v894
      %v915 = vunpack.c.l.b16 %v895
      %v916 = vunpack.c.l.b16 %v896
      %v917 = vunpack.c.h.b16 %v895
      %v918 = vunpack.c.h.b16 %v896
      %v919 = vunpack.c.l.b16 %v897
      %v920 = vunpack.c.l.b16 %v898
      %v921 = vunpack.c.h.b16 %v897
      %v922 = vunpack.c.h.b16 %v898
      %v923 = vpack.c.b16 %v908, %v907
      %v924 = vpack.c.b16 %v910, %v909
      %v925 = vpack.c.b16 %v912, %v911
      %v926 = vpack.c.b16 %v914, %v913
      %v927 = vpack.c.b16 %v916, %v915
      %v928 = vpack.c.b16 %v918, %v917
      %v929 = vpack.c.b16 %v920, %v919
      %v930 = vpack.c.b16 %v922, %v921
      %939 = vst [vmem:[#allocation2 + $0xc0] sm:$0xff] %v923
      %940 = vst [vmem:[#allocation2 + $0xc8] sm:$0xff] %v924
      %941 = vst [vmem:[#allocation2 + $0xd0] sm:$0xff] %v925
      %942 = vst [vmem:[#allocation2 + $0xd8] sm:$0xff] %v926
      %943 = vst [vmem:[#allocation2 + $0xe0] sm:$0xff] %v927
      %944 = vst [vmem:[#allocation2 + $0xe8] sm:$0xff] %v928
      %945 = vst [vmem:[#allocation2 + $0xf0] sm:$0xff] %v929
      %946 = vst [vmem:[#allocation2 + $0xf8] sm:$0xff] %v930
      %v947 = vpack.c.bf16 %v396, %v394
      %v948 = vpack.c.bf16 %v397, %v395
      %v949 = vpack.c.bf16 %v400, %v398
      %v950 = vpack.c.bf16 %v401, %v399
      %v951 = vpack.c.bf16 %v404, %v402
      %v952 = vpack.c.bf16 %v405, %v403
      %v953 = vpack.c.bf16 %v408, %v406
      %v954 = vpack.c.bf16 %v409, %v407
      %v963 = vunpack.c.l.b16 %v947
      %v964 = vunpack.c.l.b16 %v948
      %v965 = vunpack.c.h.b16 %v947
      %v966 = vunpack.c.h.b16 %v948
      %v967 = vunpack.c.l.b16 %v949
      %v968 = vunpack.c.l.b16 %v950
      %v969 = vunpack.c.h.b16 %v949
      %v970 = vunpack.c.h.b16 %v950
      %v971 = vunpack.c.l.b16 %v951
      %v972 = vunpack.c.l.b16 %v952
      %v973 = vunpack.c.h.b16 %v951
      %v974 = vunpack.c.h.b16 %v952
      %v975 = vunpack.c.l.b16 %v953
      %v976 = vunpack.c.l.b16 %v954
      %v977 = vunpack.c.h.b16 %v953
      %v978 = vunpack.c.h.b16 %v954
      %v979 = vpack.c.b16 %v964, %v963
      %v980 = vpack.c.b16 %v966, %v965
      %v981 = vpack.c.b16 %v968, %v967
      %v982 = vpack.c.b16 %v970, %v969
      %v983 = vpack.c.b16 %v972, %v971
      %v984 = vpack.c.b16 %v974, %v973
      %v985 = vpack.c.b16 %v976, %v975
      %v986 = vpack.c.b16 %v978, %v977
      %995 = vst [vmem:[#allocation2 + $0x100] sm:$0xff] %v979
      %996 = vst [vmem:[#allocation2 + $0x108] sm:$0xff] %v980
      %997 = vst [vmem:[#allocation2 + $0x110] sm:$0xff] %v981
      %998 = vst [vmem:[#allocation2 + $0x118] sm:$0xff] %v982
      %999 = vst [vmem:[#allocation2 + $0x120] sm:$0xff] %v983
      %1000 = vst [vmem:[#allocation2 + $0x128] sm:$0xff] %v984
      %1001 = vst [vmem:[#allocation2 + $0x130] sm:$0xff] %v985
      %1002 = vst [vmem:[#allocation2 + $0x138] sm:$0xff] %v986
      %1003 = vrot.lane.b32.xlu0 %v394, 127
      %v1004 = vpop.permute.xlu0 %1003
      %1005 = vrot.lane.b32.xlu0 %v396, 127
      %v1006 = vpop.permute.xlu0 %1005
      %1007 = vrot.lane.b32.xlu0 %v398, 127
      %v1008 = vpop.permute.xlu0 %1007
      %1009 = vrot.lane.b32.xlu0 %v400, 127
      %v1010 = vpop.permute.xlu0 %1009
      %1011 = vrot.lane.b32.xlu0 %v402, 127
      %v1012 = vpop.permute.xlu0 %1011
      %1013 = vrot.lane.b32.xlu0 %v404, 127
      %v1014 = vpop.permute.xlu0 %1013
      %1015 = vrot.lane.b32.xlu0 %v406, 127
      %v1016 = vpop.permute.xlu0 %1015
      %1017 = vrot.lane.b32.xlu0 %v408, 127
      %v1018 = vpop.permute.xlu0 %1017
      %1019 = vrot.lane.b32.xlu0 %v395, 127
      %v1020 = vpop.permute.xlu0 %1019
      %1021 = vrot.lane.b32.xlu0 %v397, 127
      %v1022 = vpop.permute.xlu0 %1021
      %1023 = vrot.lane.b32.xlu0 %v399, 127
      %v1024 = vpop.permute.xlu0 %1023
      %1025 = vrot.lane.b32.xlu0 %v401, 127
      %v1026 = vpop.permute.xlu0 %1025
      %1027 = vrot.lane.b32.xlu0 %v403, 127
      %v1028 = vpop.permute.xlu0 %1027
      %1029 = vrot.lane.b32.xlu0 %v405, 127
      %v1030 = vpop.permute.xlu0 %1029
      %1031 = vrot.lane.b32.xlu0 %v407, 127
      %v1032 = vpop.permute.xlu0 %1031
      %1033 = vrot.lane.b32.xlu0 %v409, 127
      %v1034 = vpop.permute.xlu0 %1033
      %vm1035 = vcmp.lt.s32.totalorder %v443, 127
      %v1036 = vsel %vm1035, %v1004, %v1020
      %v1037 = vsel %vm1035, %v1006, %v1022
      %v1038 = vsel %vm1035, %v1008, %v1024
      %v1039 = vsel %vm1035, %v1010, %v1026
      %v1040 = vsel %vm1035, %v1012, %v1028
      %v1041 = vsel %vm1035, %v1014, %v1030
      %v1042 = vsel %vm1035, %v1016, %v1032
      %v1043 = vsel %vm1035, %v1018, %v1034
      %v1044 = vsel %vm1035, %v1020, %v1004
      %v1045 = vsel %vm1035, %v1022, %v1006
      %v1046 = vsel %vm1035, %v1024, %v1008
      %v1047 = vsel %vm1035, %v1026, %v1010
      %v1048 = vsel %vm1035, %v1028, %v1012
      %v1049 = vsel %vm1035, %v1030, %v1014
      %v1050 = vsel %vm1035, %v1032, %v1016
      %v1051 = vsel %vm1035, %v1034, %v1018
      %s1052 = scalar_lea.vmem %s2, 5
      %v1053 = vld [vmem:[%s1052] ss:$8 sm:$0x3]
      %v1055 = vlaneseq
      %v1056 = vshrl.u32 %v1055, 7
      %v1057 = vsub.s32 0, %v1056
      %v1058 = vrot.slane %v1053, %v1057
      %v1059 = vlaneseq
      %v1060 = vshrl.u32 %v1059, 7
      %v1061 = vsub.s32 1, %v1060
      %v1062 = vrot.slane %v1053, %v1061
      %v1065 = vmul.f32 %v1036, %v1058
      %v1066 = vmul.f32 %v1044, %v1062
      %v1067 = vmul.f32 %v1037, %v1058
      %v1068 = vmul.f32 %v1045, %v1062
      %v1069 = vmul.f32 %v1038, %v1058
      %v1070 = vmul.f32 %v1046, %v1062
      %v1071 = vmul.f32 %v1039, %v1058
      %v1072 = vmul.f32 %v1047, %v1062
      %v1073 = vmul.f32 %v1040, %v1058
      %v1074 = vmul.f32 %v1048, %v1062
      %v1075 = vmul.f32 %v1041, %v1058
      %v1076 = vmul.f32 %v1049, %v1062
      %v1077 = vmul.f32 %v1042, %v1058
      %v1078 = vmul.f32 %v1050, %v1062
      %v1079 = vmul.f32 %v1043, %v1058
      %v1080 = vmul.f32 %v1051, %v1062
      %v1081 = vpack.c.bf16 %v1067, %v1065
      %v1082 = vpack.c.bf16 %v1068, %v1066
      %v1083 = vpack.c.bf16 %v1071, %v1069
      %v1084 = vpack.c.bf16 %v1072, %v1070
      %v1085 = vpack.c.bf16 %v1075, %v1073
      %v1086 = vpack.c.bf16 %v1076, %v1074
      %v1087 = vpack.c.bf16 %v1079, %v1077
      %v1088 = vpack.c.bf16 %v1080, %v1078
      %v1097 = vunpack.c.l.b16 %v1081
      %v1098 = vunpack.c.l.b16 %v1082
      %v1099 = vunpack.c.h.b16 %v1081
      %v1100 = vunpack.c.h.b16 %v1082
      %v1101 = vunpack.c.l.b16 %v1083
      %v1102 = vunpack.c.l.b16 %v1084
      %v1103 = vunpack.c.h.b16 %v1083
      %v1104 = vunpack.c.h.b16 %v1084
      %v1105 = vunpack.c.l.b16 %v1085
      %v1106 = vunpack.c.l.b16 %v1086
      %v1107 = vunpack.c.h.b16 %v1085
      %v1108 = vunpack.c.h.b16 %v1086
      %v1109 = vunpack.c.l.b16 %v1087
      %v1110 = vunpack.c.l.b16 %v1088
      %v1111 = vunpack.c.h.b16 %v1087
      %v1112 = vunpack.c.h.b16 %v1088
      %v1113 = vpack.c.b16 %v1098, %v1097
      %v1114 = vpack.c.b16 %v1100, %v1099
      %v1115 = vpack.c.b16 %v1102, %v1101
      %v1116 = vpack.c.b16 %v1104, %v1103
      %v1117 = vpack.c.b16 %v1106, %v1105
      %v1118 = vpack.c.b16 %v1108, %v1107
      %v1119 = vpack.c.b16 %v1110, %v1109
      %v1120 = vpack.c.b16 %v1112, %v1111
      %1129 = vst [vmem:[#allocation2 + $0x140] sm:$0xff] %v1113
      %1130 = vst [vmem:[#allocation2 + $0x148] sm:$0xff] %v1114
      %1131 = vst [vmem:[#allocation2 + $0x150] sm:$0xff] %v1115
      %1132 = vst [vmem:[#allocation2 + $0x158] sm:$0xff] %v1116
      %1133 = vst [vmem:[#allocation2 + $0x160] sm:$0xff] %v1117
      %1134 = vst [vmem:[#allocation2 + $0x168] sm:$0xff] %v1118
      %1135 = vst [vmem:[#allocation2 + $0x170] sm:$0xff] %v1119
      %1136 = vst [vmem:[#allocation2 + $0x178] sm:$0xff] %v1120
      %1137 = vrot.lane.b32.xlu0 %v394, 113
      %v1138 = vpop.permute.xlu0 %1137
      %1139 = vrot.lane.b32.xlu0 %v396, 113
      %v1140 = vpop.permute.xlu0 %1139
      %1141 = vrot.lane.b32.xlu0 %v398, 113
      %v1142 = vpop.permute.xlu0 %1141
      %1143 = vrot.lane.b32.xlu0 %v400, 113
      %v1144 = vpop.permute.xlu0 %1143
      %1145 = vrot.lane.b32.xlu0 %v402, 113
      %v1146 = vpop.permute.xlu0 %1145
      %1147 = vrot.lane.b32.xlu0 %v404, 113
      %v1148 = vpop.permute.xlu0 %1147
      %1149 = vrot.lane.b32.xlu0 %v406, 113
      %v1150 = vpop.permute.xlu0 %1149
      %1151 = vrot.lane.b32.xlu0 %v408, 113
      %v1152 = vpop.permute.xlu0 %1151
      %1153 = vrot.lane.b32.xlu0 %v395, 113
      %v1154 = vpop.permute.xlu0 %1153
      %1155 = vrot.lane.b32.xlu0 %v397, 113
      %v1156 = vpop.permute.xlu0 %1155
      %1157 = vrot.lane.b32.xlu0 %v399, 113
      %v1158 = vpop.permute.xlu0 %1157
      %1159 = vrot.lane.b32.xlu0 %v401, 113
      %v1160 = vpop.permute.xlu0 %1159
      %1161 = vrot.lane.b32.xlu0 %v403, 113
      %v1162 = vpop.permute.xlu0 %1161
      %1163 = vrot.lane.b32.xlu0 %v405, 113
      %v1164 = vpop.permute.xlu0 %1163
      %1165 = vrot.lane.b32.xlu0 %v407, 113
      %v1166 = vpop.permute.xlu0 %1165
      %1167 = vrot.lane.b32.xlu0 %v409, 113
      %v1168 = vpop.permute.xlu0 %1167
      %vm1169 = vcmp.lt.s32.totalorder %v443, 113
      %v1170 = vsel %vm1169, %v1138, %v1154
      %v1171 = vsel %vm1169, %v1140, %v1156
      %v1172 = vsel %vm1169, %v1142, %v1158
      %v1173 = vsel %vm1169, %v1144, %v1160
      %v1174 = vsel %vm1169, %v1146, %v1162
      %v1175 = vsel %vm1169, %v1148, %v1164
      %v1176 = vsel %vm1169, %v1150, %v1166
      %v1177 = vsel %vm1169, %v1152, %v1168
      %v1178 = vsel %vm1169, %v1154, %v1138
      %v1179 = vsel %vm1169, %v1156, %v1140
      %v1180 = vsel %vm1169, %v1158, %v1142
      %v1181 = vsel %vm1169, %v1160, %v1144
      %v1182 = vsel %vm1169, %v1162, %v1146
      %v1183 = vsel %vm1169, %v1164, %v1148
      %v1184 = vsel %vm1169, %v1166, %v1150
      %v1185 = vsel %vm1169, %v1168, %v1152
      %s1186 = scalar_lea.vmem %s2, 6
      %v1187 = vld [vmem:[%s1186] ss:$8 sm:$0x3]
      %v1189 = vlaneseq
      %v1190 = vshrl.u32 %v1189, 7
      %v1191 = vsub.s32 0, %v1190
      %v1192 = vrot.slane %v1187, %v1191
      %v1193 = vlaneseq
      %v1194 = vshrl.u32 %v1193, 7
      %v1195 = vsub.s32 1, %v1194
      %v1196 = vrot.slane %v1187, %v1195
      %v1199 = vmul.f32 %v1170, %v1192
      %v1200 = vmul.f32 %v1178, %v1196
      %v1201 = vmul.f32 %v1171, %v1192
      %v1202 = vmul.f32 %v1179, %v1196
      %v1203 = vmul.f32 %v1172, %v1192
      %v1204 = vmul.f32 %v1180, %v1196
      %v1205 = vmul.f32 %v1173, %v1192
      %v1206 = vmul.f32 %v1181, %v1196
      %v1207 = vmul.f32 %v1174, %v1192
      %v1208 = vmul.f32 %v1182, %v1196
      %v1209 = vmul.f32 %v1175, %v1192
      %v1210 = vmul.f32 %v1183, %v1196
      %v1211 = vmul.f32 %v1176, %v1192
      %v1212 = vmul.f32 %v1184, %v1196
      %v1213 = vmul.f32 %v1177, %v1192
      %v1214 = vmul.f32 %v1185, %v1196
      %v1215 = vpack.c.bf16 %v1201, %v1199
      %v1216 = vpack.c.bf16 %v1202, %v1200
      %v1217 = vpack.c.bf16 %v1205, %v1203
      %v1218 = vpack.c.bf16 %v1206, %v1204
      %v1219 = vpack.c.bf16 %v1209, %v1207
      %v1220 = vpack.c.bf16 %v1210, %v1208
      %v1221 = vpack.c.bf16 %v1213, %v1211
      %v1222 = vpack.c.bf16 %v1214, %v1212
      %v1231 = vunpack.c.l.b16 %v1215
      %v1232 = vunpack.c.l.b16 %v1216
      %v1233 = vunpack.c.h.b16 %v1215
      %v1234 = vunpack.c.h.b16 %v1216
      %v1235 = vunpack.c.l.b16 %v1217
      %v1236 = vunpack.c.l.b16 %v1218
      %v1237 = vunpack.c.h.b16 %v1217
      %v1238 = vunpack.c.h.b16 %v1218
      %v1239 = vunpack.c.l.b16 %v1219
      %v1240 = vunpack.c.l.b16 %v1220
      %v1241 = vunpack.c.h.b16 %v1219
      %v1242 = vunpack.c.h.b16 %v1220
      %v1243 = vunpack.c.l.b16 %v1221
      %v1244 = vunpack.c.l.b16 %v1222
      %v1245 = vunpack.c.h.b16 %v1221
      %v1246 = vunpack.c.h.b16 %v1222
      %v1247 = vpack.c.b16 %v1232, %v1231
      %v1248 = vpack.c.b16 %v1234, %v1233
      %v1249 = vpack.c.b16 %v1236, %v1235
      %v1250 = vpack.c.b16 %v1238, %v1237
      %v1251 = vpack.c.b16 %v1240, %v1239
      %v1252 = vpack.c.b16 %v1242, %v1241
      %v1253 = vpack.c.b16 %v1244, %v1243
      %v1254 = vpack.c.b16 %v1246, %v1245
      %1263 = vst [vmem:[#allocation2 + $0x180] sm:$0xff] %v1247
      %1264 = vst [vmem:[#allocation2 + $0x188] sm:$0xff] %v1248
      %1265 = vst [vmem:[#allocation2 + $0x190] sm:$0xff] %v1249
      %1266 = vst [vmem:[#allocation2 + $0x198] sm:$0xff] %v1250
      %1267 = vst [vmem:[#allocation2 + $0x1a0] sm:$0xff] %v1251
      %1268 = vst [vmem:[#allocation2 + $0x1a8] sm:$0xff] %v1252
      %1269 = vst [vmem:[#allocation2 + $0x1b0] sm:$0xff] %v1253
      %1270 = vst [vmem:[#allocation2 + $0x1b8] sm:$0xff] %v1254
      %1271 = vrot.lane.b32.xlu0 %v394, 112
      %v1272 = vpop.permute.xlu0 %1271
      %1273 = vrot.lane.b32.xlu0 %v396, 112
      %v1274 = vpop.permute.xlu0 %1273
      %1275 = vrot.lane.b32.xlu0 %v398, 112
      %v1276 = vpop.permute.xlu0 %1275
      %1277 = vrot.lane.b32.xlu0 %v400, 112
      %v1278 = vpop.permute.xlu0 %1277
      %1279 = vrot.lane.b32.xlu0 %v402, 112
      %v1280 = vpop.permute.xlu0 %1279
      %1281 = vrot.lane.b32.xlu0 %v404, 112
      %v1282 = vpop.permute.xlu0 %1281
      %1283 = vrot.lane.b32.xlu0 %v406, 112
      %v1284 = vpop.permute.xlu0 %1283
      %1285 = vrot.lane.b32.xlu0 %v408, 112
      %v1286 = vpop.permute.xlu0 %1285
      %1287 = vrot.lane.b32.xlu0 %v395, 112
      %v1288 = vpop.permute.xlu0 %1287
      %1289 = vrot.lane.b32.xlu0 %v397, 112
      %v1290 = vpop.permute.xlu0 %1289
      %1291 = vrot.lane.b32.xlu0 %v399, 112
      %v1292 = vpop.permute.xlu0 %1291
      %1293 = vrot.lane.b32.xlu0 %v401, 112
      %v1294 = vpop.permute.xlu0 %1293
      %1295 = vrot.lane.b32.xlu0 %v403, 112
      %v1296 = vpop.permute.xlu0 %1295
      %1297 = vrot.lane.b32.xlu0 %v405, 112
      %v1298 = vpop.permute.xlu0 %1297
      %1299 = vrot.lane.b32.xlu0 %v407, 112
      %v1300 = vpop.permute.xlu0 %1299
      %1301 = vrot.lane.b32.xlu0 %v409, 112
      %v1302 = vpop.permute.xlu0 %1301
      %vm1303 = vcmp.lt.s32.totalorder %v443, 112
      %v1304 = vsel %vm1303, %v1272, %v1288
      %v1305 = vsel %vm1303, %v1274, %v1290
      %v1306 = vsel %vm1303, %v1276, %v1292
      %v1307 = vsel %vm1303, %v1278, %v1294
      %v1308 = vsel %vm1303, %v1280, %v1296
      %v1309 = vsel %vm1303, %v1282, %v1298
      %v1310 = vsel %vm1303, %v1284, %v1300
      %v1311 = vsel %vm1303, %v1286, %v1302
      %v1312 = vsel %vm1303, %v1288, %v1272
      %v1313 = vsel %vm1303, %v1290, %v1274
      %v1314 = vsel %vm1303, %v1292, %v1276
      %v1315 = vsel %vm1303, %v1294, %v1278
      %v1316 = vsel %vm1303, %v1296, %v1280
      %v1317 = vsel %vm1303, %v1298, %v1282
      %v1318 = vsel %vm1303, %v1300, %v1284
      %v1319 = vsel %vm1303, %v1302, %v1286
      %s1320 = scalar_lea.vmem %s2, 7
      %v1321 = vld [vmem:[%s1320] ss:$8 sm:$0x3]
      %v1323 = vlaneseq
      %v1324 = vshrl.u32 %v1323, 7
      %v1325 = vsub.s32 0, %v1324
      %v1326 = vrot.slane %v1321, %v1325
      %v1327 = vlaneseq
      %v1328 = vshrl.u32 %v1327, 7
      %v1329 = vsub.s32 1, %v1328
      %v1330 = vrot.slane %v1321, %v1329
      %v1333 = vmul.f32 %v1304, %v1326
      %v1334 = vmul.f32 %v1312, %v1330
      %v1335 = vmul.f32 %v1305, %v1326
      %v1336 = vmul.f32 %v1313, %v1330
      %v1337 = vmul.f32 %v1306, %v1326
      %v1338 = vmul.f32 %v1314, %v1330
      %v1339 = vmul.f32 %v1307, %v1326
      %v1340 = vmul.f32 %v1315, %v1330
      %v1341 = vmul.f32 %v1308, %v1326
      %v1342 = vmul.f32 %v1316, %v1330
      %v1343 = vmul.f32 %v1309, %v1326
      %v1344 = vmul.f32 %v1317, %v1330
      %v1345 = vmul.f32 %v1310, %v1326
      %v1346 = vmul.f32 %v1318, %v1330
      %v1347 = vmul.f32 %v1311, %v1326
      %v1348 = vmul.f32 %v1319, %v1330
      %v1349 = vpack.c.bf16 %v1335, %v1333
      %v1350 = vpack.c.bf16 %v1336, %v1334
      %v1351 = vpack.c.bf16 %v1339, %v1337
      %v1352 = vpack.c.bf16 %v1340, %v1338
      %v1353 = vpack.c.bf16 %v1343, %v1341
      %v1354 = vpack.c.bf16 %v1344, %v1342
      %v1355 = vpack.c.bf16 %v1347, %v1345
      %v1356 = vpack.c.bf16 %v1348, %v1346
      %v1365 = vunpack.c.l.b16 %v1349
      %v1366 = vunpack.c.l.b16 %v1350
      %v1367 = vunpack.c.h.b16 %v1349
      %v1368 = vunpack.c.h.b16 %v1350
      %v1369 = vunpack.c.l.b16 %v1351
      %v1370 = vunpack.c.l.b16 %v1352
      %v1371 = vunpack.c.h.b16 %v1351
      %v1372 = vunpack.c.h.b16 %v1352
      %v1373 = vunpack.c.l.b16 %v1353
      %v1374 = vunpack.c.l.b16 %v1354
      %v1375 = vunpack.c.h.b16 %v1353
      %v1376 = vunpack.c.h.b16 %v1354
      %v1377 = vunpack.c.l.b16 %v1355
      %v1378 = vunpack.c.l.b16 %v1356
      %v1379 = vunpack.c.h.b16 %v1355
      %v1380 = vunpack.c.h.b16 %v1356
      %v1381 = vpack.c.b16 %v1366, %v1365
      %v1382 = vpack.c.b16 %v1368, %v1367
      %v1383 = vpack.c.b16 %v1370, %v1369
      %v1384 = vpack.c.b16 %v1372, %v1371
      %v1385 = vpack.c.b16 %v1374, %v1373
      %v1386 = vpack.c.b16 %v1376, %v1375
      %v1387 = vpack.c.b16 %v1378, %v1377
      %v1388 = vpack.c.b16 %v1380, %v1379
      %1397 = vst [vmem:[#allocation2 + $0x1c0] sm:$0xff] %v1381
      %1398 = vst [vmem:[#allocation2 + $0x1c8] sm:$0xff] %v1382
      %1399 = vst [vmem:[#allocation2 + $0x1d0] sm:$0xff] %v1383
      %1400 = vst [vmem:[#allocation2 + $0x1d8] sm:$0xff] %v1384
      %1401 = vst [vmem:[#allocation2 + $0x1e0] sm:$0xff] %v1385
      %1402 = vst [vmem:[#allocation2 + $0x1e8] sm:$0xff] %v1386
      %1403 = vst [vmem:[#allocation2 + $0x1f0] sm:$0xff] %v1387
      %1404 = vst [vmem:[#allocation2 + $0x1f8] sm:$0xff] %v1388
      %1405 = vrot.lane.b32.xlu0 %v394, 111
      %v1406 = vpop.permute.xlu0 %1405
      %1407 = vrot.lane.b32.xlu0 %v396, 111
      %v1408 = vpop.permute.xlu0 %1407
      %1409 = vrot.lane.b32.xlu0 %v398, 111
      %v1410 = vpop.permute.xlu0 %1409
      %1411 = vrot.lane.b32.xlu0 %v400, 111
      %v1412 = vpop.permute.xlu0 %1411
      %1413 = vrot.lane.b32.xlu0 %v402, 111
      %v1414 = vpop.permute.xlu0 %1413
      %1415 = vrot.lane.b32.xlu0 %v404, 111
      %v1416 = vpop.permute.xlu0 %1415
      %1417 = vrot.lane.b32.xlu0 %v406, 111
      %v1418 = vpop.permute.xlu0 %1417
      %1419 = vrot.lane.b32.xlu0 %v408, 111
      %v1420 = vpop.permute.xlu0 %1419
      %1421 = vrot.lane.b32.xlu0 %v395, 111
      %v1422 = vpop.permute.xlu0 %1421
      %1423 = vrot.lane.b32.xlu0 %v397, 111
      %v1424 = vpop.permute.xlu0 %1423
      %1425 = vrot.lane.b32.xlu0 %v399, 111
      %v1426 = vpop.permute.xlu0 %1425
      %1427 = vrot.lane.b32.xlu0 %v401, 111
      %v1428 = vpop.permute.xlu0 %1427
      %1429 = vrot.lane.b32.xlu0 %v403, 111
      %v1430 = vpop.permute.xlu0 %1429
      %1431 = vrot.lane.b32.xlu0 %v405, 111
      %v1432 = vpop.permute.xlu0 %1431
      %1433 = vrot.lane.b32.xlu0 %v407, 111
      %v1434 = vpop.permute.xlu0 %1433
      %1435 = vrot.lane.b32.xlu0 %v409, 111
      %v1436 = vpop.permute.xlu0 %1435
      %vm1437 = vcmp.lt.s32.totalorder %v443, 111
      %v1438 = vsel %vm1437, %v1406, %v1422
      %v1439 = vsel %vm1437, %v1408, %v1424
      %v1440 = vsel %vm1437, %v1410, %v1426
      %v1441 = vsel %vm1437, %v1412, %v1428
      %v1442 = vsel %vm1437, %v1414, %v1430
      %v1443 = vsel %vm1437, %v1416, %v1432
      %v1444 = vsel %vm1437, %v1418, %v1434
      %v1445 = vsel %vm1437, %v1420, %v1436
      %v1446 = vsel %vm1437, %v1422, %v1406
      %v1447 = vsel %vm1437, %v1424, %v1408
      %v1448 = vsel %vm1437, %v1426, %v1410
      %v1449 = vsel %vm1437, %v1428, %v1412
      %v1450 = vsel %vm1437, %v1430, %v1414
      %v1451 = vsel %vm1437, %v1432, %v1416
      %v1452 = vsel %vm1437, %v1434, %v1418
      %v1453 = vsel %vm1437, %v1436, %v1420
      %s1454 = scalar_lea.vmem %s2, 16
      %v1455 = vld [vmem:[%s1454] ss:$8 sm:$0x3]
      %v1457 = vlaneseq
      %v1458 = vshrl.u32 %v1457, 7
      %v1459 = vsub.s32 0, %v1458
      %v1460 = vrot.slane %v1455, %v1459
      %v1461 = vlaneseq
      %v1462 = vshrl.u32 %v1461, 7
      %v1463 = vsub.s32 1, %v1462
      %v1464 = vrot.slane %v1455, %v1463
      %v1467 = vmul.f32 %v1438, %v1460
      %v1468 = vmul.f32 %v1446, %v1464
      %v1469 = vmul.f32 %v1439, %v1460
      %v1470 = vmul.f32 %v1447, %v1464
      %v1471 = vmul.f32 %v1440, %v1460
      %v1472 = vmul.f32 %v1448, %v1464
      %v1473 = vmul.f32 %v1441, %v1460
      %v1474 = vmul.f32 %v1449, %v1464
      %v1475 = vmul.f32 %v1442, %v1460
      %v1476 = vmul.f32 %v1450, %v1464
      %v1477 = vmul.f32 %v1443, %v1460
      %v1478 = vmul.f32 %v1451, %v1464
      %v1479 = vmul.f32 %v1444, %v1460
      %v1480 = vmul.f32 %v1452, %v1464
      %v1481 = vmul.f32 %v1445, %v1460
      %v1482 = vmul.f32 %v1453, %v1464
      %v1483 = vpack.c.bf16 %v1469, %v1467
      %v1484 = vpack.c.bf16 %v1470, %v1468
      %v1485 = vpack.c.bf16 %v1473, %v1471
      %v1486 = vpack.c.bf16 %v1474, %v1472
      %v1487 = vpack.c.bf16 %v1477, %v1475
      %v1488 = vpack.c.bf16 %v1478, %v1476
      %v1489 = vpack.c.bf16 %v1481, %v1479
      %v1490 = vpack.c.bf16 %v1482, %v1480
      %v1499 = vunpack.c.l.b16 %v1483
      %v1500 = vunpack.c.l.b16 %v1484
      %v1501 = vunpack.c.h.b16 %v1483
      %v1502 = vunpack.c.h.b16 %v1484
      %v1503 = vunpack.c.l.b16 %v1485
      %v1504 = vunpack.c.l.b16 %v1486
      %v1505 = vunpack.c.h.b16 %v1485
      %v1506 = vunpack.c.h.b16 %v1486
      %v1507 = vunpack.c.l.b16 %v1487
      %v1508 = vunpack.c.l.b16 %v1488
      %v1509 = vunpack.c.h.b16 %v1487
      %v1510 = vunpack.c.h.b16 %v1488
      %v1511 = vunpack.c.l.b16 %v1489
      %v1512 = vunpack.c.l.b16 %v1490
      %v1513 = vunpack.c.h.b16 %v1489
      %v1514 = vunpack.c.h.b16 %v1490
      %v1515 = vpack.c.b16 %v1500, %v1499
      %v1516 = vpack.c.b16 %v1502, %v1501
      %v1517 = vpack.c.b16 %v1504, %v1503
      %v1518 = vpack.c.b16 %v1506, %v1505
      %v1519 = vpack.c.b16 %v1508, %v1507
      %v1520 = vpack.c.b16 %v1510, %v1509
      %v1521 = vpack.c.b16 %v1512, %v1511
      %v1522 = vpack.c.b16 %v1514, %v1513
      %1531 = vst [vmem:[#allocation2 + $0x200] sm:$0xff] %v1515
      %1532 = vst [vmem:[#allocation2 + $0x208] sm:$0xff] %v1516
      %1533 = vst [vmem:[#allocation2 + $0x210] sm:$0xff] %v1517
      %1534 = vst [vmem:[#allocation2 + $0x218] sm:$0xff] %v1518
      %1535 = vst [vmem:[#allocation2 + $0x220] sm:$0xff] %v1519
      %1536 = vst [vmem:[#allocation2 + $0x228] sm:$0xff] %v1520
      %1537 = vst [vmem:[#allocation2 + $0x230] sm:$0xff] %v1521
      %1538 = vst [vmem:[#allocation2 + $0x238] sm:$0xff] %v1522
      %v1539 = vld [vmem:[%s3] sm:$0xff]
      %v1540 = vld [vmem:[%s3 + $0x8] sm:$0xff]
      %v1541 = vld [vmem:[%s3 + $0x10] sm:$0xf]
      %v1542 = vld [vmem:[%s3 + $0x14] sm:$0xff]
      %v1543 = vld [vmem:[%s3 + $0x1c] sm:$0xff]
      %v1544 = vld [vmem:[%s3 + $0x24] sm:$0xf]
      %v1545 = vld [vmem:[%s3 + $0x28] sm:$0xff]
      %v1546 = vld [vmem:[%s3 + $0x30] sm:$0xff]
      %v1547 = vld [vmem:[%s3 + $0x38] sm:$0xf]
      %v1548 = vld [vmem:[%s3 + $0x3c] sm:$0xff]
      %v1549 = vld [vmem:[%s3 + $0x44] sm:$0xff]
      %v1550 = vld [vmem:[%s3 + $0x4c] sm:$0xf]
      %v1551 = vld [vmem:[#allocation2] sm:$0xff]
      %v1552 = vld [vmem:[#allocation2 + $0x8] sm:$0xff]
      %v1553 = vld [vmem:[#allocation2 + $0x10] sm:$0xff]
      %v1554 = vld [vmem:[#allocation2 + $0x18] sm:$0xff]
      %v1555 = vld [vmem:[#allocation2 + $0x20] sm:$0xff]
      %v1556 = vld [vmem:[#allocation2 + $0x28] sm:$0xff]
      %v1557 = vld [vmem:[#allocation2 + $0x30] sm:$0xff]
      %v1558 = vld [vmem:[#allocation2 + $0x38] sm:$0xff]
      %v1559 = vld [vmem:[#allocation2 + $0x40] sm:$0xff]
      %v1560 = vld [vmem:[#allocation2 + $0x48] sm:$0xff]
      %v1561 = vld [vmem:[#allocation2 + $0x50] sm:$0xff]
      %v1562 = vld [vmem:[#allocation2 + $0x58] sm:$0xff]
      %v1563 = vld [vmem:[#allocation2 + $0x60] sm:$0xff]
      %v1564 = vld [vmem:[#allocation2 + $0x68] sm:$0xff]
      %v1565 = vld [vmem:[#allocation2 + $0x70] sm:$0xff]
      %v1566 = vld [vmem:[#allocation2 + $0x78] sm:$0xff]
      %v1567 = vld [vmem:[#allocation2 + $0x80] sm:$0xff]
      %v1568 = vld [vmem:[#allocation2 + $0x88] sm:$0xff]
      %v1569 = vld [vmem:[#allocation2 + $0x90] sm:$0xff]
      %v1570 = vld [vmem:[#allocation2 + $0x98] sm:$0xff]
      %v1571 = vld [vmem:[#allocation2 + $0xa0] sm:$0xff]
      %v1572 = vld [vmem:[#allocation2 + $0xa8] sm:$0xff]
      %v1573 = vld [vmem:[#allocation2 + $0xb0] sm:$0xff]
      %v1574 = vld [vmem:[#allocation2 + $0xb8] sm:$0xff]
      %v1575 = vld [vmem:[#allocation2 + $0xc0] sm:$0xff]
      %v1576 = vld [vmem:[#allocation2 + $0xc8] sm:$0xff]
      %v1577 = vld [vmem:[#allocation2 + $0xd0] sm:$0xff]
      %v1578 = vld [vmem:[#allocation2 + $0xd8] sm:$0xff]
      %v1579 = vld [vmem:[#allocation2 + $0xe0] sm:$0xff]
      %v1580 = vld [vmem:[#allocation2 + $0xe8] sm:$0xff]
      %v1581 = vld [vmem:[#allocation2 + $0xf0] sm:$0xff]
      %v1582 = vld [vmem:[#allocation2 + $0xf8] sm:$0xff]
      %v1583 = vld [vmem:[#allocation2 + $0x100] sm:$0xff]
      %v1584 = vld [vmem:[#allocation2 + $0x108] sm:$0xff]
      %v1585 = vld [vmem:[#allocation2 + $0x110] sm:$0xff]
      %v1586 = vld [vmem:[#allocation2 + $0x118] sm:$0xff]
      %v1587 = vld [vmem:[#allocation2 + $0x120] sm:$0xff]
      %v1588 = vld [vmem:[#allocation2 + $0x128] sm:$0xff]
      %v1589 = vld [vmem:[#allocation2 + $0x130] sm:$0xff]
      %v1590 = vld [vmem:[#allocation2 + $0x138] sm:$0xff]
      %v1591 = vld [vmem:[#allocation2 + $0x140] sm:$0xff]
      %v1592 = vld [vmem:[#allocation2 + $0x148] sm:$0xff]
      %v1593 = vld [vmem:[#allocation2 + $0x150] sm:$0xff]
      %v1594 = vld [vmem:[#allocation2 + $0x158] sm:$0xff]
      %v1595 = vld [vmem:[#allocation2 + $0x160] sm:$0xff]
      %v1596 = vld [vmem:[#allocation2 + $0x168] sm:$0xff]
      %v1597 = vld [vmem:[#allocation2 + $0x170] sm:$0xff]
      %v1598 = vld [vmem:[#allocation2 + $0x178] sm:$0xff]
      %v1599 = vld [vmem:[#allocation2 + $0x180] sm:$0xff]
      %v1600 = vld [vmem:[#allocation2 + $0x188] sm:$0xff]
      %v1601 = vld [vmem:[#allocation2 + $0x190] sm:$0xff]
      %v1602 = vld [vmem:[#allocation2 + $0x198] sm:$0xff]
      %v1603 = vld [vmem:[#allocation2 + $0x1a0] sm:$0xff]
      %v1604 = vld [vmem:[#allocation2 + $0x1a8] sm:$0xff]
      %v1605 = vld [vmem:[#allocation2 + $0x1b0] sm:$0xff]
      %v1606 = vld [vmem:[#allocation2 + $0x1b8] sm:$0xff]
      %v1607 = vld [vmem:[#allocation2 + $0x1c0] sm:$0xff]
      %v1608 = vld [vmem:[#allocation2 + $0x1c8] sm:$0xff]
      %v1609 = vld [vmem:[#allocation2 + $0x1d0] sm:$0xff]
      %v1610 = vld [vmem:[#allocation2 + $0x1d8] sm:$0xff]
      %v1611 = vld [vmem:[#allocation2 + $0x1e0] sm:$0xff]
      %v1612 = vld [vmem:[#allocation2 + $0x1e8] sm:$0xff]
      %v1613 = vld [vmem:[#allocation2 + $0x1f0] sm:$0xff]
      %v1614 = vld [vmem:[#allocation2 + $0x1f8] sm:$0xff]
      %v1615 = vld [vmem:[#allocation2 + $0x200] sm:$0xff]
      %v1616 = vld [vmem:[#allocation2 + $0x208] sm:$0xff]
      %v1617 = vld [vmem:[#allocation2 + $0x210] sm:$0xff]
      %v1618 = vld [vmem:[#allocation2 + $0x218] sm:$0xff]
      %v1619 = vld [vmem:[#allocation2 + $0x220] sm:$0xff]
      %v1620 = vld [vmem:[#allocation2 + $0x228] sm:$0xff]
      %v1621 = vld [vmem:[#allocation2 + $0x230] sm:$0xff]
      %v1622 = vld [vmem:[#allocation2 + $0x238] sm:$0xff]
      %v1623 = vld [vmem:[%s4] sm:$0xff]
      %v1624 = vld [vmem:[%s4 + $0x8] sm:$0xff]
      %v1625 = vld [vmem:[%s4 + $0x10] sm:$0xff]
      %v1626 = vld [vmem:[%s4 + $0x18] sm:$0xff]
      %1628 = vset.pattern.permute.xlu0 0
      %1629 = vperm.xlu0 %1628, %v1623
      %v1630 = vpop.permute.xlu0 %1629
      %1633 = vset.pattern.permute.xlu0 0
      %1634 = vperm.xlu0 %1633, %v1624
      %v1635 = vpop.permute.xlu0 %1634
      %1638 = vset.pattern.permute.xlu0 0
      %1639 = vperm.xlu0 %1638, %v1625
      %v1640 = vpop.permute.xlu0 %1639
      %1643 = vset.pattern.permute.xlu0 0
      %1644 = vperm.xlu0 %1643, %v1626
      %v1645 = vpop.permute.xlu0 %1644
      %v1659 = vunpack.c.l.b16 %v1539
      %v1660 = vunpack.c.h.b16 %v1539
      %v1661 = vunpack.c.l.b16 %v1540
      %v1662 = vunpack.c.h.b16 %v1540
      %v1663 = vunpack.c.l.b16 %v1541
      %v1664 = vunpack.c.l.b16 %v1542
      %v1665 = vunpack.c.h.b16 %v1542
      %v1666 = vunpack.c.l.b16 %v1543
      %v1667 = vunpack.c.h.b16 %v1543
      %v1668 = vunpack.c.l.b16 %v1544
      %v1669 = vunpack.c.l.b16 %v1545
      %v1670 = vunpack.c.h.b16 %v1545
      %v1671 = vunpack.c.l.b16 %v1546
      %v1672 = vunpack.c.h.b16 %v1546
      %v1673 = vunpack.c.l.b16 %v1547
      %v1674 = vunpack.c.l.b16 %v1548
      %v1675 = vunpack.c.h.b16 %v1548
      %v1676 = vunpack.c.l.b16 %v1549
      %v1677 = vunpack.c.h.b16 %v1549
      %v1678 = vunpack.c.l.b16 %v1550
      %v1679 = vpack.c.b16 %v1664, %v1659
      %v1680 = vpack.c.b16 %v1665, %v1660
      %v1681 = vpack.c.b16 %v1666, %v1661
      %v1682 = vpack.c.b16 %v1667, %v1662
      %v1683 = vpack.c.b16 %v1668, %v1663
      %v1684 = vpack.c.b16 %v1674, %v1669
      %v1685 = vpack.c.b16 %v1675, %v1670
      %v1686 = vpack.c.b16 %v1676, %v1671
      %v1687 = vpack.c.b16 %v1677, %v1672
      %v1688 = vpack.c.b16 %v1678, %v1673
      %v1769 = vunpack.c.l.b16 %v1551
      %v1770 = vunpack.c.h.b16 %v1551
      %v1771 = vunpack.c.l.b16 %v1552
      %v1772 = vunpack.c.h.b16 %v1552
      %v1773 = vunpack.c.l.b16 %v1553
      %v1774 = vunpack.c.h.b16 %v1553
      %v1775 = vunpack.c.l.b16 %v1554
      %v1776 = vunpack.c.h.b16 %v1554
      %v1777 = vunpack.c.l.b16 %v1555
      %v1778 = vunpack.c.h.b16 %v1555
      %v1779 = vunpack.c.l.b16 %v1556
      %v1780 = vunpack.c.h.b16 %v1556
      %v1781 = vunpack.c.l.b16 %v1557
      %v1782 = vunpack.c.h.b16 %v1557
      %v1783 = vunpack.c.l.b16 %v1558
      %v1784 = vunpack.c.h.b16 %v1558
      %v1785 = vunpack.c.l.b16 %v1559
      %v1786 = vunpack.c.h.b16 %v1559
      %v1787 = vunpack.c.l.b16 %v1560
      %v1788 = vunpack.c.h.b16 %v1560
      %v1789 = vunpack.c.l.b16 %v1561
      %v1790 = vunpack.c.h.b16 %v1561
      %v1791 = vunpack.c.l.b16 %v1562
      %v1792 = vunpack.c.h.b16 %v1562
      %v1793 = vunpack.c.l.b16 %v1563
      %v1794 = vunpack.c.h.b16 %v1563
      %v1795 = vunpack.c.l.b16 %v1564
      %v1796 = vunpack.c.h.b16 %v1564
      %v1797 = vunpack.c.l.b16 %v1565
      %v1798 = vunpack.c.h.b16 %v1565
      %v1799 = vunpack.c.l.b16 %v1566
      %v1800 = vunpack.c.h.b16 %v1566
      %v1801 = vunpack.c.l.b16 %v1567
      %v1802 = vunpack.c.h.b16 %v1567
      %v1803 = vunpack.c.l.b16 %v1568
      %v1804 = vunpack.c.h.b16 %v1568
      %v1805 = vunpack.c.l.b16 %v1569
      %v1806 = vunpack.c.h.b16 %v1569
      %v1807 = vunpack.c.l.b16 %v1570
      %v1808 = vunpack.c.h.b16 %v1570
      %v1809 = vunpack.c.l.b16 %v1571
      %v1810 = vunpack.c.h.b16 %v1571
      %v1811 = vunpack.c.l.b16 %v1572
      %v1812 = vunpack.c.h.b16 %v1572
      %v1813 = vunpack.c.l.b16 %v1573
      %v1814 = vunpack.c.h.b16 %v1573
      %v1815 = vunpack.c.l.b16 %v1574
      %v1816 = vunpack.c.h.b16 %v1574
      %v1817 = vunpack.c.l.b16 %v1575
      %v1818 = vunpack.c.h.b16 %v1575
      %v1819 = vunpack.c.l.b16 %v1576
      %v1820 = vunpack.c.h.b16 %v1576
      %v1821 = vunpack.c.l.b16 %v1577
      %v1822 = vunpack.c.h.b16 %v1577
      %v1823 = vunpack.c.l.b16 %v1578
      %v1824 = vunpack.c.h.b16 %v1578
      %v1825 = vunpack.c.l.b16 %v1579
      %v1826 = vunpack.c.h.b16 %v1579
      %v1827 = vunpack.c.l.b16 %v1580
      %v1828 = vunpack.c.h.b16 %v1580
      %v1829 = vunpack.c.l.b16 %v1581
      %v1830 = vunpack.c.h.b16 %v1581
      %v1831 = vunpack.c.l.b16 %v1582
      %v1832 = vunpack.c.h.b16 %v1582
      %v1833 = vunpack.c.l.b16 %v1583
      %v1834 = vunpack.c.h.b16 %v1583
      %v1835 = vunpack.c.l.b16 %v1584
      %v1836 = vunpack.c.h.b16 %v1584
      %v1837 = vunpack.c.l.b16 %v1585
      %v1838 = vunpack.c.h.b16 %v1585
      %v1839 = vunpack.c.l.b16 %v1586
      %v1840 = vunpack.c.h.b16 %v1586
      %v1841 = vunpack.c.l.b16 %v1587
      %v1842 = vunpack.c.h.b16 %v1587
      %v1843 = vunpack.c.l.b16 %v1588
      %v1844 = vunpack.c.h.b16 %v1588
      %v1845 = vunpack.c.l.b16 %v1589
      %v1846 = vunpack.c.h.b16 %v1589
      %v1847 = vunpack.c.l.b16 %v1590
      %v1848 = vunpack.c.h.b16 %v1590
      %v1849 = vunpack.c.l.b16 %v1591
      %v1850 = vunpack.c.h.b16 %v1591
      %v1851 = vunpack.c.l.b16 %v1592
      %v1852 = vunpack.c.h.b16 %v1592
      %v1853 = vunpack.c.l.b16 %v1593
      %v1854 = vunpack.c.h.b16 %v1593
      %v1855 = vunpack.c.l.b16 %v1594
      %v1856 = vunpack.c.h.b16 %v1594
      %v1857 = vunpack.c.l.b16 %v1595
      %v1858 = vunpack.c.h.b16 %v1595
      %v1859 = vunpack.c.l.b16 %v1596
      %v1860 = vunpack.c.h.b16 %v1596
      %v1861 = vunpack.c.l.b16 %v1597
      %v1862 = vunpack.c.h.b16 %v1597
      %v1863 = vunpack.c.l.b16 %v1598
      %v1864 = vunpack.c.h.b16 %v1598
      %v1865 = vunpack.c.l.b16 %v1599
      %v1866 = vunpack.c.h.b16 %v1599
      %v1867 = vunpack.c.l.b16 %v1600
      %v1868 = vunpack.c.h.b16 %v1600
      %v1869 = vunpack.c.l.b16 %v1601
      %v1870 = vunpack.c.h.b16 %v1601
      %v1871 = vunpack.c.l.b16 %v1602
      %v1872 = vunpack.c.h.b16 %v1602
      %v1873 = vunpack.c.l.b16 %v1603
      %v1874 = vunpack.c.h.b16 %v1603
      %v1875 = vunpack.c.l.b16 %v1604
      %v1876 = vunpack.c.h.b16 %v1604
      %v1877 = vunpack.c.l.b16 %v1605
      %v1878 = vunpack.c.h.b16 %v1605
      %v1879 = vunpack.c.l.b16 %v1606
      %v1880 = vunpack.c.h.b16 %v1606
      %v1881 = vunpack.c.l.b16 %v1607
      %v1882 = vunpack.c.h.b16 %v1607
      %v1883 = vunpack.c.l.b16 %v1608
      %v1884 = vunpack.c.h.b16 %v1608
      %v1885 = vunpack.c.l.b16 %v1609
      %v1886 = vunpack.c.h.b16 %v1609
      %v1887 = vunpack.c.l.b16 %v1610
      %v1888 = vunpack.c.h.b16 %v1610
      %v1889 = vunpack.c.l.b16 %v1611
      %v1890 = vunpack.c.h.b16 %v1611
      %v1891 = vunpack.c.l.b16 %v1612
      %v1892 = vunpack.c.h.b16 %v1612
      %v1893 = vunpack.c.l.b16 %v1613
      %v1894 = vunpack.c.h.b16 %v1613
      %v1895 = vunpack.c.l.b16 %v1614
      %v1896 = vunpack.c.h.b16 %v1614
      %v1897 = vunpack.c.l.b16 %v1615
      %v1898 = vunpack.c.h.b16 %v1615
      %v1899 = vunpack.c.l.b16 %v1616
      %v1900 = vunpack.c.h.b16 %v1616
      %v1901 = vunpack.c.l.b16 %v1617
      %v1902 = vunpack.c.h.b16 %v1617
      %v1903 = vunpack.c.l.b16 %v1618
      %v1904 = vunpack.c.h.b16 %v1618
      %v1905 = vunpack.c.l.b16 %v1619
      %v1906 = vunpack.c.h.b16 %v1619
      %v1907 = vunpack.c.l.b16 %v1620
      %v1908 = vunpack.c.h.b16 %v1620
      %v1909 = vunpack.c.l.b16 %v1621
      %v1910 = vunpack.c.h.b16 %v1621
      %v1911 = vunpack.c.l.b16 %v1622
      %v1912 = vunpack.c.h.b16 %v1622
      %v1913 = vpack.c.b16 %v1771, %v1769
      %v1914 = vpack.c.b16 %v1772, %v1770
      %v1915 = vpack.c.b16 %v1775, %v1773
      %v1916 = vpack.c.b16 %v1776, %v1774
      %v1917 = vpack.c.b16 %v1779, %v1777
      %v1918 = vpack.c.b16 %v1780, %v1778
      %v1919 = vpack.c.b16 %v1783, %v1781
      %v1920 = vpack.c.b16 %v1784, %v1782
      %v1921 = vpack.c.b16 %v1787, %v1785
      %v1922 = vpack.c.b16 %v1788, %v1786
      %v1923 = vpack.c.b16 %v1791, %v1789
      %v1924 = vpack.c.b16 %v1792, %v1790
      %v1925 = vpack.c.b16 %v1795, %v1793
      %v1926 = vpack.c.b16 %v1796, %v1794
      %v1927 = vpack.c.b16 %v1799, %v1797
      %v1928 = vpack.c.b16 %v1800, %v1798
      %v1929 = vpack.c.b16 %v1803, %v1801
      %v1930 = vpack.c.b16 %v1804, %v1802
      %v1931 = vpack.c.b16 %v1807, %v1805
      %v1932 = vpack.c.b16 %v1808, %v1806
      %v1933 = vpack.c.b16 %v1811, %v1809
      %v1934 = vpack.c.b16 %v1812, %v1810
      %v1935 = vpack.c.b16 %v1815, %v1813
      %v1936 = vpack.c.b16 %v1816, %v1814
      %v1937 = vpack.c.b16 %v1819, %v1817
      %v1938 = vpack.c.b16 %v1820, %v1818
      %v1939 = vpack.c.b16 %v1823, %v1821
      %v1940 = vpack.c.b16 %v1824, %v1822
      %v1941 = vpack.c.b16 %v1827, %v1825
      %v1942 = vpack.c.b16 %v1828, %v1826
      %v1943 = vpack.c.b16 %v1831, %v1829
      %v1944 = vpack.c.b16 %v1832, %v1830
      %v1945 = vpack.c.b16 %v1835, %v1833
      %v1946 = vpack.c.b16 %v1836, %v1834
      %v1947 = vpack.c.b16 %v1839, %v1837
      %v1948 = vpack.c.b16 %v1840, %v1838
      %v1949 = vpack.c.b16 %v1843, %v1841
      %v1950 = vpack.c.b16 %v1844, %v1842
      %v1951 = vpack.c.b16 %v1847, %v1845
      %v1952 = vpack.c.b16 %v1848, %v1846
      %v1953 = vpack.c.b16 %v1851, %v1849
      %v1954 = vpack.c.b16 %v1852, %v1850
      %v1955 = vpack.c.b16 %v1855, %v1853
      %v1956 = vpack.c.b16 %v1856, %v1854
      %v1957 = vpack.c.b16 %v1859, %v1857
      %v1958 = vpack.c.b16 %v1860, %v1858
      %v1959 = vpack.c.b16 %v1863, %v1861
      %v1960 = vpack.c.b16 %v1864, %v1862
      %v1961 = vpack.c.b16 %v1867, %v1865
      %v1962 = vpack.c.b16 %v1868, %v1866
      %v1963 = vpack.c.b16 %v1871, %v1869
      %v1964 = vpack.c.b16 %v1872, %v1870
      %v1965 = vpack.c.b16 %v1875, %v1873
      %v1966 = vpack.c.b16 %v1876, %v1874
      %v1967 = vpack.c.b16 %v1879, %v1877
      %v1968 = vpack.c.b16 %v1880, %v1878
      %v1969 = vpack.c.b16 %v1883, %v1881
      %v1970 = vpack.c.b16 %v1884, %v1882
      %v1971 = vpack.c.b16 %v1887, %v1885
      %v1972 = vpack.c.b16 %v1888, %v1886
      %v1973 = vpack.c.b16 %v1891, %v1889
      %v1974 = vpack.c.b16 %v1892, %v1890
      %v1975 = vpack.c.b16 %v1895, %v1893
      %v1976 = vpack.c.b16 %v1896, %v1894
      %v1977 = vpack.c.b16 %v1899, %v1897
      %v1978 = vpack.c.b16 %v1900, %v1898
      %v1979 = vpack.c.b16 %v1903, %v1901
      %v1980 = vpack.c.b16 %v1904, %v1902
      %v1981 = vpack.c.b16 %v1907, %v1905
      %v1982 = vpack.c.b16 %v1908, %v1906
      %v1983 = vpack.c.b16 %v1911, %v1909
      %v1984 = vpack.c.b16 %v1912, %v1910
      %vm2057 = vcmask 523264
      %v2059 = vsel %vm2057, %v1683, 0
      %v2062 = vsel %vm2057, %v1688, 0
      %2064 = vmatprep.subr.bf16.mxu0 %v1928
      %2065 = vmatpush1.bf16.msra.mxu0 %v1927
      %2066 = vmatprep.subr.bf16.mxu0 %v1926
      %2067 = vmatpush1.bf16.msra.mxu0 %v1925
      %2068 = vmatprep.subr.bf16.mxu0 %v1924
      %2069 = vmatpush1.bf16.msra.mxu0 %v1923
      %2070 = vmatprep.subr.bf16.mxu0 %v1922
      %2071 = vmatpush1.bf16.msra.mxu0 %v1921
      %2072 = vmatprep.subr.bf16.mxu0 %v1920
      %2073 = vmatpush1.bf16.msra.mxu0 %v1919
      %2074 = vmatprep.subr.bf16.mxu0 %v1918
      %2075 = vmatpush1.bf16.msra.mxu0 %v1917
      %2076 = vmatprep.subr.bf16.mxu0 %v1916
      %2077 = vmatpush1.bf16.msra.mxu0 %v1915
      %2078 = vmatprep.subr.bf16.mxu0 %v1914
      %2079 = vmatpush1.bf16.msra.mxu0 %v1913
      %2080 = vmatprep.subr.bf16.mxu0 %v1944
      %2081 = vmatpush2.bf16.msra.mxu0 %v1943
      %2082 = vmatprep.subr.bf16.mxu0 %v1942
      %2083 = vmatpush2.bf16.msra.mxu0 %v1941
      %2084 = vmatprep.subr.bf16.mxu0 %v1940
      %2085 = vmatpush2.bf16.msra.mxu0 %v1939
      %2086 = vmatprep.subr.bf16.mxu0 %v1938
      %2087 = vmatpush2.bf16.msra.mxu0 %v1937
      %2088 = vmatprep.subr.bf16.mxu0 %v1936
      %2089 = vmatpush2.bf16.msra.mxu0 %v1935
      %2090 = vmatprep.subr.bf16.mxu0 %v1934
      %2091 = vmatpush2.bf16.msra.mxu0 %v1933
      %2092 = vmatprep.subr.bf16.mxu0 %v1932
      %2093 = vmatpush2.bf16.msra.mxu0 %v1931
      %2094 = vmatprep.subr.bf16.mxu0 %v1930
      %2095 = vmatpush2.bf16.msra.mxu0 %v1929
      %2096 = vmatprep.mubr.bf16.mxu0 %v1680
      %2097 = vmatmul.mubr.bf16.gmra.mxu0 %v1679
      %v2098 = vpop.f32.mrf.mxu0
      %v2099 = vadd.f32 %v1630, %v2098
      %v2100 = vpop.f32.mrf.mxu0
      %v2101 = vadd.f32 %v1630, %v2100
      %v2102 = vpop.f32.mrf.mxu0
      %v2103 = vadd.f32 %v1635, %v2102
      %v2104 = vpop.f32.mrf.mxu0
      %v2105 = vadd.f32 %v1635, %v2104
      %2106 = vmatprep.mubr.bf16.mxu0 %v1685
      %2107 = vmatmul.mubr.bf16.gmra.mxu0 %v1684
      %v2108 = vpop.f32.mrf.mxu0
      %v2109 = vadd.f32 %v1640, %v2108
      %v2110 = vpop.f32.mrf.mxu0
      %v2111 = vadd.f32 %v1640, %v2110
      %v2112 = vpop.f32.mrf.mxu0
      %v2113 = vadd.f32 %v1645, %v2112
      %v2114 = vpop.f32.mrf.mxu0
      %v2115 = vadd.f32 %v1645, %v2114
      %2116 = vdwg.mxu0
      %2117 = vmatprep.subr.bf16.mxu0 %v1960
      %2118 = vmatpush1.bf16.msra.mxu0 %v1959
      %2119 = vmatprep.subr.bf16.mxu0 %v1958
      %2120 = vmatpush1.bf16.msra.mxu0 %v1957
      %2121 = vmatprep.subr.bf16.mxu0 %v1956
      %2122 = vmatpush1.bf16.msra.mxu0 %v1955
      %2123 = vmatprep.subr.bf16.mxu0 %v1954
      %2124 = vmatpush1.bf16.msra.mxu0 %v1953
      %2125 = vmatprep.subr.bf16.mxu0 %v1952
      %2126 = vmatpush1.bf16.msra.mxu0 %v1951
      %2127 = vmatprep.subr.bf16.mxu0 %v1950
      %2128 = vmatpush1.bf16.msra.mxu0 %v1949
      %2129 = vmatprep.subr.bf16.mxu0 %v1948
      %2130 = vmatpush1.bf16.msra.mxu0 %v1947
      %2131 = vmatprep.subr.bf16.mxu0 %v1946
      %2132 = vmatpush1.bf16.msra.mxu0 %v1945
      %2133 = vmatprep.subr.bf16.mxu0 %v1976
      %2134 = vmatpush2.bf16.msra.mxu0 %v1975
      %2135 = vmatprep.subr.bf16.mxu0 %v1974
      %2136 = vmatpush2.bf16.msra.mxu0 %v1973
      %2137 = vmatprep.subr.bf16.mxu0 %v1972
      %2138 = vmatpush2.bf16.msra.mxu0 %v1971
      %2139 = vmatprep.subr.bf16.mxu0 %v1970
      %2140 = vmatpush2.bf16.msra.mxu0 %v1969
      %2141 = vmatprep.subr.bf16.mxu0 %v1968
      %2142 = vmatpush2.bf16.msra.mxu0 %v1967
      %2143 = vmatprep.subr.bf16.mxu0 %v1966
      %2144 = vmatpush2.bf16.msra.mxu0 %v1965
      %2145 = vmatprep.subr.bf16.mxu0 %v1964
      %2146 = vmatpush2.bf16.msra.mxu0 %v1963
      %2147 = vmatprep.subr.bf16.mxu0 %v1962
      %2148 = vmatpush2.bf16.msra.mxu0 %v1961
      %2149 = vmatprep.mubr.bf16.mxu0 %v1682
      %2150 = vmatmul.mubr.bf16.gmra.mxu0 %v1681
      %v2151 = vpop.f32.mrf.mxu0
      %v2152 = vadd.f32 %v2099, %v2151
      %v2153 = vpop.f32.mrf.mxu0
      %v2154 = vadd.f32 %v2101, %v2153
      %v2155 = vpop.f32.mrf.mxu0
      %v2156 = vadd.f32 %v2103, %v2155
      %v2157 = vpop.f32.mrf.mxu0
      %v2158 = vadd.f32 %v2105, %v2157
      %2159 = vmatprep.mubr.bf16.mxu0 %v1687
      %2160 = vmatmul.mubr.bf16.gmra.mxu0 %v1686
      %v2161 = vpop.f32.mrf.mxu0
      %v2162 = vadd.f32 %v2109, %v2161
      %v2163 = vpop.f32.mrf.mxu0
      %v2164 = vadd.f32 %v2111, %v2163
      %v2165 = vpop.f32.mrf.mxu0
      %v2166 = vadd.f32 %v2113, %v2165
      %v2167 = vpop.f32.mrf.mxu0
      %v2168 = vadd.f32 %v2115, %v2167
      %2169 = vdwg.mxu0
      %2170 = vmatprep.subr.bf16.mxu0 0
      %2171 = vmatpush1.bf16.msra.mxu0 0
      %2172 = vmatprep.subr.bf16.mxu0 0
      %2173 = vmatpush1.bf16.msra.mxu0 0
      %2174 = vmatprep.subr.bf16.mxu0 0
      %2175 = vmatpush1.bf16.msra.mxu0 0
      %2176 = vmatprep.subr.bf16.mxu0 0
      %2177 = vmatpush1.bf16.msra.mxu0 0
      %2178 = vmatprep.subr.bf16.mxu0 %v1984
      %2179 = vmatpush1.bf16.msra.mxu0 %v1983
      %2180 = vmatprep.subr.bf16.mxu0 %v1982
      %2181 = vmatpush1.bf16.msra.mxu0 %v1981
      %2182 = vmatprep.subr.bf16.mxu0 %v1980
      %2183 = vmatpush1.bf16.msra.mxu0 %v1979
      %2184 = vmatprep.subr.bf16.mxu0 %v1978
      %2185 = vmatpush1.bf16.msra.mxu0 %v1977
      %2186 = vmatprep.subr.bf16.mxu0 0
      %2187 = vmatpush2.bf16.msra.mxu0 0
      %2188 = vmatprep.subr.bf16.mxu0 0
      %2189 = vmatpush2.bf16.msra.mxu0 0
      %2190 = vmatprep.subr.bf16.mxu0 0
      %2191 = vmatpush2.bf16.msra.mxu0 0
      %2192 = vmatprep.subr.bf16.mxu0 0
      %2193 = vmatpush2.bf16.msra.mxu0 0
      %2194 = vmatprep.subr.bf16.mxu0 0
      %2195 = vmatpush2.bf16.msra.mxu0 0
      %2196 = vmatprep.subr.bf16.mxu0 0
      %2197 = vmatpush2.bf16.msra.mxu0 0
      %2198 = vmatprep.subr.bf16.mxu0 0
      %2199 = vmatpush2.bf16.msra.mxu0 0
      %2200 = vmatprep.subr.bf16.mxu0 0
      %2201 = vmatpush2.bf16.msra.mxu0 0
      %2202 = vmatprep.mubr.bf16.mxu0 0
      %2203 = vmatmul.mubr.bf16.gmra.mxu0 %v2059
      %v2204 = vpop.f32.mrf.mxu0
      %v2205 = vadd.f32 %v2152, %v2204
      %v2206 = vpop.f32.mrf.mxu0
      %v2207 = vadd.f32 %v2154, %v2206
      %v2208 = vpop.f32.mrf.mxu0
      %v2209 = vadd.f32 %v2156, %v2208
      %v2210 = vpop.f32.mrf.mxu0
      %v2211 = vadd.f32 %v2158, %v2210
      %2212 = vmatprep.mubr.bf16.mxu0 0
      %2213 = vmatmul.mubr.bf16.gmra.mxu0 %v2062
      %v2214 = vpop.f32.mrf.mxu0
      %v2215 = vadd.f32 %v2162, %v2214
      %v2216 = vpop.f32.mrf.mxu0
      %v2217 = vadd.f32 %v2164, %v2216
      %v2218 = vpop.f32.mrf.mxu0
      %v2219 = vadd.f32 %v2166, %v2218
      %v2220 = vpop.f32.mrf.mxu0
      %v2221 = vadd.f32 %v2168, %v2220
      %2222 = vdwg.mxu0
      %v2223 = vmax.f32 %v2205, 0.0
      %v2224 = vmax.f32 %v2207, 0.0
      %v2225 = vmax.f32 %v2209, 0.0
      %v2226 = vmax.f32 %v2211, 0.0
      %v2227 = vmax.f32 %v2215, 0.0
      %v2228 = vmax.f32 %v2217, 0.0
      %v2229 = vmax.f32 %v2219, 0.0
      %v2230 = vmax.f32 %v2221, 0.0
      %2231 = vrot.lane.b32.xlu0 %v2223, 17
      %v2232 = vpop.permute.xlu0 %2231
      %2233 = vrot.lane.b32.xlu0 %v2225, 17
      %v2234 = vpop.permute.xlu0 %2233
      %2235 = vrot.lane.b32.xlu0 %v2227, 17
      %v2236 = vpop.permute.xlu0 %2235
      %2237 = vrot.lane.b32.xlu0 %v2229, 17
      %v2238 = vpop.permute.xlu0 %2237
      %2239 = vrot.lane.b32.xlu0 %v2224, 17
      %v2240 = vpop.permute.xlu0 %2239
      %2241 = vrot.lane.b32.xlu0 %v2226, 17
      %v2242 = vpop.permute.xlu0 %2241
      %2243 = vrot.lane.b32.xlu0 %v2228, 17
      %v2244 = vpop.permute.xlu0 %2243
      %2245 = vrot.lane.b32.xlu0 %v2230, 17
      %v2246 = vpop.permute.xlu0 %2245
      %v2247 = vsel %vm444, %v2232, %v2240
      %v2248 = vsel %vm444, %v2234, %v2242
      %v2249 = vsel %vm444, %v2236, %v2244
      %v2250 = vsel %vm444, %v2238, %v2246
      %v2251 = vsel %vm444, %v2240, %v2232
      %v2252 = vsel %vm444, %v2242, %v2234
      %v2253 = vsel %vm444, %v2244, %v2236
      %v2254 = vsel %vm444, %v2246, %v2238
      %v2255 = vld [vmem:[%s2] ss:$8 sm:$0x3]
      %v2257 = vlaneseq
      %v2258 = vshrl.u32 %v2257, 7
      %v2259 = vsub.s32 0, %v2258
      %v2260 = vrot.slane %v2255, %v2259
      %v2261 = vlaneseq
      %v2262 = vshrl.u32 %v2261, 7
      %v2263 = vsub.s32 1, %v2262
      %v2264 = vrot.slane %v2255, %v2263
      %v2267 = vmul.f32 %v2251, %v2260
      %v2268 = vmul.f32 %v2247, %v2264
      %v2269 = vmul.f32 %v2252, %v2260
      %v2270 = vmul.f32 %v2248, %v2264
      %v2271 = vmul.f32 %v2253, %v2260
      %v2272 = vmul.f32 %v2249, %v2264
      %v2273 = vmul.f32 %v2254, %v2260
      %v2274 = vmul.f32 %v2250, %v2264
      %v2275 = vpack.c.bf16 %v2269, %v2267
      %v2276 = vpack.c.bf16 %v2270, %v2268
      %v2277 = vpack.c.bf16 %v2273, %v2271
      %v2278 = vpack.c.bf16 %v2274, %v2272
      %v2283 = vunpack.c.l.b16 %v2275
      %v2284 = vunpack.c.l.b16 %v2276
      %v2285 = vunpack.c.h.b16 %v2275
      %v2286 = vunpack.c.h.b16 %v2276
      %v2287 = vunpack.c.l.b16 %v2277
      %v2288 = vunpack.c.l.b16 %v2278
      %v2289 = vunpack.c.h.b16 %v2277
      %v2290 = vunpack.c.h.b16 %v2278
      %v2291 = vpack.c.b16 %v2284, %v2283
      %v2292 = vpack.c.b16 %v2286, %v2285
      %v2293 = vpack.c.b16 %v2288, %v2287
      %v2294 = vpack.c.b16 %v2290, %v2289
      %2299 = vst [vmem:[#allocation2] sm:$0xff] %v2291
      %2300 = vst [vmem:[#allocation2 + $0x8] sm:$0xff] %v2292
      %2301 = vst [vmem:[#allocation2 + $0x10] sm:$0xff] %v2293
      %2302 = vst [vmem:[#allocation2 + $0x18] sm:$0xff] %v2294
      %2303 = vrot.lane.b32.xlu0 %v2223, 16
      %v2304 = vpop.permute.xlu0 %2303
      %2305 = vrot.lane.b32.xlu0 %v2225, 16
      %v2306 = vpop.permute.xlu0 %2305
      %2307 = vrot.lane.b32.xlu0 %v2227, 16
      %v2308 = vpop.permute.xlu0 %2307
      %2309 = vrot.lane.b32.xlu0 %v2229, 16
      %v2310 = vpop.permute.xlu0 %2309
      %2311 = vrot.lane.b32.xlu0 %v2224, 16
      %v2312 = vpop.permute.xlu0 %2311
      %2313 = vrot.lane.b32.xlu0 %v2226, 16
      %v2314 = vpop.permute.xlu0 %2313
      %2315 = vrot.lane.b32.xlu0 %v2228, 16
      %v2316 = vpop.permute.xlu0 %2315
      %2317 = vrot.lane.b32.xlu0 %v2230, 16
      %v2318 = vpop.permute.xlu0 %2317
      %v2319 = vsel %vm577, %v2304, %v2312
      %v2320 = vsel %vm577, %v2306, %v2314
      %v2321 = vsel %vm577, %v2308, %v2316
      %v2322 = vsel %vm577, %v2310, %v2318
      %v2323 = vsel %vm577, %v2312, %v2304
      %v2324 = vsel %vm577, %v2314, %v2306
      %v2325 = vsel %vm577, %v2316, %v2308
      %v2326 = vsel %vm577, %v2318, %v2310
      %v2327 = vld [vmem:[%s594] ss:$8 sm:$0x3]
      %v2329 = vlaneseq
      %v2330 = vshrl.u32 %v2329, 7
      %v2331 = vsub.s32 0, %v2330
      %v2332 = vrot.slane %v2327, %v2331
      %v2333 = vlaneseq
      %v2334 = vshrl.u32 %v2333, 7
      %v2335 = vsub.s32 1, %v2334
      %v2336 = vrot.slane %v2327, %v2335
      %v2339 = vmul.f32 %v2323, %v2332
      %v2340 = vmul.f32 %v2319, %v2336
      %v2341 = vmul.f32 %v2324, %v2332
      %v2342 = vmul.f32 %v2320, %v2336
      %v2343 = vmul.f32 %v2325, %v2332
      %v2344 = vmul.f32 %v2321, %v2336
      %v2345 = vmul.f32 %v2326, %v2332
      %v2346 = vmul.f32 %v2322, %v2336
      %v2347 = vpack.c.bf16 %v2341, %v2339
      %v2348 = vpack.c.bf16 %v2342, %v2340
      %v2349 = vpack.c.bf16 %v2345, %v2343
      %v2350 = vpack.c.bf16 %v2346, %v2344
      %v2355 = vunpack.c.l.b16 %v2347
      %v2356 = vunpack.c.l.b16 %v2348
      %v2357 = vunpack.c.h.b16 %v2347
      %v2358 = vunpack.c.h.b16 %v2348
      %v2359 = vunpack.c.l.b16 %v2349
      %v2360 = vunpack.c.l.b16 %v2350
      %v2361 = vunpack.c.h.b16 %v2349
      %v2362 = vunpack.c.h.b16 %v2350
      %v2363 = vpack.c.b16 %v2356, %v2355
      %v2364 = vpack.c.b16 %v2358, %v2357
      %v2365 = vpack.c.b16 %v2360, %v2359
      %v2366 = vpack.c.b16 %v2362, %v2361
      %2371 = vst [vmem:[#allocation2 + $0x20] sm:$0xff] %v2363
      %2372 = vst [vmem:[#allocation2 + $0x28] sm:$0xff] %v2364
      %2373 = vst [vmem:[#allocation2 + $0x30] sm:$0xff] %v2365
      %2374 = vst [vmem:[#allocation2 + $0x38] sm:$0xff] %v2366
      %2375 = vrot.lane.b32.xlu0 %v2223, 15
      %v2376 = vpop.permute.xlu0 %2375
      %2377 = vrot.lane.b32.xlu0 %v2225, 15
      %v2378 = vpop.permute.xlu0 %2377
      %2379 = vrot.lane.b32.xlu0 %v2227, 15
      %v2380 = vpop.permute.xlu0 %2379
      %2381 = vrot.lane.b32.xlu0 %v2229, 15
      %v2382 = vpop.permute.xlu0 %2381
      %2383 = vrot.lane.b32.xlu0 %v2224, 15
      %v2384 = vpop.permute.xlu0 %2383
      %2385 = vrot.lane.b32.xlu0 %v2226, 15
      %v2386 = vpop.permute.xlu0 %2385
      %2387 = vrot.lane.b32.xlu0 %v2228, 15
      %v2388 = vpop.permute.xlu0 %2387
      %2389 = vrot.lane.b32.xlu0 %v2230, 15
      %v2390 = vpop.permute.xlu0 %2389
      %v2391 = vsel %vm711, %v2376, %v2384
      %v2392 = vsel %vm711, %v2378, %v2386
      %v2393 = vsel %vm711, %v2380, %v2388
      %v2394 = vsel %vm711, %v2382, %v2390
      %v2395 = vsel %vm711, %v2384, %v2376
      %v2396 = vsel %vm711, %v2386, %v2378
      %v2397 = vsel %vm711, %v2388, %v2380
      %v2398 = vsel %vm711, %v2390, %v2382
      %v2399 = vld [vmem:[%s728] ss:$8 sm:$0x3]
      %v2401 = vlaneseq
      %v2402 = vshrl.u32 %v2401, 7
      %v2403 = vsub.s32 0, %v2402
      %v2404 = vrot.slane %v2399, %v2403
      %v2405 = vlaneseq
      %v2406 = vshrl.u32 %v2405, 7
      %v2407 = vsub.s32 1, %v2406
      %v2408 = vrot.slane %v2399, %v2407
      %v2411 = vmul.f32 %v2395, %v2404
      %v2412 = vmul.f32 %v2391, %v2408
      %v2413 = vmul.f32 %v2396, %v2404
      %v2414 = vmul.f32 %v2392, %v2408
      %v2415 = vmul.f32 %v2397, %v2404
      %v2416 = vmul.f32 %v2393, %v2408
      %v2417 = vmul.f32 %v2398, %v2404
      %v2418 = vmul.f32 %v2394, %v2408
      %v2419 = vpack.c.bf16 %v2413, %v2411
      %v2420 = vpack.c.bf16 %v2414, %v2412
      %v2421 = vpack.c.bf16 %v2417, %v2415
      %v2422 = vpack.c.bf16 %v2418, %v2416
      %v2427 = vunpack.c.l.b16 %v2419
      %v2428 = vunpack.c.l.b16 %v2420
      %v2429 = vunpack.c.h.b16 %v2419
      %v2430 = vunpack.c.h.b16 %v2420
      %v2431 = vunpack.c.l.b16 %v2421
      %v2432 = vunpack.c.l.b16 %v2422
      %v2433 = vunpack.c.h.b16 %v2421
      %v2434 = vunpack.c.h.b16 %v2422
      %v2435 = vpack.c.b16 %v2428, %v2427
      %v2436 = vpack.c.b16 %v2430, %v2429
      %v2437 = vpack.c.b16 %v2432, %v2431
      %v2438 = vpack.c.b16 %v2434, %v2433
      %2443 = vst [vmem:[#allocation2 + $0x40] sm:$0xff] %v2435
      %2444 = vst [vmem:[#allocation2 + $0x48] sm:$0xff] %v2436
      %2445 = vst [vmem:[#allocation2 + $0x50] sm:$0xff] %v2437
      %2446 = vst [vmem:[#allocation2 + $0x58] sm:$0xff] %v2438
      %2447 = vrot.lane.b32.xlu0 %v2223, 1
      %v2448 = vpop.permute.xlu0 %2447
      %2449 = vrot.lane.b32.xlu0 %v2225, 1
      %v2450 = vpop.permute.xlu0 %2449
      %2451 = vrot.lane.b32.xlu0 %v2227, 1
      %v2452 = vpop.permute.xlu0 %2451
      %2453 = vrot.lane.b32.xlu0 %v2229, 1
      %v2454 = vpop.permute.xlu0 %2453
      %2455 = vrot.lane.b32.xlu0 %v2224, 1
      %v2456 = vpop.permute.xlu0 %2455
      %2457 = vrot.lane.b32.xlu0 %v2226, 1
      %v2458 = vpop.permute.xlu0 %2457
      %2459 = vrot.lane.b32.xlu0 %v2228, 1
      %v2460 = vpop.permute.xlu0 %2459
      %2461 = vrot.lane.b32.xlu0 %v2230, 1
      %v2462 = vpop.permute.xlu0 %2461
      %v2463 = vsel %vm845, %v2448, %v2456
      %v2464 = vsel %vm845, %v2450, %v2458
      %v2465 = vsel %vm845, %v2452, %v2460
      %v2466 = vsel %vm845, %v2454, %v2462
      %v2467 = vsel %vm845, %v2456, %v2448
      %v2468 = vsel %vm845, %v2458, %v2450
      %v2469 = vsel %vm845, %v2460, %v2452
      %v2470 = vsel %vm845, %v2462, %v2454
      %v2471 = vld [vmem:[%s862] ss:$8 sm:$0x3]
      %v2473 = vlaneseq
      %v2474 = vshrl.u32 %v2473, 7
      %v2475 = vsub.s32 0, %v2474
      %v2476 = vrot.slane %v2471, %v2475
      %v2477 = vlaneseq
      %v2478 = vshrl.u32 %v2477, 7
      %v2479 = vsub.s32 1, %v2478
      %v2480 = vrot.slane %v2471, %v2479
      %v2483 = vmul.f32 %v2467, %v2476
      %v2484 = vmul.f32 %v2463, %v2480
      %v2485 = vmul.f32 %v2468, %v2476
      %v2486 = vmul.f32 %v2464, %v2480
      %v2487 = vmul.f32 %v2469, %v2476
      %v2488 = vmul.f32 %v2465, %v2480
      %v2489 = vmul.f32 %v2470, %v2476
      %v2490 = vmul.f32 %v2466, %v2480
      %v2491 = vpack.c.bf16 %v2485, %v2483
      %v2492 = vpack.c.bf16 %v2486, %v2484
      %v2493 = vpack.c.bf16 %v2489, %v2487
      %v2494 = vpack.c.bf16 %v2490, %v2488
      %v2499 = vunpack.c.l.b16 %v2491
      %v2500 = vunpack.c.l.b16 %v2492
      %v2501 = vunpack.c.h.b16 %v2491
      %v2502 = vunpack.c.h.b16 %v2492
      %v2503 = vunpack.c.l.b16 %v2493
      %v2504 = vunpack.c.l.b16 %v2494
      %v2505 = vunpack.c.h.b16 %v2493
      %v2506 = vunpack.c.h.b16 %v2494
      %v2507 = vpack.c.b16 %v2500, %v2499
      %v2508 = vpack.c.b16 %v2502, %v2501
      %v2509 = vpack.c.b16 %v2504, %v2503
      %v2510 = vpack.c.b16 %v2506, %v2505
      %2515 = vst [vmem:[#allocation2 + $0x60] sm:$0xff] %v2507
      %2516 = vst [vmem:[#allocation2 + $0x68] sm:$0xff] %v2508
      %2517 = vst [vmem:[#allocation2 + $0x70] sm:$0xff] %v2509
      %2518 = vst [vmem:[#allocation2 + $0x78] sm:$0xff] %v2510
      %v2519 = vpack.c.bf16 %v2225, %v2223
      %v2520 = vpack.c.bf16 %v2226, %v2224
      %v2521 = vpack.c.bf16 %v2229, %v2227
      %v2522 = vpack.c.bf16 %v2230, %v2228
      %v2527 = vunpack.c.l.b16 %v2519
      %v2528 = vunpack.c.l.b16 %v2520
      %v2529 = vunpack.c.h.b16 %v2519
      %v2530 = vunpack.c.h.b16 %v2520
      %v2531 = vunpack.c.l.b16 %v2521
      %v2532 = vunpack.c.l.b16 %v2522
      %v2533 = vunpack.c.h.b16 %v2521
      %v2534 = vunpack.c.h.b16 %v2522
      %v2535 = vpack.c.b16 %v2528, %v2527
      %v2536 = vpack.c.b16 %v2530, %v2529
      %v2537 = vpack.c.b16 %v2532, %v2531
      %v2538 = vpack.c.b16 %v2534, %v2533
      %2543 = vst [vmem:[#allocation2 + $0x80] sm:$0xff] %v2535
      %2544 = vst [vmem:[#allocation2 + $0x88] sm:$0xff] %v2536
      %2545 = vst [vmem:[#allocation2 + $0x90] sm:$0xff] %v2537
      %2546 = vst [vmem:[#allocation2 + $0x98] sm:$0xff] %v2538
      %2547 = vrot.lane.b32.xlu0 %v2223, 127
      %v2548 = vpop.permute.xlu0 %2547
      %2549 = vrot.lane.b32.xlu0 %v2225, 127
      %v2550 = vpop.permute.xlu0 %2549
      %2551 = vrot.lane.b32.xlu0 %v2227, 127
      %v2552 = vpop.permute.xlu0 %2551
      %2553 = vrot.lane.b32.xlu0 %v2229, 127
      %v2554 = vpop.permute.xlu0 %2553
      %2555 = vrot.lane.b32.xlu0 %v2224, 127
      %v2556 = vpop.permute.xlu0 %2555
      %2557 = vrot.lane.b32.xlu0 %v2226, 127
      %v2558 = vpop.permute.xlu0 %2557
      %2559 = vrot.lane.b32.xlu0 %v2228, 127
      %v2560 = vpop.permute.xlu0 %2559
      %2561 = vrot.lane.b32.xlu0 %v2230, 127
      %v2562 = vpop.permute.xlu0 %2561
      %v2563 = vsel %vm1035, %v2548, %v2556
      %v2564 = vsel %vm1035, %v2550, %v2558
      %v2565 = vsel %vm1035, %v2552, %v2560
      %v2566 = vsel %vm1035, %v2554, %v2562
      %v2567 = vsel %vm1035, %v2556, %v2548
      %v2568 = vsel %vm1035, %v2558, %v2550
      %v2569 = vsel %vm1035, %v2560, %v2552
      %v2570 = vsel %vm1035, %v2562, %v2554
      %v2571 = vld [vmem:[%s1052] ss:$8 sm:$0x3]
      %v2573 = vlaneseq
      %v2574 = vshrl.u32 %v2573, 7
      %v2575 = vsub.s32 0, %v2574
      %v2576 = vrot.slane %v2571, %v2575
      %v2577 = vlaneseq
      %v2578 = vshrl.u32 %v2577, 7
      %v2579 = vsub.s32 1, %v2578
      %v2580 = vrot.slane %v2571, %v2579
      %v2583 = vmul.f32 %v2563, %v2576
      %v2584 = vmul.f32 %v2567, %v2580
      %v2585 = vmul.f32 %v2564, %v2576
      %v2586 = vmul.f32 %v2568, %v2580
      %v2587 = vmul.f32 %v2565, %v2576
      %v2588 = vmul.f32 %v2569, %v2580
      %v2589 = vmul.f32 %v2566, %v2576
      %v2590 = vmul.f32 %v2570, %v2580
      %v2591 = vpack.c.bf16 %v2585, %v2583
      %v2592 = vpack.c.bf16 %v2586, %v2584
      %v2593 = vpack.c.bf16 %v2589, %v2587
      %v2594 = vpack.c.bf16 %v2590, %v2588
      %v2599 = vunpack.c.l.b16 %v2591
      %v2600 = vunpack.c.l.b16 %v2592
      %v2601 = vunpack.c.h.b16 %v2591
      %v2602 = vunpack.c.h.b16 %v2592
      %v2603 = vunpack.c.l.b16 %v2593
      %v2604 = vunpack.c.l.b16 %v2594
      %v2605 = vunpack.c.h.b16 %v2593
      %v2606 = vunpack.c.h.b16 %v2594
      %v2607 = vpack.c.b16 %v2600, %v2599
      %v2608 = vpack.c.b16 %v2602, %v2601
      %v2609 = vpack.c.b16 %v2604, %v2603
      %v2610 = vpack.c.b16 %v2606, %v2605
      %2615 = vst [vmem:[#allocation2 + $0xa0] sm:$0xff] %v2607
      %2616 = vst [vmem:[#allocation2 + $0xa8] sm:$0xff] %v2608
      %2617 = vst [vmem:[#allocation2 + $0xb0] sm:$0xff] %v2609
      %2618 = vst [vmem:[#allocation2 + $0xb8] sm:$0xff] %v2610
      %2619 = vrot.lane.b32.xlu0 %v2223, 113
      %v2620 = vpop.permute.xlu0 %2619
      %2621 = vrot.lane.b32.xlu0 %v2225, 113
      %v2622 = vpop.permute.xlu0 %2621
      %2623 = vrot.lane.b32.xlu0 %v2227, 113
      %v2624 = vpop.permute.xlu0 %2623
      %2625 = vrot.lane.b32.xlu0 %v2229, 113
      %v2626 = vpop.permute.xlu0 %2625
      %2627 = vrot.lane.b32.xlu0 %v2224, 113
      %v2628 = vpop.permute.xlu0 %2627
      %2629 = vrot.lane.b32.xlu0 %v2226, 113
      %v2630 = vpop.permute.xlu0 %2629
      %2631 = vrot.lane.b32.xlu0 %v2228, 113
      %v2632 = vpop.permute.xlu0 %2631
      %2633 = vrot.lane.b32.xlu0 %v2230, 113
      %v2634 = vpop.permute.xlu0 %2633
      %v2635 = vsel %vm1169, %v2620, %v2628
      %v2636 = vsel %vm1169, %v2622, %v2630
      %v2637 = vsel %vm1169, %v2624, %v2632
      %v2638 = vsel %vm1169, %v2626, %v2634
      %v2639 = vsel %vm1169, %v2628, %v2620
      %v2640 = vsel %vm1169, %v2630, %v2622
      %v2641 = vsel %vm1169, %v2632, %v2624
      %v2642 = vsel %vm1169, %v2634, %v2626
      %v2643 = vld [vmem:[%s1186] ss:$8 sm:$0x3]
      %v2645 = vlaneseq
      %v2646 = vshrl.u32 %v2645, 7
      %v2647 = vsub.s32 0, %v2646
      %v2648 = vrot.slane %v2643, %v2647
      %v2649 = vlaneseq
      %v2650 = vshrl.u32 %v2649, 7
      %v2651 = vsub.s32 1, %v2650
      %v2652 = vrot.slane %v2643, %v2651
      %v2655 = vmul.f32 %v2635, %v2648
      %v2656 = vmul.f32 %v2639, %v2652
      %v2657 = vmul.f32 %v2636, %v2648
      %v2658 = vmul.f32 %v2640, %v2652
      %v2659 = vmul.f32 %v2637, %v2648
      %v2660 = vmul.f32 %v2641, %v2652
      %v2661 = vmul.f32 %v2638, %v2648
      %v2662 = vmul.f32 %v2642, %v2652
      %v2663 = vpack.c.bf16 %v2657, %v2655
      %v2664 = vpack.c.bf16 %v2658, %v2656
      %v2665 = vpack.c.bf16 %v2661, %v2659
      %v2666 = vpack.c.bf16 %v2662, %v2660
      %v2671 = vunpack.c.l.b16 %v2663
      %v2672 = vunpack.c.l.b16 %v2664
      %v2673 = vunpack.c.h.b16 %v2663
      %v2674 = vunpack.c.h.b16 %v2664
      %v2675 = vunpack.c.l.b16 %v2665
      %v2676 = vunpack.c.l.b16 %v2666
      %v2677 = vunpack.c.h.b16 %v2665
      %v2678 = vunpack.c.h.b16 %v2666
      %v2679 = vpack.c.b16 %v2672, %v2671
      %v2680 = vpack.c.b16 %v2674, %v2673
      %v2681 = vpack.c.b16 %v2676, %v2675
      %v2682 = vpack.c.b16 %v2678, %v2677
      %2687 = vst [vmem:[#allocation2 + $0xc0] sm:$0xff] %v2679
      %2688 = vst [vmem:[#allocation2 + $0xc8] sm:$0xff] %v2680
      %2689 = vst [vmem:[#allocation2 + $0xd0] sm:$0xff] %v2681
      %2690 = vst [vmem:[#allocation2 + $0xd8] sm:$0xff] %v2682
      %2691 = vrot.lane.b32.xlu0 %v2223, 112
      %v2692 = vpop.permute.xlu0 %2691
      %2693 = vrot.lane.b32.xlu0 %v2225, 112
      %v2694 = vpop.permute.xlu0 %2693
      %2695 = vrot.lane.b32.xlu0 %v2227, 112
      %v2696 = vpop.permute.xlu0 %2695
      %2697 = vrot.lane.b32.xlu0 %v2229, 112
      %v2698 = vpop.permute.xlu0 %2697
      %2699 = vrot.lane.b32.xlu0 %v2224, 112
      %v2700 = vpop.permute.xlu0 %2699
      %2701 = vrot.lane.b32.xlu0 %v2226, 112
      %v2702 = vpop.permute.xlu0 %2701
      %2703 = vrot.lane.b32.xlu0 %v2228, 112
      %v2704 = vpop.permute.xlu0 %2703
      %2705 = vrot.lane.b32.xlu0 %v2230, 112
      %v2706 = vpop.permute.xlu0 %2705
      %v2707 = vsel %vm1303, %v2692, %v2700
      %v2708 = vsel %vm1303, %v2694, %v2702
      %v2709 = vsel %vm1303, %v2696, %v2704
      %v2710 = vsel %vm1303, %v2698, %v2706
      %v2711 = vsel %vm1303, %v2700, %v2692
      %v2712 = vsel %vm1303, %v2702, %v2694
      %v2713 = vsel %vm1303, %v2704, %v2696
      %v2714 = vsel %vm1303, %v2706, %v2698
      %v2715 = vld [vmem:[%s1320] ss:$8 sm:$0x3]
      %v2717 = vlaneseq
      %v2718 = vshrl.u32 %v2717, 7
      %v2719 = vsub.s32 0, %v2718
      %v2720 = vrot.slane %v2715, %v2719
      %v2721 = vlaneseq
      %v2722 = vshrl.u32 %v2721, 7
      %v2723 = vsub.s32 1, %v2722
      %v2724 = vrot.slane %v2715, %v2723
      %v2727 = vmul.f32 %v2707, %v2720
      %v2728 = vmul.f32 %v2711, %v2724
      %v2729 = vmul.f32 %v2708, %v2720
      %v2730 = vmul.f32 %v2712, %v2724
      %v2731 = vmul.f32 %v2709, %v2720
      %v2732 = vmul.f32 %v2713, %v2724
      %v2733 = vmul.f32 %v2710, %v2720
      %v2734 = vmul.f32 %v2714, %v2724
      %v2735 = vpack.c.bf16 %v2729, %v2727
      %v2736 = vpack.c.bf16 %v2730, %v2728
      %v2737 = vpack.c.bf16 %v2733, %v2731
      %v2738 = vpack.c.bf16 %v2734, %v2732
      %v2743 = vunpack.c.l.b16 %v2735
      %v2744 = vunpack.c.l.b16 %v2736
      %v2745 = vunpack.c.h.b16 %v2735
      %v2746 = vunpack.c.h.b16 %v2736
      %v2747 = vunpack.c.l.b16 %v2737
      %v2748 = vunpack.c.l.b16 %v2738
      %v2749 = vunpack.c.h.b16 %v2737
      %v2750 = vunpack.c.h.b16 %v2738
      %v2751 = vpack.c.b16 %v2744, %v2743
      %v2752 = vpack.c.b16 %v2746, %v2745
      %v2753 = vpack.c.b16 %v2748, %v2747
      %v2754 = vpack.c.b16 %v2750, %v2749
      %2759 = vst [vmem:[#allocation2 + $0xe0] sm:$0xff] %v2751
      %2760 = vst [vmem:[#allocation2 + $0xe8] sm:$0xff] %v2752
      %2761 = vst [vmem:[#allocation2 + $0xf0] sm:$0xff] %v2753
      %2762 = vst [vmem:[#allocation2 + $0xf8] sm:$0xff] %v2754
      %2763 = vrot.lane.b32.xlu0 %v2223, 111
      %v2764 = vpop.permute.xlu0 %2763
      %2765 = vrot.lane.b32.xlu0 %v2225, 111
      %v2766 = vpop.permute.xlu0 %2765
      %2767 = vrot.lane.b32.xlu0 %v2227, 111
      %v2768 = vpop.permute.xlu0 %2767
      %2769 = vrot.lane.b32.xlu0 %v2229, 111
      %v2770 = vpop.permute.xlu0 %2769
      %2771 = vrot.lane.b32.xlu0 %v2224, 111
      %v2772 = vpop.permute.xlu0 %2771
      %2773 = vrot.lane.b32.xlu0 %v2226, 111
      %v2774 = vpop.permute.xlu0 %2773
      %2775 = vrot.lane.b32.xlu0 %v2228, 111
      %v2776 = vpop.permute.xlu0 %2775
      %2777 = vrot.lane.b32.xlu0 %v2230, 111
      %v2778 = vpop.permute.xlu0 %2777
      %v2779 = vsel %vm1437, %v2764, %v2772
      %v2780 = vsel %vm1437, %v2766, %v2774
      %v2781 = vsel %vm1437, %v2768, %v2776
      %v2782 = vsel %vm1437, %v2770, %v2778
      %v2783 = vsel %vm1437, %v2772, %v2764
      %v2784 = vsel %vm1437, %v2774, %v2766
      %v2785 = vsel %vm1437, %v2776, %v2768
      %v2786 = vsel %vm1437, %v2778, %v2770
      %v2787 = vld [vmem:[%s1454] ss:$8 sm:$0x3]
      %v2789 = vlaneseq
      %v2790 = vshrl.u32 %v2789, 7
      %v2791 = vsub.s32 0, %v2790
      %v2792 = vrot.slane %v2787, %v2791
      %v2793 = vlaneseq
      %v2794 = vshrl.u32 %v2793, 7
      %v2795 = vsub.s32 1, %v2794
      %v2796 = vrot.slane %v2787, %v2795
      %v2799 = vmul.f32 %v2779, %v2792
      %v2800 = vmul.f32 %v2783, %v2796
      %v2801 = vmul.f32 %v2780, %v2792
      %v2802 = vmul.f32 %v2784, %v2796
      %v2803 = vmul.f32 %v2781, %v2792
      %v2804 = vmul.f32 %v2785, %v2796
      %v2805 = vmul.f32 %v2782, %v2792
      %v2806 = vmul.f32 %v2786, %v2796
      %v2807 = vpack.c.bf16 %v2801, %v2799
      %v2808 = vpack.c.bf16 %v2802, %v2800
      %v2809 = vpack.c.bf16 %v2805, %v2803
      %v2810 = vpack.c.bf16 %v2806, %v2804
      %v2815 = vunpack.c.l.b16 %v2807
      %v2816 = vunpack.c.l.b16 %v2808
      %v2817 = vunpack.c.h.b16 %v2807
      %v2818 = vunpack.c.h.b16 %v2808
      %v2819 = vunpack.c.l.b16 %v2809
      %v2820 = vunpack.c.l.b16 %v2810
      %v2821 = vunpack.c.h.b16 %v2809
      %v2822 = vunpack.c.h.b16 %v2810
      %v2823 = vpack.c.b16 %v2816, %v2815
      %v2824 = vpack.c.b16 %v2818, %v2817
      %v2825 = vpack.c.b16 %v2820, %v2819
      %v2826 = vpack.c.b16 %v2822, %v2821
      %2831 = vst [vmem:[#allocation2 + $0x100] sm:$0xff] %v2823
      %2832 = vst [vmem:[#allocation2 + $0x108] sm:$0xff] %v2824
      %2833 = vst [vmem:[#allocation2 + $0x110] sm:$0xff] %v2825
      %2834 = vst [vmem:[#allocation2 + $0x118] sm:$0xff] %v2826
      %v2835 = vld [vmem:[%s5] sm:$0xff]
      %v2836 = vld [vmem:[%s5 + $0x8] sm:$0xf]
      %v2837 = vld [vmem:[%s5 + $0xc] sm:$0xff]
      %v2838 = vld [vmem:[%s5 + $0x14] sm:$0xf]
      %v2839 = vld [vmem:[%s5 + $0x18] sm:$0xff]
      %v2840 = vld [vmem:[%s5 + $0x20] sm:$0xf]
      %v2841 = vld [vmem:[%s5 + $0x24] sm:$0xff]
      %v2842 = vld [vmem:[%s5 + $0x2c] sm:$0xf]
      %v2843 = vld [vmem:[#allocation2] sm:$0xff]
      %v2844 = vld [vmem:[#allocation2 + $0x8] sm:$0xff]
      %v2845 = vld [vmem:[#allocation2 + $0x10] sm:$0xff]
      %v2846 = vld [vmem:[#allocation2 + $0x18] sm:$0xff]
      %v2847 = vld [vmem:[#allocation2 + $0x20] sm:$0xff]
      %v2848 = vld [vmem:[#allocation2 + $0x28] sm:$0xff]
      %v2849 = vld [vmem:[#allocation2 + $0x30] sm:$0xff]
      %v2850 = vld [vmem:[#allocation2 + $0x38] sm:$0xff]
      %v2851 = vld [vmem:[#allocation2 + $0x40] sm:$0xff]
      %v2852 = vld [vmem:[#allocation2 + $0x48] sm:$0xff]
      %v2853 = vld [vmem:[#allocation2 + $0x50] sm:$0xff]
      %v2854 = vld [vmem:[#allocation2 + $0x58] sm:$0xff]
      %v2855 = vld [vmem:[#allocation2 + $0x60] sm:$0xff]
      %v2856 = vld [vmem:[#allocation2 + $0x68] sm:$0xff]
      %v2857 = vld [vmem:[#allocation2 + $0x70] sm:$0xff]
      %v2858 = vld [vmem:[#allocation2 + $0x78] sm:$0xff]
      %v2859 = vld [vmem:[#allocation2 + $0x80] sm:$0xff]
      %v2860 = vld [vmem:[#allocation2 + $0x88] sm:$0xff]
      %v2861 = vld [vmem:[#allocation2 + $0x90] sm:$0xff]
      %v2862 = vld [vmem:[#allocation2 + $0x98] sm:$0xff]
      %v2863 = vld [vmem:[#allocation2 + $0xa0] sm:$0xff]
      %v2864 = vld [vmem:[#allocation2 + $0xa8] sm:$0xff]
      %v2865 = vld [vmem:[#allocation2 + $0xb0] sm:$0xff]
      %v2866 = vld [vmem:[#allocation2 + $0xb8] sm:$0xff]
      %v2867 = vld [vmem:[#allocation2 + $0xc0] sm:$0xff]
      %v2868 = vld [vmem:[#allocation2 + $0xc8] sm:$0xff]
      %v2869 = vld [vmem:[#allocation2 + $0xd0] sm:$0xff]
      %v2870 = vld [vmem:[#allocation2 + $0xd8] sm:$0xff]
      %v2871 = vld [vmem:[#allocation2 + $0xe0] sm:$0xff]
      %v2872 = vld [vmem:[#allocation2 + $0xe8] sm:$0xff]
      %v2873 = vld [vmem:[#allocation2 + $0xf0] sm:$0xff]
      %v2874 = vld [vmem:[#allocation2 + $0xf8] sm:$0xff]
      %v2875 = vld [vmem:[#allocation2 + $0x100] sm:$0xff]
      %v2876 = vld [vmem:[#allocation2 + $0x108] sm:$0xff]
      %v2877 = vld [vmem:[#allocation2 + $0x110] sm:$0xff]
      %v2878 = vld [vmem:[#allocation2 + $0x118] sm:$0xff]
      %v2879 = vld [vmem:[%s6] sm:$0xff]
      %v2880 = vld [vmem:[%s6 + $0x8] sm:$0xff]
      %v2881 = vld [vmem:[%s6 + $0x10] sm:$0xff]
      %v2882 = vld [vmem:[%s6 + $0x18] sm:$0xff]
      %2884 = vset.pattern.permute.xlu0 0
      %2885 = vperm.xlu0 %2884, %v2879
      %v2886 = vpop.permute.xlu0 %2885
      %2889 = vset.pattern.permute.xlu0 0
      %2890 = vperm.xlu0 %2889, %v2880
      %v2891 = vpop.permute.xlu0 %2890
      %2894 = vset.pattern.permute.xlu0 0
      %2895 = vperm.xlu0 %2894, %v2881
      %v2896 = vpop.permute.xlu0 %2895
      %2899 = vset.pattern.permute.xlu0 0
      %2900 = vperm.xlu0 %2899, %v2882
      %v2901 = vpop.permute.xlu0 %2900
      %v2911 = vunpack.c.l.b16 %v2835
      %v2912 = vunpack.c.h.b16 %v2835
      %v2913 = vunpack.c.l.b16 %v2836
      %v2914 = vunpack.c.l.b16 %v2837
      %v2915 = vunpack.c.h.b16 %v2837
      %v2916 = vunpack.c.l.b16 %v2838
      %v2917 = vunpack.c.l.b16 %v2839
      %v2918 = vunpack.c.h.b16 %v2839
      %v2919 = vunpack.c.l.b16 %v2840
      %v2920 = vunpack.c.l.b16 %v2841
      %v2921 = vunpack.c.h.b16 %v2841
      %v2922 = vunpack.c.l.b16 %v2842
      %v2923 = vpack.c.b16 %v2914, %v2911
      %v2924 = vpack.c.b16 %v2915, %v2912
      %v2925 = vpack.c.b16 %v2916, %v2913
      %v2926 = vpack.c.b16 %v2920, %v2917
      %v2927 = vpack.c.b16 %v2921, %v2918
      %v2928 = vpack.c.b16 %v2922, %v2919
      %v2969 = vunpack.c.l.b16 %v2843
      %v2970 = vunpack.c.h.b16 %v2843
      %v2971 = vunpack.c.l.b16 %v2844
      %v2972 = vunpack.c.h.b16 %v2844
      %v2973 = vunpack.c.l.b16 %v2845
      %v2974 = vunpack.c.h.b16 %v2845
      %v2975 = vunpack.c.l.b16 %v2846
      %v2976 = vunpack.c.h.b16 %v2846
      %v2977 = vunpack.c.l.b16 %v2847
      %v2978 = vunpack.c.h.b16 %v2847
      %v2979 = vunpack.c.l.b16 %v2848
      %v2980 = vunpack.c.h.b16 %v2848
      %v2981 = vunpack.c.l.b16 %v2849
      %v2982 = vunpack.c.h.b16 %v2849
      %v2983 = vunpack.c.l.b16 %v2850
      %v2984 = vunpack.c.h.b16 %v2850
      %v2985 = vunpack.c.l.b16 %v2851
      %v2986 = vunpack.c.h.b16 %v2851
      %v2987 = vunpack.c.l.b16 %v2852
      %v2988 = vunpack.c.h.b16 %v2852
      %v2989 = vunpack.c.l.b16 %v2853
      %v2990 = vunpack.c.h.b16 %v2853
      %v2991 = vunpack.c.l.b16 %v2854
      %v2992 = vunpack.c.h.b16 %v2854
      %v2993 = vunpack.c.l.b16 %v2855
      %v2994 = vunpack.c.h.b16 %v2855
      %v2995 = vunpack.c.l.b16 %v2856
      %v2996 = vunpack.c.h.b16 %v2856
      %v2997 = vunpack.c.l.b16 %v2857
      %v2998 = vunpack.c.h.b16 %v2857
      %v2999 = vunpack.c.l.b16 %v2858
      %v3000 = vunpack.c.h.b16 %v2858
      %v3001 = vunpack.c.l.b16 %v2859
      %v3002 = vunpack.c.h.b16 %v2859
      %v3003 = vunpack.c.l.b16 %v2860
      %v3004 = vunpack.c.h.b16 %v2860
      %v3005 = vunpack.c.l.b16 %v2861
      %v3006 = vunpack.c.h.b16 %v2861
      %v3007 = vunpack.c.l.b16 %v2862
      %v3008 = vunpack.c.h.b16 %v2862
      %v3009 = vunpack.c.l.b16 %v2863
      %v3010 = vunpack.c.h.b16 %v2863
      %v3011 = vunpack.c.l.b16 %v2864
      %v3012 = vunpack.c.h.b16 %v2864
      %v3013 = vunpack.c.l.b16 %v2865
      %v3014 = vunpack.c.h.b16 %v2865
      %v3015 = vunpack.c.l.b16 %v2866
      %v3016 = vunpack.c.h.b16 %v2866
      %v3017 = vunpack.c.l.b16 %v2867
      %v3018 = vunpack.c.h.b16 %v2867
      %v3019 = vunpack.c.l.b16 %v2868
      %v3020 = vunpack.c.h.b16 %v2868
      %v3021 = vunpack.c.l.b16 %v2869
      %v3022 = vunpack.c.h.b16 %v2869
      %v3023 = vunpack.c.l.b16 %v2870
      %v3024 = vunpack.c.h.b16 %v2870
      %v3025 = vunpack.c.l.b16 %v2871
      %v3026 = vunpack.c.h.b16 %v2871
      %v3027 = vunpack.c.l.b16 %v2872
      %v3028 = vunpack.c.h.b16 %v2872
      %v3029 = vunpack.c.l.b16 %v2873
      %v3030 = vunpack.c.h.b16 %v2873
      %v3031 = vunpack.c.l.b16 %v2874
      %v3032 = vunpack.c.h.b16 %v2874
      %v3033 = vunpack.c.l.b16 %v2875
      %v3034 = vunpack.c.h.b16 %v2875
      %v3035 = vunpack.c.l.b16 %v2876
      %v3036 = vunpack.c.h.b16 %v2876
      %v3037 = vunpack.c.l.b16 %v2877
      %v3038 = vunpack.c.h.b16 %v2877
      %v3039 = vunpack.c.l.b16 %v2878
      %v3040 = vunpack.c.h.b16 %v2878
      %v3041 = vpack.c.b16 %v2971, %v2969
      %v3042 = vpack.c.b16 %v2972, %v2970
      %v3043 = vpack.c.b16 %v2975, %v2973
      %v3044 = vpack.c.b16 %v2976, %v2974
      %v3045 = vpack.c.b16 %v2979, %v2977
      %v3046 = vpack.c.b16 %v2980, %v2978
      %v3047 = vpack.c.b16 %v2983, %v2981
      %v3048 = vpack.c.b16 %v2984, %v2982
      %v3049 = vpack.c.b16 %v2987, %v2985
      %v3050 = vpack.c.b16 %v2988, %v2986
      %v3051 = vpack.c.b16 %v2991, %v2989
      %v3052 = vpack.c.b16 %v2992, %v2990
      %v3053 = vpack.c.b16 %v2995, %v2993
      %v3054 = vpack.c.b16 %v2996, %v2994
      %v3055 = vpack.c.b16 %v2999, %v2997
      %v3056 = vpack.c.b16 %v3000, %v2998
      %v3057 = vpack.c.b16 %v3003, %v3001
      %v3058 = vpack.c.b16 %v3004, %v3002
      %v3059 = vpack.c.b16 %v3007, %v3005
      %v3060 = vpack.c.b16 %v3008, %v3006
      %v3061 = vpack.c.b16 %v3011, %v3009
      %v3062 = vpack.c.b16 %v3012, %v3010
      %v3063 = vpack.c.b16 %v3015, %v3013
      %v3064 = vpack.c.b16 %v3016, %v3014
      %v3065 = vpack.c.b16 %v3019, %v3017
      %v3066 = vpack.c.b16 %v3020, %v3018
      %v3067 = vpack.c.b16 %v3023, %v3021
      %v3068 = vpack.c.b16 %v3024, %v3022
      %v3069 = vpack.c.b16 %v3027, %v3025
      %v3070 = vpack.c.b16 %v3028, %v3026
      %v3071 = vpack.c.b16 %v3031, %v3029
      %v3072 = vpack.c.b16 %v3032, %v3030
      %v3073 = vpack.c.b16 %v3035, %v3033
      %v3074 = vpack.c.b16 %v3036, %v3034
      %v3075 = vpack.c.b16 %v3039, %v3037
      %v3076 = vpack.c.b16 %v3040, %v3038
      %vm3113 = vcmask 261120
      %v3115 = vsel %vm3113, %v2925, 0
      %v3118 = vsel %vm3113, %v2928, 0
      %3120 = vmatprep.subr.bf16.mxu0 %v3056
      %3121 = vmatpush1.bf16.msra.mxu0 %v3055
      %3122 = vmatprep.subr.bf16.mxu0 %v3054
      %3123 = vmatpush1.bf16.msra.mxu0 %v3053
      %3124 = vmatprep.subr.bf16.mxu0 %v3052
      %3125 = vmatpush1.bf16.msra.mxu0 %v3051
      %3126 = vmatprep.subr.bf16.mxu0 %v3050
      %3127 = vmatpush1.bf16.msra.mxu0 %v3049
      %3128 = vmatprep.subr.bf16.mxu0 %v3048
      %3129 = vmatpush1.bf16.msra.mxu0 %v3047
      %3130 = vmatprep.subr.bf16.mxu0 %v3046
      %3131 = vmatpush1.bf16.msra.mxu0 %v3045
      %3132 = vmatprep.subr.bf16.mxu0 %v3044
      %3133 = vmatpush1.bf16.msra.mxu0 %v3043
      %3134 = vmatprep.subr.bf16.mxu0 %v3042
      %3135 = vmatpush1.bf16.msra.mxu0 %v3041
      %3136 = vmatprep.subr.bf16.mxu0 %v3072
      %3137 = vmatpush2.bf16.msra.mxu0 %v3071
      %3138 = vmatprep.subr.bf16.mxu0 %v3070
      %3139 = vmatpush2.bf16.msra.mxu0 %v3069
      %3140 = vmatprep.subr.bf16.mxu0 %v3068
      %3141 = vmatpush2.bf16.msra.mxu0 %v3067
      %3142 = vmatprep.subr.bf16.mxu0 %v3066
      %3143 = vmatpush2.bf16.msra.mxu0 %v3065
      %3144 = vmatprep.subr.bf16.mxu0 %v3064
      %3145 = vmatpush2.bf16.msra.mxu0 %v3063
      %3146 = vmatprep.subr.bf16.mxu0 %v3062
      %3147 = vmatpush2.bf16.msra.mxu0 %v3061
      %3148 = vmatprep.subr.bf16.mxu0 %v3060
      %3149 = vmatpush2.bf16.msra.mxu0 %v3059
      %3150 = vmatprep.subr.bf16.mxu0 %v3058
      %3151 = vmatpush2.bf16.msra.mxu0 %v3057
      %3152 = vmatprep.mubr.bf16.mxu0 %v2924
      %3153 = vmatmul.mubr.bf16.gmra.mxu0 %v2923
      %v3154 = vpop.f32.mrf.mxu0
      %v3155 = vadd.f32 %v2886, %v3154
      %v3156 = vpop.f32.mrf.mxu0
      %v3157 = vadd.f32 %v2886, %v3156
      %v3158 = vpop.f32.mrf.mxu0
      %v3159 = vadd.f32 %v2891, %v3158
      %v3160 = vpop.f32.mrf.mxu0
      %v3161 = vadd.f32 %v2891, %v3160
      %3162 = vmatprep.mubr.bf16.mxu0 %v2927
      %3163 = vmatmul.mubr.bf16.gmra.mxu0 %v2926
      %v3164 = vpop.f32.mrf.mxu0
      %v3165 = vadd.f32 %v2896, %v3164
      %v3166 = vpop.f32.mrf.mxu0
      %v3167 = vadd.f32 %v2896, %v3166
      %v3168 = vpop.f32.mrf.mxu0
      %v3169 = vadd.f32 %v2901, %v3168
      %v3170 = vpop.f32.mrf.mxu0
      %v3171 = vadd.f32 %v2901, %v3170
      %3172 = vdwg.mxu0
      %3173 = vmatprep.subr.bf16.mxu0 0
      %3174 = vmatpush1.bf16.msra.mxu0 0
      %3175 = vmatprep.subr.bf16.mxu0 0
      %3176 = vmatpush1.bf16.msra.mxu0 0
      %3177 = vmatprep.subr.bf16.mxu0 0
      %3178 = vmatpush1.bf16.msra.mxu0 0
      %3179 = vmatprep.subr.bf16.mxu0 0
      %3180 = vmatpush1.bf16.msra.mxu0 0
      %3181 = vmatprep.subr.bf16.mxu0 0
      %3182 = vmatpush1.bf16.msra.mxu0 0
      %3183 = vmatprep.subr.bf16.mxu0 0
      %3184 = vmatpush1.bf16.msra.mxu0 0
      %3185 = vmatprep.subr.bf16.mxu0 %v3076
      %3186 = vmatpush1.bf16.msra.mxu0 %v3075
      %3187 = vmatprep.subr.bf16.mxu0 %v3074
      %3188 = vmatpush1.bf16.msra.mxu0 %v3073
      %3189 = vmatprep.subr.bf16.mxu0 0
      %3190 = vmatpush2.bf16.msra.mxu0 0
      %3191 = vmatprep.subr.bf16.mxu0 0
      %3192 = vmatpush2.bf16.msra.mxu0 0
      %3193 = vmatprep.subr.bf16.mxu0 0
      %3194 = vmatpush2.bf16.msra.mxu0 0
      %3195 = vmatprep.subr.bf16.mxu0 0
      %3196 = vmatpush2.bf16.msra.mxu0 0
      %3197 = vmatprep.subr.bf16.mxu0 0
      %3198 = vmatpush2.bf16.msra.mxu0 0
      %3199 = vmatprep.subr.bf16.mxu0 0
      %3200 = vmatpush2.bf16.msra.mxu0 0
      %3201 = vmatprep.subr.bf16.mxu0 0
      %3202 = vmatpush2.bf16.msra.mxu0 0
      %3203 = vmatprep.subr.bf16.mxu0 0
      %3204 = vmatpush2.bf16.msra.mxu0 0
      %3205 = vmatprep.mubr.bf16.mxu0 0
      %3206 = vmatmul.mubr.bf16.gmra.mxu0 %v3115
      %v3207 = vpop.f32.mrf.mxu0
      %v3208 = vadd.f32 %v3155, %v3207
      %v3209 = vpop.f32.mrf.mxu0
      %v3210 = vadd.f32 %v3157, %v3209
      %v3211 = vpop.f32.mrf.mxu0
      %v3212 = vadd.f32 %v3159, %v3211
      %v3213 = vpop.f32.mrf.mxu0
      %v3214 = vadd.f32 %v3161, %v3213
      %3215 = vmatprep.mubr.bf16.mxu0 0
      %3216 = vmatmul.mubr.bf16.gmra.mxu0 %v3118
      %v3217 = vpop.f32.mrf.mxu0
      %v3218 = vadd.f32 %v3165, %v3217
      %v3219 = vpop.f32.mrf.mxu0
      %v3220 = vadd.f32 %v3167, %v3219
      %v3221 = vpop.f32.mrf.mxu0
      %v3222 = vadd.f32 %v3169, %v3221
      %v3223 = vpop.f32.mrf.mxu0
      %v3224 = vadd.f32 %v3171, %v3223
      %3225 = vdwg.mxu0
      %v3226 = vmax.f32 %v3208, 0.0
      %v3227 = vmax.f32 %v3210, 0.0
      %v3228 = vmax.f32 %v3212, 0.0
      %v3229 = vmax.f32 %v3214, 0.0
      %v3230 = vmax.f32 %v3218, 0.0
      %v3231 = vmax.f32 %v3220, 0.0
      %v3232 = vmax.f32 %v3222, 0.0
      %v3233 = vmax.f32 %v3224, 0.0
      %3234 = vrot.lane.b32.xlu0 %v3226, 17
      %v3235 = vpop.permute.xlu0 %3234
      %3236 = vrot.lane.b32.xlu0 %v3228, 17
      %v3237 = vpop.permute.xlu0 %3236
      %3238 = vrot.lane.b32.xlu0 %v3230, 17
      %v3239 = vpop.permute.xlu0 %3238
      %3240 = vrot.lane.b32.xlu0 %v3232, 17
      %v3241 = vpop.permute.xlu0 %3240
      %3242 = vrot.lane.b32.xlu0 %v3227, 17
      %v3243 = vpop.permute.xlu0 %3242
      %3244 = vrot.lane.b32.xlu0 %v3229, 17
      %v3245 = vpop.permute.xlu0 %3244
      %3246 = vrot.lane.b32.xlu0 %v3231, 17
      %v3247 = vpop.permute.xlu0 %3246
      %3248 = vrot.lane.b32.xlu0 %v3233, 17
      %v3249 = vpop.permute.xlu0 %3248
      %v3250 = vsel %vm444, %v3235, %v3243
      %v3251 = vsel %vm444, %v3237, %v3245
      %v3252 = vsel %vm444, %v3239, %v3247
      %v3253 = vsel %vm444, %v3241, %v3249
      %v3254 = vsel %vm444, %v3243, %v3235
      %v3255 = vsel %vm444, %v3245, %v3237
      %v3256 = vsel %vm444, %v3247, %v3239
      %v3257 = vsel %vm444, %v3249, %v3241
      %v3258 = vld [vmem:[%s2] ss:$8 sm:$0x3]
      %v3260 = vlaneseq
      %v3261 = vshrl.u32 %v3260, 7
      %v3262 = vsub.s32 0, %v3261
      %v3263 = vrot.slane %v3258, %v3262
      %v3264 = vlaneseq
      %v3265 = vshrl.u32 %v3264, 7
      %v3266 = vsub.s32 1, %v3265
      %v3267 = vrot.slane %v3258, %v3266
      %v3270 = vmul.f32 %v3254, %v3263
      %v3271 = vmul.f32 %v3250, %v3267
      %v3272 = vmul.f32 %v3255, %v3263
      %v3273 = vmul.f32 %v3251, %v3267
      %v3274 = vmul.f32 %v3256, %v3263
      %v3275 = vmul.f32 %v3252, %v3267
      %v3276 = vmul.f32 %v3257, %v3263
      %v3277 = vmul.f32 %v3253, %v3267
      %v3278 = vpack.c.bf16 %v3272, %v3270
      %v3279 = vpack.c.bf16 %v3273, %v3271
      %v3280 = vpack.c.bf16 %v3276, %v3274
      %v3281 = vpack.c.bf16 %v3277, %v3275
      %v3286 = vunpack.c.l.b16 %v3278
      %v3287 = vunpack.c.l.b16 %v3279
      %v3288 = vunpack.c.h.b16 %v3278
      %v3289 = vunpack.c.h.b16 %v3279
      %v3290 = vunpack.c.l.b16 %v3280
      %v3291 = vunpack.c.l.b16 %v3281
      %v3292 = vunpack.c.h.b16 %v3280
      %v3293 = vunpack.c.h.b16 %v3281
      %v3294 = vpack.c.b16 %v3287, %v3286
      %v3295 = vpack.c.b16 %v3289, %v3288
      %v3296 = vpack.c.b16 %v3291, %v3290
      %v3297 = vpack.c.b16 %v3293, %v3292
      %3302 = vst [vmem:[#allocation2] sm:$0xff] %v3294
      %3303 = vst [vmem:[#allocation2 + $0x8] sm:$0xff] %v3295
      %3304 = vst [vmem:[#allocation2 + $0x10] sm:$0xff] %v3296
      %3305 = vst [vmem:[#allocation2 + $0x18] sm:$0xff] %v3297
      %3306 = vrot.lane.b32.xlu0 %v3226, 16
      %v3307 = vpop.permute.xlu0 %3306
      %3308 = vrot.lane.b32.xlu0 %v3228, 16
      %v3309 = vpop.permute.xlu0 %3308
      %3310 = vrot.lane.b32.xlu0 %v3230, 16
      %v3311 = vpop.permute.xlu0 %3310
      %3312 = vrot.lane.b32.xlu0 %v3232, 16
      %v3313 = vpop.permute.xlu0 %3312
      %3314 = vrot.lane.b32.xlu0 %v3227, 16
      %v3315 = vpop.permute.xlu0 %3314
      %3316 = vrot.lane.b32.xlu0 %v3229, 16
      %v3317 = vpop.permute.xlu0 %3316
      %3318 = vrot.lane.b32.xlu0 %v3231, 16
      %v3319 = vpop.permute.xlu0 %3318
      %3320 = vrot.lane.b32.xlu0 %v3233, 16
      %v3321 = vpop.permute.xlu0 %3320
      %v3322 = vsel %vm577, %v3307, %v3315
      %v3323 = vsel %vm577, %v3309, %v3317
      %v3324 = vsel %vm577, %v3311, %v3319
      %v3325 = vsel %vm577, %v3313, %v3321
      %v3326 = vsel %vm577, %v3315, %v3307
      %v3327 = vsel %vm577, %v3317, %v3309
      %v3328 = vsel %vm577, %v3319, %v3311
      %v3329 = vsel %vm577, %v3321, %v3313
      %v3330 = vld [vmem:[%s594] ss:$8 sm:$0x3]
      %v3332 = vlaneseq
      %v3333 = vshrl.u32 %v3332, 7
      %v3334 = vsub.s32 0, %v3333
      %v3335 = vrot.slane %v3330, %v3334
      %v3336 = vlaneseq
      %v3337 = vshrl.u32 %v3336, 7
      %v3338 = vsub.s32 1, %v3337
      %v3339 = vrot.slane %v3330, %v3338
      %v3342 = vmul.f32 %v3326, %v3335
      %v3343 = vmul.f32 %v3322, %v3339
      %v3344 = vmul.f32 %v3327, %v3335
      %v3345 = vmul.f32 %v3323, %v3339
      %v3346 = vmul.f32 %v3328, %v3335
      %v3347 = vmul.f32 %v3324, %v3339
      %v3348 = vmul.f32 %v3329, %v3335
      %v3349 = vmul.f32 %v3325, %v3339
      %v3350 = vpack.c.bf16 %v3344, %v3342
      %v3351 = vpack.c.bf16 %v3345, %v3343
      %v3352 = vpack.c.bf16 %v3348, %v3346
      %v3353 = vpack.c.bf16 %v3349, %v3347
      %v3358 = vunpack.c.l.b16 %v3350
      %v3359 = vunpack.c.l.b16 %v3351
      %v3360 = vunpack.c.h.b16 %v3350
      %v3361 = vunpack.c.h.b16 %v3351
      %v3362 = vunpack.c.l.b16 %v3352
      %v3363 = vunpack.c.l.b16 %v3353
      %v3364 = vunpack.c.h.b16 %v3352
      %v3365 = vunpack.c.h.b16 %v3353
      %v3366 = vpack.c.b16 %v3359, %v3358
      %v3367 = vpack.c.b16 %v3361, %v3360
      %v3368 = vpack.c.b16 %v3363, %v3362
      %v3369 = vpack.c.b16 %v3365, %v3364
      %3374 = vst [vmem:[#allocation2 + $0x20] sm:$0xff] %v3366
      %3375 = vst [vmem:[#allocation2 + $0x28] sm:$0xff] %v3367
      %3376 = vst [vmem:[#allocation2 + $0x30] sm:$0xff] %v3368
      %3377 = vst [vmem:[#allocation2 + $0x38] sm:$0xff] %v3369
      %3378 = vrot.lane.b32.xlu0 %v3226, 15
      %v3379 = vpop.permute.xlu0 %3378
      %3380 = vrot.lane.b32.xlu0 %v3228, 15
      %v3381 = vpop.permute.xlu0 %3380
      %3382 = vrot.lane.b32.xlu0 %v3230, 15
      %v3383 = vpop.permute.xlu0 %3382
      %3384 = vrot.lane.b32.xlu0 %v3232, 15
      %v3385 = vpop.permute.xlu0 %3384
      %3386 = vrot.lane.b32.xlu0 %v3227, 15
      %v3387 = vpop.permute.xlu0 %3386
      %3388 = vrot.lane.b32.xlu0 %v3229, 15
      %v3389 = vpop.permute.xlu0 %3388
      %3390 = vrot.lane.b32.xlu0 %v3231, 15
      %v3391 = vpop.permute.xlu0 %3390
      %3392 = vrot.lane.b32.xlu0 %v3233, 15
      %v3393 = vpop.permute.xlu0 %3392
      %v3394 = vsel %vm711, %v3379, %v3387
      %v3395 = vsel %vm711, %v3381, %v3389
      %v3396 = vsel %vm711, %v3383, %v3391
      %v3397 = vsel %vm711, %v3385, %v3393
      %v3398 = vsel %vm711, %v3387, %v3379
      %v3399 = vsel %vm711, %v3389, %v3381
      %v3400 = vsel %vm711, %v3391, %v3383
      %v3401 = vsel %vm711, %v3393, %v3385
      %v3402 = vld [vmem:[%s728] ss:$8 sm:$0x3]
      %v3404 = vlaneseq
      %v3405 = vshrl.u32 %v3404, 7
      %v3406 = vsub.s32 0, %v3405
      %v3407 = vrot.slane %v3402, %v3406
      %v3408 = vlaneseq
      %v3409 = vshrl.u32 %v3408, 7
      %v3410 = vsub.s32 1, %v3409
      %v3411 = vrot.slane %v3402, %v3410
      %v3414 = vmul.f32 %v3398, %v3407
      %v3415 = vmul.f32 %v3394, %v3411
      %v3416 = vmul.f32 %v3399, %v3407
      %v3417 = vmul.f32 %v3395, %v3411
      %v3418 = vmul.f32 %v3400, %v3407
      %v3419 = vmul.f32 %v3396, %v3411
      %v3420 = vmul.f32 %v3401, %v3407
      %v3421 = vmul.f32 %v3397, %v3411
      %v3422 = vpack.c.bf16 %v3416, %v3414
      %v3423 = vpack.c.bf16 %v3417, %v3415
      %v3424 = vpack.c.bf16 %v3420, %v3418
      %v3425 = vpack.c.bf16 %v3421, %v3419
      %v3430 = vunpack.c.l.b16 %v3422
      %v3431 = vunpack.c.l.b16 %v3423
      %v3432 = vunpack.c.h.b16 %v3422
      %v3433 = vunpack.c.h.b16 %v3423
      %v3434 = vunpack.c.l.b16 %v3424
      %v3435 = vunpack.c.l.b16 %v3425
      %v3436 = vunpack.c.h.b16 %v3424
      %v3437 = vunpack.c.h.b16 %v3425
      %v3438 = vpack.c.b16 %v3431, %v3430
      %v3439 = vpack.c.b16 %v3433, %v3432
      %v3440 = vpack.c.b16 %v3435, %v3434
      %v3441 = vpack.c.b16 %v3437, %v3436
      %3446 = vst [vmem:[#allocation2 + $0x40] sm:$0xff] %v3438
      %3447 = vst [vmem:[#allocation2 + $0x48] sm:$0xff] %v3439
      %3448 = vst [vmem:[#allocation2 + $0x50] sm:$0xff] %v3440
      %3449 = vst [vmem:[#allocation2 + $0x58] sm:$0xff] %v3441
      %3450 = vrot.lane.b32.xlu0 %v3226, 1
      %v3451 = vpop.permute.xlu0 %3450
      %3452 = vrot.lane.b32.xlu0 %v3228, 1
      %v3453 = vpop.permute.xlu0 %3452
      %3454 = vrot.lane.b32.xlu0 %v3230, 1
      %v3455 = vpop.permute.xlu0 %3454
      %3456 = vrot.lane.b32.xlu0 %v3232, 1
      %v3457 = vpop.permute.xlu0 %3456
      %3458 = vrot.lane.b32.xlu0 %v3227, 1
      %v3459 = vpop.permute.xlu0 %3458
      %3460 = vrot.lane.b32.xlu0 %v3229, 1
      %v3461 = vpop.permute.xlu0 %3460
      %3462 = vrot.lane.b32.xlu0 %v3231, 1
      %v3463 = vpop.permute.xlu0 %3462
      %3464 = vrot.lane.b32.xlu0 %v3233, 1
      %v3465 = vpop.permute.xlu0 %3464
      %v3466 = vsel %vm845, %v3451, %v3459
      %v3467 = vsel %vm845, %v3453, %v3461
      %v3468 = vsel %vm845, %v3455, %v3463
      %v3469 = vsel %vm845, %v3457, %v3465
      %v3470 = vsel %vm845, %v3459, %v3451
      %v3471 = vsel %vm845, %v3461, %v3453
      %v3472 = vsel %vm845, %v3463, %v3455
      %v3473 = vsel %vm845, %v3465, %v3457
      %v3474 = vld [vmem:[%s862] ss:$8 sm:$0x3]
      %v3476 = vlaneseq
      %v3477 = vshrl.u32 %v3476, 7
      %v3478 = vsub.s32 0, %v3477
      %v3479 = vrot.slane %v3474, %v3478
      %v3480 = vlaneseq
      %v3481 = vshrl.u32 %v3480, 7
      %v3482 = vsub.s32 1, %v3481
      %v3483 = vrot.slane %v3474, %v3482
      %v3486 = vmul.f32 %v3470, %v3479
      %v3487 = vmul.f32 %v3466, %v3483
      %v3488 = vmul.f32 %v3471, %v3479
      %v3489 = vmul.f32 %v3467, %v3483
      %v3490 = vmul.f32 %v3472, %v3479
      %v3491 = vmul.f32 %v3468, %v3483
      %v3492 = vmul.f32 %v3473, %v3479
      %v3493 = vmul.f32 %v3469, %v3483
      %v3494 = vpack.c.bf16 %v3488, %v3486
      %v3495 = vpack.c.bf16 %v3489, %v3487
      %v3496 = vpack.c.bf16 %v3492, %v3490
      %v3497 = vpack.c.bf16 %v3493, %v3491
      %v3502 = vunpack.c.l.b16 %v3494
      %v3503 = vunpack.c.l.b16 %v3495
      %v3504 = vunpack.c.h.b16 %v3494
      %v3505 = vunpack.c.h.b16 %v3495
      %v3506 = vunpack.c.l.b16 %v3496
      %v3507 = vunpack.c.l.b16 %v3497
      %v3508 = vunpack.c.h.b16 %v3496
      %v3509 = vunpack.c.h.b16 %v3497
      %v3510 = vpack.c.b16 %v3503, %v3502
      %v3511 = vpack.c.b16 %v3505, %v3504
      %v3512 = vpack.c.b16 %v3507, %v3506
      %v3513 = vpack.c.b16 %v3509, %v3508
      %3518 = vst [vmem:[#allocation2 + $0x60] sm:$0xff] %v3510
      %3519 = vst [vmem:[#allocation2 + $0x68] sm:$0xff] %v3511
      %3520 = vst [vmem:[#allocation2 + $0x70] sm:$0xff] %v3512
      %3521 = vst [vmem:[#allocation2 + $0x78] sm:$0xff] %v3513
      %v3522 = vpack.c.bf16 %v3228, %v3226
      %v3523 = vpack.c.bf16 %v3229, %v3227
      %v3524 = vpack.c.bf16 %v3232, %v3230
      %v3525 = vpack.c.bf16 %v3233, %v3231
      %v3530 = vunpack.c.l.b16 %v3522
      %v3531 = vunpack.c.l.b16 %v3523
      %v3532 = vunpack.c.h.b16 %v3522
      %v3533 = vunpack.c.h.b16 %v3523
      %v3534 = vunpack.c.l.b16 %v3524
      %v3535 = vunpack.c.l.b16 %v3525
      %v3536 = vunpack.c.h.b16 %v3524
      %v3537 = vunpack.c.h.b16 %v3525
      %v3538 = vpack.c.b16 %v3531, %v3530
      %v3539 = vpack.c.b16 %v3533, %v3532
      %v3540 = vpack.c.b16 %v3535, %v3534
      %v3541 = vpack.c.b16 %v3537, %v3536
      %3546 = vst [vmem:[#allocation2 + $0x80] sm:$0xff] %v3538
      %3547 = vst [vmem:[#allocation2 + $0x88] sm:$0xff] %v3539
      %3548 = vst [vmem:[#allocation2 + $0x90] sm:$0xff] %v3540
      %3549 = vst [vmem:[#allocation2 + $0x98] sm:$0xff] %v3541
      %3550 = vrot.lane.b32.xlu0 %v3226, 127
      %v3551 = vpop.permute.xlu0 %3550
      %3552 = vrot.lane.b32.xlu0 %v3228, 127
      %v3553 = vpop.permute.xlu0 %3552
      %3554 = vrot.lane.b32.xlu0 %v3230, 127
      %v3555 = vpop.permute.xlu0 %3554
      %3556 = vrot.lane.b32.xlu0 %v3232, 127
      %v3557 = vpop.permute.xlu0 %3556
      %3558 = vrot.lane.b32.xlu0 %v3227, 127
      %v3559 = vpop.permute.xlu0 %3558
      %3560 = vrot.lane.b32.xlu0 %v3229, 127
      %v3561 = vpop.permute.xlu0 %3560
      %3562 = vrot.lane.b32.xlu0 %v3231, 127
      %v3563 = vpop.permute.xlu0 %3562
      %3564 = vrot.lane.b32.xlu0 %v3233, 127
      %v3565 = vpop.permute.xlu0 %3564
      %v3566 = vsel %vm1035, %v3551, %v3559
      %v3567 = vsel %vm1035, %v3553, %v3561
      %v3568 = vsel %vm1035, %v3555, %v3563
      %v3569 = vsel %vm1035, %v3557, %v3565
      %v3570 = vsel %vm1035, %v3559, %v3551
      %v3571 = vsel %vm1035, %v3561, %v3553
      %v3572 = vsel %vm1035, %v3563, %v3555
      %v3573 = vsel %vm1035, %v3565, %v3557
      %v3574 = vld [vmem:[%s1052] ss:$8 sm:$0x3]
      %v3576 = vlaneseq
      %v3577 = vshrl.u32 %v3576, 7
      %v3578 = vsub.s32 0, %v3577
      %v3579 = vrot.slane %v3574, %v3578
      %v3580 = vlaneseq
      %v3581 = vshrl.u32 %v3580, 7
      %v3582 = vsub.s32 1, %v3581
      %v3583 = vrot.slane %v3574, %v3582
      %v3586 = vmul.f32 %v3566, %v3579
      %v3587 = vmul.f32 %v3570, %v3583
      %v3588 = vmul.f32 %v3567, %v3579
      %v3589 = vmul.f32 %v3571, %v3583
      %v3590 = vmul.f32 %v3568, %v3579
      %v3591 = vmul.f32 %v3572, %v3583
      %v3592 = vmul.f32 %v3569, %v3579
      %v3593 = vmul.f32 %v3573, %v3583
      %v3594 = vpack.c.bf16 %v3588, %v3586
      %v3595 = vpack.c.bf16 %v3589, %v3587
      %v3596 = vpack.c.bf16 %v3592, %v3590
      %v3597 = vpack.c.bf16 %v3593, %v3591
      %v3602 = vunpack.c.l.b16 %v3594
      %v3603 = vunpack.c.l.b16 %v3595
      %v3604 = vunpack.c.h.b16 %v3594
      %v3605 = vunpack.c.h.b16 %v3595
      %v3606 = vunpack.c.l.b16 %v3596
      %v3607 = vunpack.c.l.b16 %v3597
      %v3608 = vunpack.c.h.b16 %v3596
      %v3609 = vunpack.c.h.b16 %v3597
      %v3610 = vpack.c.b16 %v3603, %v3602
      %v3611 = vpack.c.b16 %v3605, %v3604
      %v3612 = vpack.c.b16 %v3607, %v3606
      %v3613 = vpack.c.b16 %v3609, %v3608
      %3618 = vst [vmem:[#allocation2 + $0xa0] sm:$0xff] %v3610
      %3619 = vst [vmem:[#allocation2 + $0xa8] sm:$0xff] %v3611
      %3620 = vst [vmem:[#allocation2 + $0xb0] sm:$0xff] %v3612
      %3621 = vst [vmem:[#allocation2 + $0xb8] sm:$0xff] %v3613
      %3622 = vrot.lane.b32.xlu0 %v3226, 113
      %v3623 = vpop.permute.xlu0 %3622
      %3624 = vrot.lane.b32.xlu0 %v3228, 113
      %v3625 = vpop.permute.xlu0 %3624
      %3626 = vrot.lane.b32.xlu0 %v3230, 113
      %v3627 = vpop.permute.xlu0 %3626
      %3628 = vrot.lane.b32.xlu0 %v3232, 113
      %v3629 = vpop.permute.xlu0 %3628
      %3630 = vrot.lane.b32.xlu0 %v3227, 113
      %v3631 = vpop.permute.xlu0 %3630
      %3632 = vrot.lane.b32.xlu0 %v3229, 113
      %v3633 = vpop.permute.xlu0 %3632
      %3634 = vrot.lane.b32.xlu0 %v3231, 113
      %v3635 = vpop.permute.xlu0 %3634
      %3636 = vrot.lane.b32.xlu0 %v3233, 113
      %v3637 = vpop.permute.xlu0 %3636
      %v3638 = vsel %vm1169, %v3623, %v3631
      %v3639 = vsel %vm1169, %v3625, %v3633
      %v3640 = vsel %vm1169, %v3627, %v3635
      %v3641 = vsel %vm1169, %v3629, %v3637
      %v3642 = vsel %vm1169, %v3631, %v3623
      %v3643 = vsel %vm1169, %v3633, %v3625
      %v3644 = vsel %vm1169, %v3635, %v3627
      %v3645 = vsel %vm1169, %v3637, %v3629
      %v3646 = vld [vmem:[%s1186] ss:$8 sm:$0x3]
      %v3648 = vlaneseq
      %v3649 = vshrl.u32 %v3648, 7
      %v3650 = vsub.s32 0, %v3649
      %v3651 = vrot.slane %v3646, %v3650
      %v3652 = vlaneseq
      %v3653 = vshrl.u32 %v3652, 7
      %v3654 = vsub.s32 1, %v3653
      %v3655 = vrot.slane %v3646, %v3654
      %v3658 = vmul.f32 %v3638, %v3651
      %v3659 = vmul.f32 %v3642, %v3655
      %v3660 = vmul.f32 %v3639, %v3651
      %v3661 = vmul.f32 %v3643, %v3655
      %v3662 = vmul.f32 %v3640, %v3651
      %v3663 = vmul.f32 %v3644, %v3655
      %v3664 = vmul.f32 %v3641, %v3651
      %v3665 = vmul.f32 %v3645, %v3655
      %v3666 = vpack.c.bf16 %v3660, %v3658
      %v3667 = vpack.c.bf16 %v3661, %v3659
      %v3668 = vpack.c.bf16 %v3664, %v3662
      %v3669 = vpack.c.bf16 %v3665, %v3663
      %v3674 = vunpack.c.l.b16 %v3666
      %v3675 = vunpack.c.l.b16 %v3667
      %v3676 = vunpack.c.h.b16 %v3666
      %v3677 = vunpack.c.h.b16 %v3667
      %v3678 = vunpack.c.l.b16 %v3668
      %v3679 = vunpack.c.l.b16 %v3669
      %v3680 = vunpack.c.h.b16 %v3668
      %v3681 = vunpack.c.h.b16 %v3669
      %v3682 = vpack.c.b16 %v3675, %v3674
      %v3683 = vpack.c.b16 %v3677, %v3676
      %v3684 = vpack.c.b16 %v3679, %v3678
      %v3685 = vpack.c.b16 %v3681, %v3680
      %3690 = vst [vmem:[#allocation2 + $0xc0] sm:$0xff] %v3682
      %3691 = vst [vmem:[#allocation2 + $0xc8] sm:$0xff] %v3683
      %3692 = vst [vmem:[#allocation2 + $0xd0] sm:$0xff] %v3684
      %3693 = vst [vmem:[#allocation2 + $0xd8] sm:$0xff] %v3685
      %3694 = vrot.lane.b32.xlu0 %v3226, 112
      %v3695 = vpop.permute.xlu0 %3694
      %3696 = vrot.lane.b32.xlu0 %v3228, 112
      %v3697 = vpop.permute.xlu0 %3696
      %3698 = vrot.lane.b32.xlu0 %v3230, 112
      %v3699 = vpop.permute.xlu0 %3698
      %3700 = vrot.lane.b32.xlu0 %v3232, 112
      %v3701 = vpop.permute.xlu0 %3700
      %3702 = vrot.lane.b32.xlu0 %v3227, 112
      %v3703 = vpop.permute.xlu0 %3702
      %3704 = vrot.lane.b32.xlu0 %v3229, 112
      %v3705 = vpop.permute.xlu0 %3704
      %3706 = vrot.lane.b32.xlu0 %v3231, 112
      %v3707 = vpop.permute.xlu0 %3706
      %3708 = vrot.lane.b32.xlu0 %v3233, 112
      %v3709 = vpop.permute.xlu0 %3708
      %v3710 = vsel %vm1303, %v3695, %v3703
      %v3711 = vsel %vm1303, %v3697, %v3705
      %v3712 = vsel %vm1303, %v3699, %v3707
      %v3713 = vsel %vm1303, %v3701, %v3709
      %v3714 = vsel %vm1303, %v3703, %v3695
      %v3715 = vsel %vm1303, %v3705, %v3697
      %v3716 = vsel %vm1303, %v3707, %v3699
      %v3717 = vsel %vm1303, %v3709, %v3701
      %v3718 = vld [vmem:[%s1320] ss:$8 sm:$0x3]
      %v3720 = vlaneseq
      %v3721 = vshrl.u32 %v3720, 7
      %v3722 = vsub.s32 0, %v3721
      %v3723 = vrot.slane %v3718, %v3722
      %v3724 = vlaneseq
      %v3725 = vshrl.u32 %v3724, 7
      %v3726 = vsub.s32 1, %v3725
      %v3727 = vrot.slane %v3718, %v3726
      %v3730 = vmul.f32 %v3710, %v3723
      %v3731 = vmul.f32 %v3714, %v3727
      %v3732 = vmul.f32 %v3711, %v3723
      %v3733 = vmul.f32 %v3715, %v3727
      %v3734 = vmul.f32 %v3712, %v3723
      %v3735 = vmul.f32 %v3716, %v3727
      %v3736 = vmul.f32 %v3713, %v3723
      %v3737 = vmul.f32 %v3717, %v3727
      %v3738 = vpack.c.bf16 %v3732, %v3730
      %v3739 = vpack.c.bf16 %v3733, %v3731
      %v3740 = vpack.c.bf16 %v3736, %v3734
      %v3741 = vpack.c.bf16 %v3737, %v3735
      %v3746 = vunpack.c.l.b16 %v3738
      %v3747 = vunpack.c.l.b16 %v3739
      %v3748 = vunpack.c.h.b16 %v3738
      %v3749 = vunpack.c.h.b16 %v3739
      %v3750 = vunpack.c.l.b16 %v3740
      %v3751 = vunpack.c.l.b16 %v3741
      %v3752 = vunpack.c.h.b16 %v3740
      %v3753 = vunpack.c.h.b16 %v3741
      %v3754 = vpack.c.b16 %v3747, %v3746
      %v3755 = vpack.c.b16 %v3749, %v3748
      %v3756 = vpack.c.b16 %v3751, %v3750
      %v3757 = vpack.c.b16 %v3753, %v3752
      %3762 = vst [vmem:[#allocation2 + $0xe0] sm:$0xff] %v3754
      %3763 = vst [vmem:[#allocation2 + $0xe8] sm:$0xff] %v3755
      %3764 = vst [vmem:[#allocation2 + $0xf0] sm:$0xff] %v3756
      %3765 = vst [vmem:[#allocation2 + $0xf8] sm:$0xff] %v3757
      %3766 = vrot.lane.b32.xlu0 %v3226, 111
      %v3767 = vpop.permute.xlu0 %3766
      %3768 = vrot.lane.b32.xlu0 %v3228, 111
      %v3769 = vpop.permute.xlu0 %3768
      %3770 = vrot.lane.b32.xlu0 %v3230, 111
      %v3771 = vpop.permute.xlu0 %3770
      %3772 = vrot.lane.b32.xlu0 %v3232, 111
      %v3773 = vpop.permute.xlu0 %3772
      %3774 = vrot.lane.b32.xlu0 %v3227, 111
      %v3775 = vpop.permute.xlu0 %3774
      %3776 = vrot.lane.b32.xlu0 %v3229, 111
      %v3777 = vpop.permute.xlu0 %3776
      %3778 = vrot.lane.b32.xlu0 %v3231, 111
      %v3779 = vpop.permute.xlu0 %3778
      %3780 = vrot.lane.b32.xlu0 %v3233, 111
      %v3781 = vpop.permute.xlu0 %3780
      %v3782 = vsel %vm1437, %v3767, %v3775
      %v3783 = vsel %vm1437, %v3769, %v3777
      %v3784 = vsel %vm1437, %v3771, %v3779
      %v3785 = vsel %vm1437, %v3773, %v3781
      %v3786 = vsel %vm1437, %v3775, %v3767
      %v3787 = vsel %vm1437, %v3777, %v3769
      %v3788 = vsel %vm1437, %v3779, %v3771
      %v3789 = vsel %vm1437, %v3781, %v3773
      %v3790 = vld [vmem:[%s1454] ss:$8 sm:$0x3]
      %v3792 = vlaneseq
      %v3793 = vshrl.u32 %v3792, 7
      %v3794 = vsub.s32 0, %v3793
      %v3795 = vrot.slane %v3790, %v3794
      %v3796 = vlaneseq
      %v3797 = vshrl.u32 %v3796, 7
      %v3798 = vsub.s32 1, %v3797
      %v3799 = vrot.slane %v3790, %v3798
      %v3802 = vmul.f32 %v3782, %v3795
      %v3803 = vmul.f32 %v3786, %v3799
      %v3804 = vmul.f32 %v3783, %v3795
      %v3805 = vmul.f32 %v3787, %v3799
      %v3806 = vmul.f32 %v3784, %v3795
      %v3807 = vmul.f32 %v3788, %v3799
      %v3808 = vmul.f32 %v3785, %v3795
      %v3809 = vmul.f32 %v3789, %v3799
      %v3810 = vpack.c.bf16 %v3804, %v3802
      %v3811 = vpack.c.bf16 %v3805, %v3803
      %v3812 = vpack.c.bf16 %v3808, %v3806
      %v3813 = vpack.c.bf16 %v3809, %v3807
      %v3818 = vunpack.c.l.b16 %v3810
      %v3819 = vunpack.c.l.b16 %v3811
      %v3820 = vunpack.c.h.b16 %v3810
      %v3821 = vunpack.c.h.b16 %v3811
      %v3822 = vunpack.c.l.b16 %v3812
      %v3823 = vunpack.c.l.b16 %v3813
      %v3824 = vunpack.c.h.b16 %v3812
      %v3825 = vunpack.c.h.b16 %v3813
      %v3826 = vpack.c.b16 %v3819, %v3818
      %v3827 = vpack.c.b16 %v3821, %v3820
      %v3828 = vpack.c.b16 %v3823, %v3822
      %v3829 = vpack.c.b16 %v3825, %v3824
      %3834 = vst [vmem:[#allocation2 + $0x100] sm:$0xff] %v3826
      %3835 = vst [vmem:[#allocation2 + $0x108] sm:$0xff] %v3827
      %3836 = vst [vmem:[#allocation2 + $0x110] sm:$0xff] %v3828
      %3837 = vst [vmem:[#allocation2 + $0x118] sm:$0xff] %v3829
      %v3838 = vld [vmem:[%s7] sm:$0xff]
      %v3839 = vld [vmem:[%s7 + $0x8] sm:$0xf]
      %v3840 = vld [vmem:[%s7 + $0xc] sm:$0xff]
      %v3841 = vld [vmem:[%s7 + $0x14] sm:$0xf]
      %v3842 = vld [vmem:[%s7 + $0x18] sm:$0xff]
      %v3843 = vld [vmem:[%s7 + $0x20] sm:$0xf]
      %v3844 = vld [vmem:[%s7 + $0x24] sm:$0xff]
      %v3845 = vld [vmem:[%s7 + $0x2c] sm:$0xf]
      %v3846 = vld [vmem:[%s7 + $0x30] sm:$0xff]
      %v3847 = vld [vmem:[%s7 + $0x38] sm:$0xf]
      %v3848 = vld [vmem:[%s7 + $0x3c] sm:$0x33]
      %v3849 = vld [vmem:[%s7 + $0x44] sm:$0x3]
      %v3850 = vld [vmem:[#allocation2] sm:$0xff]
      %v3851 = vld [vmem:[#allocation2 + $0x8] sm:$0xff]
      %v3852 = vld [vmem:[#allocation2 + $0x10] sm:$0xff]
      %v3853 = vld [vmem:[#allocation2 + $0x18] sm:$0xff]
      %v3854 = vld [vmem:[#allocation2 + $0x20] sm:$0xff]
      %v3855 = vld [vmem:[#allocation2 + $0x28] sm:$0xff]
      %v3856 = vld [vmem:[#allocation2 + $0x30] sm:$0xff]
      %v3857 = vld [vmem:[#allocation2 + $0x38] sm:$0xff]
      %v3858 = vld [vmem:[#allocation2 + $0x40] sm:$0xff]
      %v3859 = vld [vmem:[#allocation2 + $0x48] sm:$0xff]
      %v3860 = vld [vmem:[#allocation2 + $0x50] sm:$0xff]
      %v3861 = vld [vmem:[#allocation2 + $0x58] sm:$0xff]
      %v3862 = vld [vmem:[#allocation2 + $0x60] sm:$0xff]
      %v3863 = vld [vmem:[#allocation2 + $0x68] sm:$0xff]
      %v3864 = vld [vmem:[#allocation2 + $0x70] sm:$0xff]
      %v3865 = vld [vmem:[#allocation2 + $0x78] sm:$0xff]
      %v3866 = vld [vmem:[#allocation2 + $0x80] sm:$0xff]
      %v3867 = vld [vmem:[#allocation2 + $0x88] sm:$0xff]
      %v3868 = vld [vmem:[#allocation2 + $0x90] sm:$0xff]
      %v3869 = vld [vmem:[#allocation2 + $0x98] sm:$0xff]
      %v3870 = vld [vmem:[#allocation2 + $0xa0] sm:$0xff]
      %v3871 = vld [vmem:[#allocation2 + $0xa8] sm:$0xff]
      %v3872 = vld [vmem:[#allocation2 + $0xb0] sm:$0xff]
      %v3873 = vld [vmem:[#allocation2 + $0xb8] sm:$0xff]
      %v3874 = vld [vmem:[#allocation2 + $0xc0] sm:$0xff]
      %v3875 = vld [vmem:[#allocation2 + $0xc8] sm:$0xff]
      %v3876 = vld [vmem:[#allocation2 + $0xd0] sm:$0xff]
      %v3877 = vld [vmem:[#allocation2 + $0xd8] sm:$0xff]
      %v3878 = vld [vmem:[#allocation2 + $0xe0] sm:$0xff]
      %v3879 = vld [vmem:[#allocation2 + $0xe8] sm:$0xff]
      %v3880 = vld [vmem:[#allocation2 + $0xf0] sm:$0xff]
      %v3881 = vld [vmem:[#allocation2 + $0xf8] sm:$0xff]
      %v3882 = vld [vmem:[#allocation2 + $0x100] sm:$0xff]
      %v3883 = vld [vmem:[#allocation2 + $0x108] sm:$0xff]
      %v3884 = vld [vmem:[#allocation2 + $0x110] sm:$0xff]
      %v3885 = vld [vmem:[#allocation2 + $0x118] sm:$0xff]
      %v3886 = vld [vmem:[%s8] sm:$0xff]
      %v3887 = vld [vmem:[%s8 + $0x8] sm:$0xff]
      %v3888 = vld [vmem:[%s8 + $0x10] sm:$0xff]
      %v3889 = vld [vmem:[%s8 + $0x18] sm:$0xff]
      %v3890 = vld [vmem:[%s8 + $0x20] sm:$0xff]
      %v3891 = vld [vmem:[%s8 + $0x28] sm:$0xf]
      %3893 = vset.pattern.permute.xlu0 0
      %3894 = vperm.xlu0 %3893, %v3886
      %v3895 = vpop.permute.xlu0 %3894
      %3898 = vset.pattern.permute.xlu0 0
      %3899 = vperm.xlu0 %3898, %v3887
      %v3900 = vpop.permute.xlu0 %3899
      %3903 = vset.pattern.permute.xlu0 0
      %3904 = vperm.xlu0 %3903, %v3888
      %v3905 = vpop.permute.xlu0 %3904
      %3908 = vset.pattern.permute.xlu0 0
      %3909 = vperm.xlu0 %3908, %v3889
      %v3910 = vpop.permute.xlu0 %3909
      %3913 = vset.pattern.permute.xlu0 0
      %3914 = vperm.xlu0 %3913, %v3890
      %v3915 = vpop.permute.xlu0 %3914
      %3918 = vset.pattern.permute.xlu0 0
      %3919 = vperm.xlu0 %3918, %v3891
      %v3920 = vpop.permute.xlu0 %3919
      %v3934 = vunpack.c.l.b16 %v3838
      %v3935 = vunpack.c.h.b16 %v3838
      %v3936 = vunpack.c.l.b16 %v3839
      %v3937 = vunpack.c.l.b16 %v3840
      %v3938 = vunpack.c.h.b16 %v3840
      %v3939 = vunpack.c.l.b16 %v3841
      %v3940 = vunpack.c.l.b16 %v3842
      %v3941 = vunpack.c.h.b16 %v3842
      %v3942 = vunpack.c.l.b16 %v3843
      %v3943 = vunpack.c.l.b16 %v3844
      %v3944 = vunpack.c.h.b16 %v3844
      %v3945 = vunpack.c.l.b16 %v3845
      %v3946 = vunpack.c.l.b16 %v3846
      %v3947 = vunpack.c.h.b16 %v3846
      %v3948 = vunpack.c.l.b16 %v3847
      %v3949 = vunpack.c.l.b16 %v3848
      %v3950 = vunpack.c.h.b16 %v3848
      %v3951 = vunpack.c.l.b16 %v3849
      %v3952 = vpack.c.b16 %v3937, %v3934
      %v3953 = vpack.c.b16 %v3938, %v3935
      %v3954 = vpack.c.b16 %v3939, %v3936
      %v3955 = vpack.c.b16 %v3943, %v3940
      %v3956 = vpack.c.b16 %v3944, %v3941
      %v3957 = vpack.c.b16 %v3945, %v3942
      %v3958 = vpack.c.b16 %v3949, %v3946
      %v3959 = vpack.c.b16 %v3950, %v3947
      %v3960 = vpack.c.b16 %v3951, %v3948
      %v4003 = vunpack.c.l.b16 %v3850
      %v4004 = vunpack.c.h.b16 %v3850
      %v4005 = vunpack.c.l.b16 %v3851
      %v4006 = vunpack.c.h.b16 %v3851
      %v4007 = vunpack.c.l.b16 %v3852
      %v4008 = vunpack.c.h.b16 %v3852
      %v4009 = vunpack.c.l.b16 %v3853
      %v4010 = vunpack.c.h.b16 %v3853
      %v4011 = vunpack.c.l.b16 %v3854
      %v4012 = vunpack.c.h.b16 %v3854
      %v4013 = vunpack.c.l.b16 %v3855
      %v4014 = vunpack.c.h.b16 %v3855
      %v4015 = vunpack.c.l.b16 %v3856
      %v4016 = vunpack.c.h.b16 %v3856
      %v4017 = vunpack.c.l.b16 %v3857
      %v4018 = vunpack.c.h.b16 %v3857
      %v4019 = vunpack.c.l.b16 %v3858
      %v4020 = vunpack.c.h.b16 %v3858
      %v4021 = vunpack.c.l.b16 %v3859
      %v4022 = vunpack.c.h.b16 %v3859
      %v4023 = vunpack.c.l.b16 %v3860
      %v4024 = vunpack.c.h.b16 %v3860
      %v4025 = vunpack.c.l.b16 %v3861
      %v4026 = vunpack.c.h.b16 %v3861
      %v4027 = vunpack.c.l.b16 %v3862
      %v4028 = vunpack.c.h.b16 %v3862
      %v4029 = vunpack.c.l.b16 %v3863
      %v4030 = vunpack.c.h.b16 %v3863
      %v4031 = vunpack.c.l.b16 %v3864
      %v4032 = vunpack.c.h.b16 %v3864
      %v4033 = vunpack.c.l.b16 %v3865
      %v4034 = vunpack.c.h.b16 %v3865
      %v4035 = vunpack.c.l.b16 %v3866
      %v4036 = vunpack.c.h.b16 %v3866
      %v4037 = vunpack.c.l.b16 %v3867
      %v4038 = vunpack.c.h.b16 %v3867
      %v4039 = vunpack.c.l.b16 %v3868
      %v4040 = vunpack.c.h.b16 %v3868
      %v4041 = vunpack.c.l.b16 %v3869
      %v4042 = vunpack.c.h.b16 %v3869
      %v4043 = vunpack.c.l.b16 %v3870
      %v4044 = vunpack.c.h.b16 %v3870
      %v4045 = vunpack.c.l.b16 %v3871
      %v4046 = vunpack.c.h.b16 %v3871
      %v4047 = vunpack.c.l.b16 %v3872
      %v4048 = vunpack.c.h.b16 %v3872
      %v4049 = vunpack.c.l.b16 %v3873
      %v4050 = vunpack.c.h.b16 %v3873
      %v4051 = vunpack.c.l.b16 %v3874
      %v4052 = vunpack.c.h.b16 %v3874
      %v4053 = vunpack.c.l.b16 %v3875
      %v4054 = vunpack.c.h.b16 %v3875
      %v4055 = vunpack.c.l.b16 %v3876
      %v4056 = vunpack.c.h.b16 %v3876
      %v4057 = vunpack.c.l.b16 %v3877
      %v4058 = vunpack.c.h.b16 %v3877
      %v4059 = vunpack.c.l.b16 %v3878
      %v4060 = vunpack.c.h.b16 %v3878
      %v4061 = vunpack.c.l.b16 %v3879
      %v4062 = vunpack.c.h.b16 %v3879
      %v4063 = vunpack.c.l.b16 %v3880
      %v4064 = vunpack.c.h.b16 %v3880
      %v4065 = vunpack.c.l.b16 %v3881
      %v4066 = vunpack.c.h.b16 %v3881
      %v4067 = vunpack.c.l.b16 %v3882
      %v4068 = vunpack.c.h.b16 %v3882
      %v4069 = vunpack.c.l.b16 %v3883
      %v4070 = vunpack.c.h.b16 %v3883
      %v4071 = vunpack.c.l.b16 %v3884
      %v4072 = vunpack.c.h.b16 %v3884
      %v4073 = vunpack.c.l.b16 %v3885
      %v4074 = vunpack.c.h.b16 %v3885
      %v4075 = vpack.c.b16 %v4005, %v4003
      %v4076 = vpack.c.b16 %v4006, %v4004
      %v4077 = vpack.c.b16 %v4009, %v4007
      %v4078 = vpack.c.b16 %v4010, %v4008
      %v4079 = vpack.c.b16 %v4013, %v4011
      %v4080 = vpack.c.b16 %v4014, %v4012
      %v4081 = vpack.c.b16 %v4017, %v4015
      %v4082 = vpack.c.b16 %v4018, %v4016
      %v4083 = vpack.c.b16 %v4021, %v4019
      %v4084 = vpack.c.b16 %v4022, %v4020
      %v4085 = vpack.c.b16 %v4025, %v4023
      %v4086 = vpack.c.b16 %v4026, %v4024
      %v4087 = vpack.c.b16 %v4029, %v4027
      %v4088 = vpack.c.b16 %v4030, %v4028
      %v4089 = vpack.c.b16 %v4033, %v4031
      %v4090 = vpack.c.b16 %v4034, %v4032
      %v4091 = vpack.c.b16 %v4037, %v4035
      %v4092 = vpack.c.b16 %v4038, %v4036
      %v4093 = vpack.c.b16 %v4041, %v4039
      %v4094 = vpack.c.b16 %v4042, %v4040
      %v4095 = vpack.c.b16 %v4045, %v4043
      %v4096 = vpack.c.b16 %v4046, %v4044
      %v4097 = vpack.c.b16 %v4049, %v4047
      %v4098 = vpack.c.b16 %v4050, %v4048
      %v4099 = vpack.c.b16 %v4053, %v4051
      %v4100 = vpack.c.b16 %v4054, %v4052
      %v4101 = vpack.c.b16 %v4057, %v4055
      %v4102 = vpack.c.b16 %v4058, %v4056
      %v4103 = vpack.c.b16 %v4061, %v4059
      %v4104 = vpack.c.b16 %v4062, %v4060
      %v4105 = vpack.c.b16 %v4065, %v4063
      %v4106 = vpack.c.b16 %v4066, %v4064
      %v4107 = vpack.c.b16 %v4069, %v4067
      %v4108 = vpack.c.b16 %v4070, %v4068
      %v4109 = vpack.c.b16 %v4073, %v4071
      %v4110 = vpack.c.b16 %v4074, %v4072
      %v4148 = vsel %vm3113, %v3954, 0
      %v4151 = vsel %vm3113, %v3957, 0
      %v4154 = vsel %vm3113, %v3960, 0
      %4156 = vmatprep.subr.bf16.mxu0 %v4090
      %4157 = vmatpush1.bf16.msra.mxu0 %v4089
      %4158 = vmatprep.subr.bf16.mxu0 %v4088
      %4159 = vmatpush1.bf16.msra.mxu0 %v4087
      %4160 = vmatprep.subr.bf16.mxu0 %v4086
      %4161 = vmatpush1.bf16.msra.mxu0 %v4085
      %4162 = vmatprep.subr.bf16.mxu0 %v4084
      %4163 = vmatpush1.bf16.msra.mxu0 %v4083
      %4164 = vmatprep.subr.bf16.mxu0 %v4082
      %4165 = vmatpush1.bf16.msra.mxu0 %v4081
      %4166 = vmatprep.subr.bf16.mxu0 %v4080
      %4167 = vmatpush1.bf16.msra.mxu0 %v4079
      %4168 = vmatprep.subr.bf16.mxu0 %v4078
      %4169 = vmatpush1.bf16.msra.mxu0 %v4077
      %4170 = vmatprep.subr.bf16.mxu0 %v4076
      %4171 = vmatpush1.bf16.msra.mxu0 %v4075
      %4172 = vmatprep.subr.bf16.mxu0 %v4106
      %4173 = vmatpush2.bf16.msra.mxu0 %v4105
      %4174 = vmatprep.subr.bf16.mxu0 %v4104
      %4175 = vmatpush2.bf16.msra.mxu0 %v4103
      %4176 = vmatprep.subr.bf16.mxu0 %v4102
      %4177 = vmatpush2.bf16.msra.mxu0 %v4101
      %4178 = vmatprep.subr.bf16.mxu0 %v4100
      %4179 = vmatpush2.bf16.msra.mxu0 %v4099
      %4180 = vmatprep.subr.bf16.mxu0 %v4098
      %4181 = vmatpush2.bf16.msra.mxu0 %v4097
      %4182 = vmatprep.subr.bf16.mxu0 %v4096
      %4183 = vmatpush2.bf16.msra.mxu0 %v4095
      %4184 = vmatprep.subr.bf16.mxu0 %v4094
      %4185 = vmatpush2.bf16.msra.mxu0 %v4093
      %4186 = vmatprep.subr.bf16.mxu0 %v4092
      %4187 = vmatpush2.bf16.msra.mxu0 %v4091
      %4188 = vmatprep.mubr.bf16.mxu0 %v3953
      %4189 = vmatmul.mubr.bf16.gmra.mxu0 %v3952
      %v4190 = vpop.f32.mrf.mxu0
      %v4191 = vadd.f32 %v3895, %v4190
      %v4192 = vpop.f32.mrf.mxu0
      %v4193 = vadd.f32 %v3895, %v4192
      %v4194 = vpop.f32.mrf.mxu0
      %v4195 = vadd.f32 %v3900, %v4194
      %v4196 = vpop.f32.mrf.mxu0
      %v4197 = vadd.f32 %v3900, %v4196
      %4198 = vmatprep.mubr.bf16.mxu0 %v3956
      %4199 = vmatmul.mubr.bf16.gmra.mxu0 %v3955
      %v4200 = vpop.f32.mrf.mxu0
      %v4201 = vadd.f32 %v3905, %v4200
      %v4202 = vpop.f32.mrf.mxu0
      %v4203 = vadd.f32 %v3905, %v4202
      %v4204 = vpop.f32.mrf.mxu0
      %v4205 = vadd.f32 %v3910, %v4204
      %v4206 = vpop.f32.mrf.mxu0
      %v4207 = vadd.f32 %v3910, %v4206
      %4208 = vmatprep.mubr.bf16.mxu0 %v3959
      %4209 = vmatmul.mubr.bf16.gmra.mxu0 %v3958
      %v4210 = vpop.f32.mrf.mxu0
      %v4211 = vadd.f32 %v3915, %v4210
      %v4212 = vpop.f32.mrf.mxu0
      %v4213 = vadd.f32 %v3915, %v4212
      %v4214 = vpop.f32.mrf.mxu0
      %v4215 = vadd.f32 %v3920, %v4214
      %v4216 = vpop.f32.mrf.mxu0
      %v4217 = vadd.f32 %v3920, %v4216
      %4218 = vdwg.mxu0
      %4219 = vmatprep.subr.bf16.mxu0 0
      %4220 = vmatpush1.bf16.msra.mxu0 0
      %4221 = vmatprep.subr.bf16.mxu0 0
      %4222 = vmatpush1.bf16.msra.mxu0 0
      %4223 = vmatprep.subr.bf16.mxu0 0
      %4224 = vmatpush1.bf16.msra.mxu0 0
      %4225 = vmatprep.subr.bf16.mxu0 0
      %4226 = vmatpush1.bf16.msra.mxu0 0
      %4227 = vmatprep.subr.bf16.mxu0 0
      %4228 = vmatpush1.bf16.msra.mxu0 0
      %4229 = vmatprep.subr.bf16.mxu0 0
      %4230 = vmatpush1.bf16.msra.mxu0 0
      %4231 = vmatprep.subr.bf16.mxu0 %v4110
      %4232 = vmatpush1.bf16.msra.mxu0 %v4109
      %4233 = vmatprep.subr.bf16.mxu0 %v4108
      %4234 = vmatpush1.bf16.msra.mxu0 %v4107
      %4235 = vmatprep.subr.bf16.mxu0 0
      %4236 = vmatpush2.bf16.msra.mxu0 0
      %4237 = vmatprep.subr.bf16.mxu0 0
      %4238 = vmatpush2.bf16.msra.mxu0 0
      %4239 = vmatprep.subr.bf16.mxu0 0
      %4240 = vmatpush2.bf16.msra.mxu0 0
      %4241 = vmatprep.subr.bf16.mxu0 0
      %4242 = vmatpush2.bf16.msra.mxu0 0
      %4243 = vmatprep.subr.bf16.mxu0 0
      %4244 = vmatpush2.bf16.msra.mxu0 0
      %4245 = vmatprep.subr.bf16.mxu0 0
      %4246 = vmatpush2.bf16.msra.mxu0 0
      %4247 = vmatprep.subr.bf16.mxu0 0
      %4248 = vmatpush2.bf16.msra.mxu0 0
      %4249 = vmatprep.subr.bf16.mxu0 0
      %4250 = vmatpush2.bf16.msra.mxu0 0
      %4251 = vmatprep.mubr.bf16.mxu0 0
      %4252 = vmatmul.mubr.bf16.gmra.mxu0 %v4148
      %v4253 = vpop.f32.mrf.mxu0
      %v4254 = vadd.f32 %v4191, %v4253
      %v4255 = vpop.f32.mrf.mxu0
      %v4256 = vadd.f32 %v4193, %v4255
      %v4257 = vpop.f32.mrf.mxu0
      %v4258 = vadd.f32 %v4195, %v4257
      %v4259 = vpop.f32.mrf.mxu0
      %v4260 = vadd.f32 %v4197, %v4259
      %4261 = vmatprep.mubr.bf16.mxu0 0
      %4262 = vmatmul.mubr.bf16.gmra.mxu0 %v4151
      %v4263 = vpop.f32.mrf.mxu0
      %v4264 = vadd.f32 %v4201, %v4263
      %v4265 = vpop.f32.mrf.mxu0
      %v4266 = vadd.f32 %v4203, %v4265
      %v4267 = vpop.f32.mrf.mxu0
      %v4268 = vadd.f32 %v4205, %v4267
      %v4269 = vpop.f32.mrf.mxu0
      %v4270 = vadd.f32 %v4207, %v4269
      %4271 = vmatprep.mubr.bf16.mxu0 0
      %4272 = vmatmul.mubr.bf16.gmra.mxu0 %v4154
      %v4273 = vpop.f32.mrf.mxu0
      %v4274 = vadd.f32 %v4211, %v4273
      %v4275 = vpop.f32.mrf.mxu0
      %v4276 = vadd.f32 %v4213, %v4275
      %v4277 = vpop.f32.mrf.mxu0
      %v4278 = vadd.f32 %v4215, %v4277
      %v4279 = vpop.f32.mrf.mxu0
      %v4280 = vadd.f32 %v4217, %v4279
      %4281 = vdwg.mxu0
      %v4282 = vmax.f32 %v4254, 0.0
      %v4283 = vmax.f32 %v4256, 0.0
      %v4284 = vmax.f32 %v4258, 0.0
      %v4285 = vmax.f32 %v4260, 0.0
      %v4286 = vmax.f32 %v4264, 0.0
      %v4287 = vmax.f32 %v4266, 0.0
      %v4288 = vmax.f32 %v4268, 0.0
      %v4289 = vmax.f32 %v4270, 0.0
      %4290 = vst [vmem:[%s392] sm:$0xff] %v4282
      %4291 = vst [vmem:[%s392 + $0x8] sm:$0xff] %v4283
      %4292 = vst [vmem:[%s392 + $0x10] sm:$0xff] %v4284
      %4293 = vst [vmem:[%s392 + $0x18] sm:$0xff] %v4285
      %4294 = vst [vmem:[%s392 + $0x20] sm:$0xff] %v4286
      %4295 = vst [vmem:[%s392 + $0x28] sm:$0xff] %v4287
      %4296 = vst [vmem:[%s392 + $0x30] sm:$0xff] %v4288
      %4297 = vst [vmem:[%s392 + $0x38] sm:$0xff] %v4289
      %v4298 = vld [vmem:[%s382] sm:$0x77]
      %v4300 = vcombine.high %v4298, %v4298
      %v4302 = vrot.slane %v4298, 5
      %v4303 = vrot.slane %v4300, 5
      %v4306 = vrot.slane %v4298, 2
      %v4307 = vrot.slane %v4300, 2
      %v4310 = vrot.slane %v4298, 7
      %v4311 = vrot.slane %v4300, 7
      %vm4314 = vcmask 1042432
      %v4315 = vsel %vm4314, %v4298, %v4302
      %v4316 = vsel %vm4314, %v4300, %v4303
      %vm4317 = vcmask 1045504
      %v4318 = vsel %vm4317, %v4315, %v4306
      %v4319 = vsel %vm4317, %v4316, %v4307
      %vm4320 = vcmask 1040384
      %v4321 = vsel %vm4320, %v4306, %v4310
      %v4322 = vsel %vm4320, %v4307, %v4311
      %v4323 = vadd.f32 %v4274, %v4318
      %v4324 = vadd.f32 %v4276, %v4319
      %v4325 = vadd.f32 %v4278, %v4321
      %v4326 = vadd.f32 %v4280, %v4322
      %4327 = vst [vmem:[%s387] sm:$0xff] %v4323
      %4328 = vst [vmem:[%s387 + $0x8] sm:$0xff] %v4324
      %4329 = vst [vmem:[%s387 + $0x10] sm:$0xf] %v4325
      %4330 = vst [vmem:[%s387 + $0x18] sm:$0xf] %v4326
      %p4331 = scmp.lt.s32.totalorder %s22, 1
      %s4332 = scalar_select %p4331, %s22, 1
      %s4333 = smul.addr %s4332, 4
      %s4334 = smul.addr %s4333, 8
      %s4335 = scalar_lea.vmem %s9, %s4334
      %p4336 = scmp.lt.s32.totalorder %s22, 1
      %s4337 = scalar_select %p4336, %s22, 1
      %s4338 = smul.addr %s4337, 8
      %s4339 = smul.addr %s4338, 8
      %s4340 = scalar_lea.vmem %s10, %s4339
      // Predicated region
      $region57: #{rslp_cell_forward.1} parent=55 // pred_check
        %p4341 = pneg %p239
      $region58: #{rslp_cell_forward.1} parent=55 // pred_check_branch
        %4343 = sbr.rel (%p4341) target = $region60
      $region59: #{rslp_cell_forward.1} parent=55 // pred_region
        _
      $region60: #{rslp_cell_forward.1} parent=55 // pred_fallthru
        _
      // Predicated region
      $region61: #{rslp_cell_forward.1} parent=55 // pred_check
        %p4344 = pneg %p265
      $region62: #{rslp_cell_forward.1} parent=55 // pred_check_branch
        %4346 = sbr.rel (%p4344) target = $region64
      $region63: #{rslp_cell_forward.1} parent=55 // pred_region
        _
      $region64: #{rslp_cell_forward.1} parent=55 // pred_fallthru
        _
    $region56: #{rslp_cell_forward.1} parent=5 // pred_fallthru
      _
    %p4347 = scmp.le.s32.totalorder 2, %s17
    // Predicated region
    $region65: #{rslp_cell_forward.1} parent=5 // pred_check
      %p4348 = pneg %p4347
    $region66: #{rslp_cell_forward.1} parent=5 // pred_check_branch
      %4350 = sbr.rel (%p4348) target = $region68
    $region67: #{rslp_cell_forward.1} parent=5 // pred_region
      %s4351 = ssub.s32 %s17, 2
      // Predicated region
      $region69: #{rslp_cell_forward.1} parent=67 // pred_check
        %p4352 = pneg %p245
      $region70: #{rslp_cell_forward.1} parent=67 // pred_check_branch
        %4354 = sbr.rel (%p4352) target = $region72
      $region71: #{rslp_cell_forward.1} parent=67 // pred_region
        %p4355 = scmp.lt.s32.totalorder %s23, 1
        %s4356 = scalar_select %p4355, %s23, 1
        %s4357 = smul.addr %s4356, 4
        %s4358 = smul.addr %s4357, 8
        %s4359 = scalar_lea.vmem %s9, %s4358
      $region72: #{rslp_cell_forward.1} parent=67 // pred_fallthru
        _
      // Predicated region
      $region73: #{rslp_cell_forward.1} parent=67 // pred_check
        %p4360 = pneg %p271
      $region74: #{rslp_cell_forward.1} parent=67 // pred_check_branch
        %4362 = sbr.rel (%p4360) target = $region76
      $region75: #{rslp_cell_forward.1} parent=67 // pred_region
        %p4363 = scmp.lt.s32.totalorder %s23, 1
        %s4364 = scalar_select %p4363, %s23, 1
        %s4365 = smul.addr %s4364, 8
        %s4366 = smul.addr %s4365, 8
        %s4367 = scalar_lea.vmem %s10, %s4366
      $region76: #{rslp_cell_forward.1} parent=67 // pred_fallthru
        _
    $region68: #{rslp_cell_forward.1} parent=5 // pred_fallthru
      _
  $region6: #{rslp_cell_forward.1} parent=0 // loop_footer
    %s21 = sadd.s32 1, %s17
  $region7: #{rslp_cell_forward.1} parent=0 // loop_footer_branch
    %16 = sbr.rel target = $region3
  $region8: #{rslp_cell_forward.1} parent=0 // loop_exit
    _

</llo_original>
